<compile_context>
chip_gen: v7x
topology: tpu7x:2x2x1
jax: 0.10.0
libtpu: 0.0.40
codegen_flags: <defaults>
</compile_context>

<pallas_src>
import functools

import jax
import jax.numpy as jnp
from jax import lax
from jax.experimental import pallas as pl
from jax.experimental.pallas import tpu as pltpu

BF16 = jnp.bfloat16
F32 = jnp.float32
LN_EPS = 1e-5
NEG_INF = -1e30  # finite masked value: robust if a row were ever fully masked

_MOSAIC_PARAMS = dict(vmem_limit_bytes=32 * 1024 * 1024)


def _round_up(x, m):
    return (x + m - 1) // m * m


def _layer_norm(v, gamma, beta):
    # Single-pass stats: var = E[v^2] - mu^2 (halves the dependent reduction chain).
    mu = jnp.mean(v, axis=-1, keepdims=True)
    var = jnp.mean(v * v, axis=-1, keepdims=True) - mu * mu
    return (v - mu) * lax.rsqrt(var + LN_EPS) * gamma + beta


# ---------------------------------------------------------------------------
# Pallas kernels
# ---------------------------------------------------------------------------
def encoder_layer_kernel(
    x_ref,                                   # (1, S, D) f32
    wqkv_ref, bqkv_ref,                      # (D, 3D) bf16, (1, 3D) f32  (fused in-proj)
    wo_ref, bo_ref,                          # (D, D) bf16, (1, D) f32
    w1_ref, b1_ref,                          # (D, FF) bf16, (1, FF) f32
    w2_ref, b2_ref,                          # (FF, D) bf16, (1, D) f32
    g1_ref, beta1_ref, g2_ref, beta2_ref,    # (1, D) f32 (LayerNorm params)
    o_ref,                                   # (1, S, D) f32
    *, n_head,
):
    """One post-norm nn.TransformerEncoderLayer (ReLU FFN, causal mask) for a single
    batch element; the grid iterates over batch ("parallel")."""
    x = x_ref[0]                             # (S, D) f32
    S, D = x.shape
    Dh = D // n_head
    scale = 1.0 / (Dh ** 0.5)

    # --- fused QKV projection: one wide MXU matmul, bf16 in / f32 accumulate ---
    qkv = (
        jnp.dot(x.astype(BF16), wqkv_ref[...], preferred_element_type=F32)
        + bqkv_ref[...]
    )                                        # (S, 3D) f32
    q = (qkv[:, :D] * scale).astype(BF16)    # fold 1/sqrt(Dh) into q once
    k = qkv[:, D:2 * D].astype(BF16)
    v = qkv[:, 2 * D:3 * D].astype(BF16)

    # --- causal (square subsequent) additive mask ---
    row = lax.broadcasted_iota(jnp.int32, (S, S), 0)
    col = lax.broadcasted_iota(jnp.int32, (S, S), 1)
    neg_mask = jnp.where(col > row, jnp.float32(NEG_INF), jnp.float32(0.0))

    # --- multi-head causal attention; each head's context is accumulated directly
    #     into the O-projection (no concatenate / relayout). ---
    # TODO(synk): for S >> 128 switch to a flash-style (batch, S//tq) grid so the
    # (S, S) score tile stays bounded in VMEM.
    attn = jnp.zeros((S, D), F32)
    for h in range(n_head):
        sl = slice(h * Dh, (h + 1) * Dh)
        # scores = q_h @ k_h^T via contraction on Dh (no materialized transpose)
        s = lax.dot_general(
            q[:, sl], k[:, sl],
            dimension_numbers=(((1,), (1,)), ((), ())),
            preferred_element_type=F32,
        ) + neg_mask                                           # (S, S)
        s = s - jnp.max(s, axis=-1, keepdims=True)
        p = jnp.exp(s)
        p = p * pl.reciprocal(jnp.sum(p, axis=-1, keepdims=True), approx=True)
        ctx = jnp.dot(p.astype(BF16), v[:, sl], preferred_element_type=F32)
        attn = attn + jnp.dot(
            ctx.astype(BF16), wo_ref[sl, :], preferred_element_type=F32
        )
    attn = attn + bo_ref[...]

    # --- residual + LayerNorm1 (post-norm) ---
    y = _layer_norm(x + attn, g1_ref[...], beta1_ref[...])

    # --- feed-forward: linear1 -> ReLU -> linear2 (dropout = identity in eval) ---
    h1 = jnp.dot(y.astype(BF16), w1_ref[...], preferred_element_type=F32) + b1_ref[...]
    h1 = jnp.maximum(h1, 0.0)
    ff = jnp.dot(h1.astype(BF16), w2_ref[...], preferred_element_type=F32) + b2_ref[...]

    # --- residual + LayerNorm2 ---
    o_ref[0] = _layer_norm(y + ff, g2_ref[...], beta2_ref[...])


def lm_head_kernel(x_ref, w_ref, b_ref, o_ref):
    """Logits tile: o = x @ W_tile + b_tile (W pre-transposed, bf16, vocab-padded)."""
    o_ref[...] = (
        jnp.dot(x_ref[...].astype(BF16), w_ref[...], preferred_element_type=F32)
        + b_ref[...]
    )


# ---------------------------------------------------------------------------
# Wrappers around pallas_call
# ---------------------------------------------------------------------------
def encoder_layer(x, layer, n_head):
    B, S, D = x.shape
    FF = layer["w1_t"].shape[1]

    def full_spec(shape):
        # Constant index_map over the batch grid -> Pallas fetches each weight once
        # and keeps it resident.
        ndim = len(shape)
        return pl.BlockSpec(shape, lambda b, _n=ndim: (0,) * _n)

    kernel = functools.partial(encoder_layer_kernel, n_head=n_head)
    return pl.pallas_call(
        kernel,
        out_shape=jax.ShapeDtypeStruct((B, S, D), F32),
        grid=(B,),
        in_specs=[
            pl.BlockSpec((1, S, D), lambda b: (b, 0, 0)),
            full_spec((D, 3 * D)), full_spec((1, 3 * D)),
            full_spec((D, D)), full_spec((1, D)),
            full_spec((D, FF)), full_spec((1, FF)),
            full_spec((FF, D)), full_spec((1, D)),
            full_spec((1, D)), full_spec((1, D)), full_spec((1, D)), full_spec((1, D)),
        ],
        out_specs=pl.BlockSpec((1, S, D), lambda b: (b, 0, 0)),
        compiler_params=pltpu.CompilerParams(
            dimension_semantics=("parallel",), **_MOSAIC_PARAMS),
    )(
        x,
        layer["wqkv_t"], layer["bqkv"],
        layer["wo_t"], layer["bo"],
        layer["w1_t"], layer["b1"], layer["w2_t"], layer["b2"],
        layer["g1"], layer["beta1"], layer["g2"], layer["beta2"],
    )


def output_linear(x, w_t, b, vocab_size):
    """Tiled LM head. w_t: (D, V_pad) bf16, b: (1, V_pad) f32, V_pad % 128 == 0."""
    B, S, D = x.shape
    M = B * S
    V_pad = w_t.shape[1]

    M_pad = _round_up(M, 8)
    tm = max(t for t in (256, 128, 64, 32, 16, 8) if M_pad % t == 0)
    tn = max(t for t in (512, 256, 128) if V_pad % t == 0)

    xf = x.reshape(M, D)
    if M_pad != M:
        xf = jnp.pad(xf, ((0, M_pad - M), (0, 0)))

    out = pl.pallas_call(
        lm_head_kernel,
        out_shape=jax.ShapeDtypeStruct((M_pad, V_pad), F32),
        grid=(M_pad // tm, V_pad // tn),
        in_specs=[
            pl.BlockSpec((tm, D), lambda i, j: (i, 0)),
            pl.BlockSpec((D, tn), lambda i, j: (0, j)),
            pl.BlockSpec((1, tn), lambda i, j: (0, j)),
        ],
        out_specs=pl.BlockSpec((tm, tn), lambda i, j: (i, j)),
        compiler_params=pltpu.CompilerParams(
            dimension_semantics=("parallel", "parallel"), **_MOSAIC_PARAMS),
    )(xf, w_t, b)
    # TODO(synk): for large D add a third "arbitrary" K grid axis with a VMEM f32
    # accumulator instead of loading the full (D, tn) weight column per step.
    return out[:M, :vocab_size].reshape(B, S, vocab_size)


def transformer_lm_forward(tokens, params, n_head):
    """tokens: (B, S) int32 -> logits (B, S, vocab_size) float32."""
    vocab_size = params["vocab_size"]
    tok = jnp.clip(tokens, 0, params["emb"].shape[0] - 1)   # x.clamp(0, num_emb-1)
    x = jnp.take(params["emb"], tok, axis=0)                 # embedding gather (glue)
    S = x.shape[1]
    assert S <= params["pos"].shape[0], "sequence length exceeds max_len"
    x = x + params["pos"][:S][None, :, :]                    # learned positional enc.
    for layer in params["layers"]:
        x = encoder_layer(x, layer, n_head)
    return output_linear(x, params["wout_t"], params["bout"], vocab_size)


# ---------------------------------------------------------------------------
# Deterministic parameter init (synthetic; shapes mirror the nn.Module __init__)
# ---------------------------------------------------------------------------
def init_params(key, vocab_size, d_model, n_head, n_layer, dim_ff=2048, max_len=64):
    assert d_model % n_head == 0
    k_emb, k_pos, k_out, k_layers = jax.random.split(key, 4)

    def rnd(k, shape, scale=0.02, dtype=F32):
        return (jax.random.normal(k, shape, F32) * scale).astype(dtype)

    v_pad = _round_up(vocab_size, 128)       # lane-dense LM-head output tiles
    wout = rnd(k_out, (d_model, vocab_size))
    wout = jnp.pad(wout, ((0, 0), (0, v_pad - vocab_size))).astype(BF16)

    params = {
        "vocab_size": vocab_size,
        "emb": rnd(k_emb, (vocab_size, d_model)),
        "pos": rnd(k_pos, (max_len, d_model)),
        "wout_t": wout,                                   # (D, V_pad) bf16
        "bout": jnp.zeros((1, v_pad), F32),
        "layers": [],
    }
    for lk in jax.random.split(k_layers, n_layer):
        ks = jax.random.split(lk, 5)
        layer = {
            # fused in-proj, stored pre-transposed (D, 3D); matmul weights in bf16
            "wqkv_t": rnd(ks[0], (d_model, 3 * d_model), dtype=BF16),
            "bqkv": rnd(ks[1], (1, 3 * d_model)),
            "wo_t": rnd(ks[2], (d_model, d_model), dtype=BF16),
            "bo": jnp.zeros((1, d_model), F32),
            # feed-forward (dim_feedforward=2048, PyTorch default)
            "w1_t": rnd(ks[3], (d_model, dim_ff), dtype=BF16),
            "b1": jnp.zeros((1, dim_ff), F32),
            "w2_t": rnd(ks[4], (dim_ff, d_model), dtype=BF16),
            "b2": jnp.zeros((1, d_model), F32),
            # LayerNorms (eps=1e-5)
            "g1": jnp.ones((1, d_model), F32),
            "beta1": jnp.zeros((1, d_model), F32),
            "g2": jnp.ones((1, d_model), F32),
            "beta2": jnp.zeros((1, d_model), F32),
        }
        params["layers"].append(layer)
    return params


# ---------------------------------------------------------------------------
if __name__ == "__main__":
    vocab_size, d_model, n_head, n_layer = 50, 32, 4, 2
    B, S = 2, 8

    key = jax.random.PRNGKey(0)
    k_params, k_tokens = jax.random.split(key)
    params = init_params(k_params, vocab_size, d_model, n_head, n_layer)
    tokens = jax.random.randint(k_tokens, (B, S), 0, vocab_size, dtype=jnp.int32)

    logits = transformer_lm_forward(tokens, params, n_head)
    logits = jax.block_until_ready(logits)
    assert logits.shape == (B, S, vocab_size)
    assert bool(jnp.all(jnp.isfinite(logits)))
    print("KERNEL_OK")
</pallas_src>

<mosaic_0001>
module attributes {stable_mosaic.version = 11 : i64} {
  func.func @encoder_layer_kernel(%arg0: i32, %arg1: memref<1x8x32xf32, #tpu.memory_space<vmem>>, %arg2: memref<32x96xbf16, #tpu.memory_space<vmem>>, %arg3: memref<1x96xf32, #tpu.memory_space<vmem>>, %arg4: memref<32x32xbf16, #tpu.memory_space<vmem>>, %arg5: memref<1x32xf32, #tpu.memory_space<vmem>>, %arg6: memref<32x2048xbf16, #tpu.memory_space<vmem>>, %arg7: memref<1x2048xf32, #tpu.memory_space<vmem>>, %arg8: memref<2048x32xbf16, #tpu.memory_space<vmem>>, %arg9: memref<1x32xf32, #tpu.memory_space<vmem>>, %arg10: memref<1x32xf32, #tpu.memory_space<vmem>>, %arg11: memref<1x32xf32, #tpu.memory_space<vmem>>, %arg12: memref<1x32xf32, #tpu.memory_space<vmem>>, %arg13: memref<1x32xf32, #tpu.memory_space<vmem>>, %arg14: memref<1x8x32xf32, #tpu.memory_space<vmem>>) attributes {dimension_semantics = [#tpu.dimension_semantics<parallel>], iteration_bounds = array<i64: 2>, scalar_prefetch = 0 : i64, scratch_operands = 0 : i64, tpu.core_type = #tpu.core_type<tc>, window_params = [{transform_indices = @transform_0, window_bounds = array<i64: 1, 8, 32>}, {pipeline_mode = #tpu.pipeline_mode<synchronous>, transform_indices = @transform_1, window_bounds = array<i64: 32, 96>}, {pipeline_mode = #tpu.pipeline_mode<synchronous>, transform_indices = @transform_2, window_bounds = array<i64: 1, 96>}, {pipeline_mode = #tpu.pipeline_mode<synchronous>, transform_indices = @transform_3, window_bounds = array<i64: 32, 32>}, {pipeline_mode = #tpu.pipeline_mode<synchronous>, transform_indices = @transform_4, window_bounds = array<i64: 1, 32>}, {pipeline_mode = #tpu.pipeline_mode<synchronous>, transform_indices = @transform_5, window_bounds = array<i64: 32, 2048>}, {pipeline_mode = #tpu.pipeline_mode<synchronous>, transform_indices = @transform_6, window_bounds = array<i64: 1, 2048>}, {pipeline_mode = #tpu.pipeline_mode<synchronous>, transform_indices = @transform_7, window_bounds = array<i64: 2048, 32>}, {pipeline_mode = #tpu.pipeline_mode<synchronous>, transform_indices = @transform_8, window_bounds = array<i64: 1, 32>}, {pipeline_mode = #tpu.pipeline_mode<synchronous>, transform_indices = @transform_9, window_bounds = array<i64: 1, 32>}, {pipeline_mode = #tpu.pipeline_mode<synchronous>, transform_indices = @transform_10, window_bounds = array<i64: 1, 32>}, {pipeline_mode = #tpu.pipeline_mode<synchronous>, transform_indices = @transform_11, window_bounds = array<i64: 1, 32>}, {pipeline_mode = #tpu.pipeline_mode<synchronous>, transform_indices = @transform_12, window_bounds = array<i64: 1, 32>}, {transform_indices = @transform_13, window_bounds = array<i64: 1, 8, 32>}]} {
    %c0 = arith.constant 0 : index
    %c0_0 = arith.constant 0 : index
    %c0_1 = arith.constant 0 : index
    %0 = vector.load %arg1[%c0, %c0_0, %c0_1] : memref<1x8x32xf32, #tpu.memory_space<vmem>>, vector<1x8x32xf32>
    %1 = vector.shape_cast %0 : vector<1x8x32xf32> to vector<8x32xf32>
    %2 = arith.truncf %1 : vector<8x32xf32> to vector<8x32xbf16>
    %c0_2 = arith.constant 0 : index
    %c0_3 = arith.constant 0 : index
    %3 = vector.load %arg2[%c0_2, %c0_3] : memref<32x96xbf16, #tpu.memory_space<vmem>>, vector<32x96xbf16>
    %cst = arith.constant dense<0.000000e+00> : vector<8x96xf32>
    %4 = tpu.matmul %2, %3, %cst {dimension_numbers = #tpu.dot_dimension_numbers<[1], [0], [0], [1], [0, 0, 1, 1], [], []>} : vector<8x32xbf16>, vector<32x96xbf16>, vector<8x96xf32> -> vector<8x96xf32>
    %c0_4 = arith.constant 0 : index
    %c0_5 = arith.constant 0 : index
    %5 = vector.load %arg3[%c0_4, %c0_5] : memref<1x96xf32, #tpu.memory_space<vmem>>, vector<1x96xf32>
    %6 = vector.broadcast %5 : vector<1x96xf32> to vector<8x96xf32>
    %7 = arith.addf %4, %6 : vector<8x96xf32>
    %8 = vector.extract_strided_slice %7 {offsets = [0, 0], sizes = [8, 32], strides = [1, 1]} : vector<8x96xf32> to vector<8x32xf32>
    %cst_6 = arith.constant 0.353553385 : f32
    %9 = vector.broadcast %cst_6 : f32 to vector<8x32xf32>
    %10 = arith.mulf %8, %9 : vector<8x32xf32>
    %11 = arith.truncf %10 : vector<8x32xf32> to vector<8x32xbf16>
    %12 = vector.extract_strided_slice %7 {offsets = [0, 32], sizes = [8, 32], strides = [1, 1]} : vector<8x96xf32> to vector<8x32xf32>
    %13 = arith.truncf %12 : vector<8x32xf32> to vector<8x32xbf16>
    %14 = vector.extract_strided_slice %7 {offsets = [0, 64], sizes = [8, 32], strides = [1, 1]} : vector<8x96xf32> to vector<8x32xf32>
    %15 = arith.truncf %14 : vector<8x32xf32> to vector<8x32xbf16>
    %16 = tpu.iota {dimensions = array<i32: 0>} : vector<8x8xi32>
    %17 = tpu.iota {dimensions = array<i32: 1>} : vector<8x8xi32>
    %18 = arith.cmpi sgt, %17, %16 : vector<8x8xi32>
    %cst_7 = arith.constant -1.000000e+30 : f32
    %cst_8 = arith.constant 0.000000e+00 : f32
    %19 = vector.broadcast %cst_7 : f32 to vector<8x8xf32>
    %20 = vector.broadcast %cst_8 : f32 to vector<8x8xf32>
    %21 = arith.select %18, %19, %20 : vector<8x8xi1>, vector<8x8xf32>
    %cst_9 = arith.constant 0.000000e+00 : f32
    %22 = vector.broadcast %cst_9 : f32 to vector<8x32xf32>
    %23 = vector.extract_strided_slice %11 {offsets = [0, 0], sizes = [8, 8], strides = [1, 1]} : vector<8x32xbf16> to vector<8x8xbf16>
    %24 = vector.extract_strided_slice %13 {offsets = [0, 0], sizes = [8, 8], strides = [1, 1]} : vector<8x32xbf16> to vector<8x8xbf16>
    %cst_10 = arith.constant dense<0.000000e+00> : vector<8x8xf32>
    %25 = tpu.matmul %23, %24, %cst_10 {dimension_numbers = #tpu.dot_dimension_numbers<[1], [1], [0], [0], [0, 0, 1, 0], [], []>} : vector<8x8xbf16>, vector<8x8xbf16>, vector<8x8xf32> -> vector<8x8xf32>
    %26 = arith.addf %25, %21 : vector<8x8xf32>
    %cst_11 = arith.constant dense<0xFF800000> : vector<8xf32>
    %27 = vector.multi_reduction <maximumf>, %26, %cst_11 [1] : vector<8x8xf32> to vector<8xf32>
    %28 = vector.shape_cast %27 : vector<8xf32> to vector<8x1xf32>
    %29 = vector.broadcast %28 : vector<8x1xf32> to vector<8x8xf32>
    %30 = arith.subf %26, %29 : vector<8x8xf32>
    %31 = math.exp %30 : vector<8x8xf32>
    %cst_12 = arith.constant dense<0.000000e+00> : vector<8xf32>
    %32 = vector.multi_reduction <add>, %31, %cst_12 [1] : vector<8x8xf32> to vector<8xf32>
    %33 = vector.shape_cast %32 : vector<8xf32> to vector<8x1xf32>
    %34 = tpu.reciprocal %33 {approx = true} : vector<8x1xf32> -> vector<8x1xf32>
    %35 = vector.broadcast %34 : vector<8x1xf32> to vector<8x8xf32>
    %36 = arith.mulf %31, %35 : vector<8x8xf32>
    %37 = arith.truncf %36 : vector<8x8xf32> to vector<8x8xbf16>
    %38 = vector.extract_strided_slice %15 {offsets = [0, 0], sizes = [8, 8], strides = [1, 1]} : vector<8x32xbf16> to vector<8x8xbf16>
    %cst_13 = arith.constant dense<0.000000e+00> : vector<8x8xf32>
    %39 = tpu.matmul %37, %38, %cst_13 {dimension_numbers = #tpu.dot_dimension_numbers<[1], [0], [0], [1], [0, 0, 1, 1], [], []>} : vector<8x8xbf16>, vector<8x8xbf16>, vector<8x8xf32> -> vector<8x8xf32>
    %40 = arith.truncf %39 : vector<8x8xf32> to vector<8x8xbf16>
    %c0_14 = arith.constant 0 : index
    %c0_15 = arith.constant 0 : index
    %41 = vector.load %arg4[%c0_14, %c0_15] : memref<32x32xbf16, #tpu.memory_space<vmem>>, vector<8x32xbf16>
    %cst_16 = arith.constant dense<0.000000e+00> : vector<8x32xf32>
    %42 = tpu.matmul %40, %41, %cst_16 {dimension_numbers = #tpu.dot_dimension_numbers<[1], [0], [0], [1], [0, 0, 1, 1], [], []>} : vector<8x8xbf16>, vector<8x32xbf16>, vector<8x32xf32> -> vector<8x32xf32>
    %43 = arith.addf %22, %42 : vector<8x32xf32>
    %44 = vector.extract_strided_slice %11 {offsets = [0, 8], sizes = [8, 8], strides = [1, 1]} : vector<8x32xbf16> to vector<8x8xbf16>
    %45 = vector.extract_strided_slice %13 {offsets = [0, 8], sizes = [8, 8], strides = [1, 1]} : vector<8x32xbf16> to vector<8x8xbf16>
    %cst_17 = arith.constant dense<0.000000e+00> : vector<8x8xf32>
    %46 = tpu.matmul %44, %45, %cst_17 {dimension_numbers = #tpu.dot_dimension_numbers<[1], [1], [0], [0], [0, 0, 1, 0], [], []>} : vector<8x8xbf16>, vector<8x8xbf16>, vector<8x8xf32> -> vector<8x8xf32>
    %47 = arith.addf %46, %21 : vector<8x8xf32>
    %cst_18 = arith.constant dense<0xFF800000> : vector<8xf32>
    %48 = vector.multi_reduction <maximumf>, %47, %cst_18 [1] : vector<8x8xf32> to vector<8xf32>
    %49 = vector.shape_cast %48 : vector<8xf32> to vector<8x1xf32>
    %50 = vector.broadcast %49 : vector<8x1xf32> to vector<8x8xf32>
    %51 = arith.subf %47, %50 : vector<8x8xf32>
    %52 = math.exp %51 : vector<8x8xf32>
    %cst_19 = arith.constant dense<0.000000e+00> : vector<8xf32>
    %53 = vector.multi_reduction <add>, %52, %cst_19 [1] : vector<8x8xf32> to vector<8xf32>
    %54 = vector.shape_cast %53 : vector<8xf32> to vector<8x1xf32>
    %55 = tpu.reciprocal %54 {approx = true} : vector<8x1xf32> -> vector<8x1xf32>
    %56 = vector.broadcast %55 : vector<8x1xf32> to vector<8x8xf32>
    %57 = arith.mulf %52, %56 : vector<8x8xf32>
    %58 = arith.truncf %57 : vector<8x8xf32> to vector<8x8xbf16>
    %59 = vector.extract_strided_slice %15 {offsets = [0, 8], sizes = [8, 8], strides = [1, 1]} : vector<8x32xbf16> to vector<8x8xbf16>
    %cst_20 = arith.constant dense<0.000000e+00> : vector<8x8xf32>
    %60 = tpu.matmul %58, %59, %cst_20 {dimension_numbers = #tpu.dot_dimension_numbers<[1], [0], [0], [1], [0, 0, 1, 1], [], []>} : vector<8x8xbf16>, vector<8x8xbf16>, vector<8x8xf32> -> vector<8x8xf32>
    %61 = arith.truncf %60 : vector<8x8xf32> to vector<8x8xbf16>
    %c8 = arith.constant 8 : index
    %c0_21 = arith.constant 0 : index
    %62 = vector.load %arg4[%c8, %c0_21] : memref<32x32xbf16, #tpu.memory_space<vmem>>, vector<8x32xbf16>
    %cst_22 = arith.constant dense<0.000000e+00> : vector<8x32xf32>
    %63 = tpu.matmul %61, %62, %cst_22 {dimension_numbers = #tpu.dot_dimension_numbers<[1], [0], [0], [1], [0, 0, 1, 1], [], []>} : vector<8x8xbf16>, vector<8x32xbf16>, vector<8x32xf32> -> vector<8x32xf32>
    %64 = arith.addf %43, %63 : vector<8x32xf32>
    %65 = vector.extract_strided_slice %11 {offsets = [0, 16], sizes = [8, 8], strides = [1, 1]} : vector<8x32xbf16> to vector<8x8xbf16>
    %66 = vector.extract_strided_slice %13 {offsets = [0, 16], sizes = [8, 8], strides = [1, 1]} : vector<8x32xbf16> to vector<8x8xbf16>
    %cst_23 = arith.constant dense<0.000000e+00> : vector<8x8xf32>
    %67 = tpu.matmul %65, %66, %cst_23 {dimension_numbers = #tpu.dot_dimension_numbers<[1], [1], [0], [0], [0, 0, 1, 0], [], []>} : vector<8x8xbf16>, vector<8x8xbf16>, vector<8x8xf32> -> vector<8x8xf32>
    %68 = arith.addf %67, %21 : vector<8x8xf32>
    %cst_24 = arith.constant dense<0xFF800000> : vector<8xf32>
    %69 = vector.multi_reduction <maximumf>, %68, %cst_24 [1] : vector<8x8xf32> to vector<8xf32>
    %70 = vector.shape_cast %69 : vector<8xf32> to vector<8x1xf32>
    %71 = vector.broadcast %70 : vector<8x1xf32> to vector<8x8xf32>
    %72 = arith.subf %68, %71 : vector<8x8xf32>
    %73 = math.exp %72 : vector<8x8xf32>
    %cst_25 = arith.constant dense<0.000000e+00> : vector<8xf32>
    %74 = vector.multi_reduction <add>, %73, %cst_25 [1] : vector<8x8xf32> to vector<8xf32>
    %75 = vector.shape_cast %74 : vector<8xf32> to vector<8x1xf32>
    %76 = tpu.reciprocal %75 {approx = true} : vector<8x1xf32> -> vector<8x1xf32>
    %77 = vector.broadcast %76 : vector<8x1xf32> to vector<8x8xf32>
    %78 = arith.mulf %73, %77 : vector<8x8xf32>
    %79 = arith.truncf %78 : vector<8x8xf32> to vector<8x8xbf16>
    %80 = vector.extract_strided_slice %15 {offsets = [0, 16], sizes = [8, 8], strides = [1, 1]} : vector<8x32xbf16> to vector<8x8xbf16>
    %cst_26 = arith.constant dense<0.000000e+00> : vector<8x8xf32>
    %81 = tpu.matmul %79, %80, %cst_26 {dimension_numbers = #tpu.dot_dimension_numbers<[1], [0], [0], [1], [0, 0, 1, 1], [], []>} : vector<8x8xbf16>, vector<8x8xbf16>, vector<8x8xf32> -> vector<8x8xf32>
    %82 = arith.truncf %81 : vector<8x8xf32> to vector<8x8xbf16>
    %c16 = arith.constant 16 : index
    %c0_27 = arith.constant 0 : index
    %83 = vector.load %arg4[%c16, %c0_27] : memref<32x32xbf16, #tpu.memory_space<vmem>>, vector<8x32xbf16>
    %cst_28 = arith.constant dense<0.000000e+00> : vector<8x32xf32>
    %84 = tpu.matmul %82, %83, %cst_28 {dimension_numbers = #tpu.dot_dimension_numbers<[1], [0], [0], [1], [0, 0, 1, 1], [], []>} : vector<8x8xbf16>, vector<8x32xbf16>, vector<8x32xf32> -> vector<8x32xf32>
    %85 = arith.addf %64, %84 : vector<8x32xf32>
    %86 = vector.extract_strided_slice %11 {offsets = [0, 24], sizes = [8, 8], strides = [1, 1]} : vector<8x32xbf16> to vector<8x8xbf16>
    %87 = vector.extract_strided_slice %13 {offsets = [0, 24], sizes = [8, 8], strides = [1, 1]} : vector<8x32xbf16> to vector<8x8xbf16>
    %cst_29 = arith.constant dense<0.000000e+00> : vector<8x8xf32>
    %88 = tpu.matmul %86, %87, %cst_29 {dimension_numbers = #tpu.dot_dimension_numbers<[1], [1], [0], [0], [0, 0, 1, 0], [], []>} : vector<8x8xbf16>, vector<8x8xbf16>, vector<8x8xf32> -> vector<8x8xf32>
    %89 = arith.addf %88, %21 : vector<8x8xf32>
    %cst_30 = arith.constant dense<0xFF800000> : vector<8xf32>
    %90 = vector.multi_reduction <maximumf>, %89, %cst_30 [1] : vector<8x8xf32> to vector<8xf32>
    %91 = vector.shape_cast %90 : vector<8xf32> to vector<8x1xf32>
    %92 = vector.broadcast %91 : vector<8x1xf32> to vector<8x8xf32>
    %93 = arith.subf %89, %92 : vector<8x8xf32>
    %94 = math.exp %93 : vector<8x8xf32>
    %cst_31 = arith.constant dense<0.000000e+00> : vector<8xf32>
    %95 = vector.multi_reduction <add>, %94, %cst_31 [1] : vector<8x8xf32> to vector<8xf32>
    %96 = vector.shape_cast %95 : vector<8xf32> to vector<8x1xf32>
    %97 = tpu.reciprocal %96 {approx = true} : vector<8x1xf32> -> vector<8x1xf32>
    %98 = vector.broadcast %97 : vector<8x1xf32> to vector<8x8xf32>
    %99 = arith.mulf %94, %98 : vector<8x8xf32>
    %100 = arith.truncf %99 : vector<8x8xf32> to vector<8x8xbf16>
    %101 = vector.extract_strided_slice %15 {offsets = [0, 24], sizes = [8, 8], strides = [1, 1]} : vector<8x32xbf16> to vector<8x8xbf16>
    %cst_32 = arith.constant dense<0.000000e+00> : vector<8x8xf32>
    %102 = tpu.matmul %100, %101, %cst_32 {dimension_numbers = #tpu.dot_dimension_numbers<[1], [0], [0], [1], [0, 0, 1, 1], [], []>} : vector<8x8xbf16>, vector<8x8xbf16>, vector<8x8xf32> -> vector<8x8xf32>
    %103 = arith.truncf %102 : vector<8x8xf32> to vector<8x8xbf16>
    %c24 = arith.constant 24 : index
    %c0_33 = arith.constant 0 : index
    %104 = vector.load %arg4[%c24, %c0_33] : memref<32x32xbf16, #tpu.memory_space<vmem>>, vector<8x32xbf16>
    %cst_34 = arith.constant dense<0.000000e+00> : vector<8x32xf32>
    %105 = tpu.matmul %103, %104, %cst_34 {dimension_numbers = #tpu.dot_dimension_numbers<[1], [0], [0], [1], [0, 0, 1, 1], [], []>} : vector<8x8xbf16>, vector<8x32xbf16>, vector<8x32xf32> -> vector<8x32xf32>
    %106 = arith.addf %85, %105 : vector<8x32xf32>
    %c0_35 = arith.constant 0 : index
    %c0_36 = arith.constant 0 : index
    %107 = vector.load %arg5[%c0_35, %c0_36] : memref<1x32xf32, #tpu.memory_space<vmem>>, vector<1x32xf32>
    %108 = vector.broadcast %107 : vector<1x32xf32> to vector<8x32xf32>
    %109 = arith.addf %106, %108 : vector<8x32xf32>
    %110 = arith.addf %1, %109 : vector<8x32xf32>
    %c0_37 = arith.constant 0 : index
    %c0_38 = arith.constant 0 : index
    %111 = vector.load %arg10[%c0_37, %c0_38] : memref<1x32xf32, #tpu.memory_space<vmem>>, vector<1x32xf32>
    %c0_39 = arith.constant 0 : index
    %c0_40 = arith.constant 0 : index
    %112 = vector.load %arg11[%c0_39, %c0_40] : memref<1x32xf32, #tpu.memory_space<vmem>>, vector<1x32xf32>
    %cst_41 = arith.constant dense<0.000000e+00> : vector<8xf32>
    %113 = vector.multi_reduction <add>, %110, %cst_41 [1] : vector<8x32xf32> to vector<8xf32>
    %114 = vector.shape_cast %113 : vector<8xf32> to vector<8x1xf32>
    %cst_42 = arith.constant 3.200000e+01 : f32
    %115 = vector.broadcast %cst_42 : f32 to vector<8x1xf32>
    %116 = arith.divf %114, %115 : vector<8x1xf32>
    %117 = arith.mulf %110, %110 : vector<8x32xf32>
    %cst_43 = arith.constant dense<0.000000e+00> : vector<8xf32>
    %118 = vector.multi_reduction <add>, %117, %cst_43 [1] : vector<8x32xf32> to vector<8xf32>
    %119 = vector.shape_cast %118 : vector<8xf32> to vector<8x1xf32>
    %cst_44 = arith.constant 3.200000e+01 : f32
    %120 = vector.broadcast %cst_44 : f32 to vector<8x1xf32>
    %121 = arith.divf %119, %120 : vector<8x1xf32>
    %122 = arith.mulf %116, %116 : vector<8x1xf32>
    %123 = arith.subf %121, %122 : vector<8x1xf32>
    %124 = vector.broadcast %116 : vector<8x1xf32> to vector<8x32xf32>
    %125 = arith.subf %110, %124 : vector<8x32xf32>
    %cst_45 = arith.constant 9.99999974E-6 : f32
    %126 = vector.broadcast %cst_45 : f32 to vector<8x1xf32>
    %127 = arith.addf %123, %126 : vector<8x1xf32>
    %128 = math.rsqrt %127 : vector<8x1xf32>
    %129 = vector.broadcast %128 : vector<8x1xf32> to vector<8x32xf32>
    %130 = arith.mulf %125, %129 : vector<8x32xf32>
    %131 = vector.broadcast %111 : vector<1x32xf32> to vector<8x32xf32>
    %132 = arith.mulf %130, %131 : vector<8x32xf32>
    %133 = vector.broadcast %112 : vector<1x32xf32> to vector<8x32xf32>
    %134 = arith.addf %132, %133 : vector<8x32xf32>
    %135 = arith.truncf %134 : vector<8x32xf32> to vector<8x32xbf16>
    %c0_46 = arith.constant 0 : index
    %c0_47 = arith.constant 0 : index
    %136 = vector.load %arg6[%c0_46, %c0_47] : memref<32x2048xbf16, #tpu.memory_space<vmem>>, vector<32x2048xbf16>
    %cst_48 = arith.constant dense<0.000000e+00> : vector<8x2048xf32>
    %137 = tpu.matmul %135, %136, %cst_48 {dimension_numbers = #tpu.dot_dimension_numbers<[1], [0], [0], [1], [0, 0, 1, 1], [], []>} : vector<8x32xbf16>, vector<32x2048xbf16>, vector<8x2048xf32> -> vector<8x2048xf32>
    %c0_49 = arith.constant 0 : index
    %c0_50 = arith.constant 0 : index
    %138 = vector.load %arg7[%c0_49, %c0_50] : memref<1x2048xf32, #tpu.memory_space<vmem>>, vector<1x2048xf32>
    %139 = vector.broadcast %138 : vector<1x2048xf32> to vector<8x2048xf32>
    %140 = arith.addf %137, %139 : vector<8x2048xf32>
    %cst_51 = arith.constant 0.000000e+00 : f32
    %141 = vector.broadcast %cst_51 : f32 to vector<8x2048xf32>
    %142 = arith.maximumf %140, %141 : vector<8x2048xf32>
    %143 = arith.truncf %142 : vector<8x2048xf32> to vector<8x2048xbf16>
    %c0_52 = arith.constant 0 : index
    %c0_53 = arith.constant 0 : index
    %144 = vector.load %arg8[%c0_52, %c0_53] : memref<2048x32xbf16, #tpu.memory_space<vmem>>, vector<2048x32xbf16>
    %cst_54 = arith.constant dense<0.000000e+00> : vector<8x32xf32>
    %145 = tpu.matmul %143, %144, %cst_54 {dimension_numbers = #tpu.dot_dimension_numbers<[1], [0], [0], [1], [0, 0, 1, 1], [], []>} : vector<8x2048xbf16>, vector<2048x32xbf16>, vector<8x32xf32> -> vector<8x32xf32>
    %c0_55 = arith.constant 0 : index
    %c0_56 = arith.constant 0 : index
    %146 = vector.load %arg9[%c0_55, %c0_56] : memref<1x32xf32, #tpu.memory_space<vmem>>, vector<1x32xf32>
    %147 = vector.broadcast %146 : vector<1x32xf32> to vector<8x32xf32>
    %148 = arith.addf %145, %147 : vector<8x32xf32>
    %149 = arith.addf %134, %148 : vector<8x32xf32>
    %c0_57 = arith.constant 0 : index
    %c0_58 = arith.constant 0 : index
    %150 = vector.load %arg12[%c0_57, %c0_58] : memref<1x32xf32, #tpu.memory_space<vmem>>, vector<1x32xf32>
    %c0_59 = arith.constant 0 : index
    %c0_60 = arith.constant 0 : index
    %151 = vector.load %arg13[%c0_59, %c0_60] : memref<1x32xf32, #tpu.memory_space<vmem>>, vector<1x32xf32>
    %cst_61 = arith.constant dense<0.000000e+00> : vector<8xf32>
    %152 = vector.multi_reduction <add>, %149, %cst_61 [1] : vector<8x32xf32> to vector<8xf32>
    %153 = vector.shape_cast %152 : vector<8xf32> to vector<8x1xf32>
    %cst_62 = arith.constant 3.200000e+01 : f32
    %154 = vector.broadcast %cst_62 : f32 to vector<8x1xf32>
    %155 = arith.divf %153, %154 : vector<8x1xf32>
    %156 = arith.mulf %149, %149 : vector<8x32xf32>
    %cst_63 = arith.constant dense<0.000000e+00> : vector<8xf32>
    %157 = vector.multi_reduction <add>, %156, %cst_63 [1] : vector<8x32xf32> to vector<8xf32>
    %158 = vector.shape_cast %157 : vector<8xf32> to vector<8x1xf32>
    %cst_64 = arith.constant 3.200000e+01 : f32
    %159 = vector.broadcast %cst_64 : f32 to vector<8x1xf32>
    %160 = arith.divf %158, %159 : vector<8x1xf32>
    %161 = arith.mulf %155, %155 : vector<8x1xf32>
    %162 = arith.subf %160, %161 : vector<8x1xf32>
    %163 = vector.broadcast %155 : vector<8x1xf32> to vector<8x32xf32>
    %164 = arith.subf %149, %163 : vector<8x32xf32>
    %cst_65 = arith.constant 9.99999974E-6 : f32
    %165 = vector.broadcast %cst_65 : f32 to vector<8x1xf32>
    %166 = arith.addf %162, %165 : vector<8x1xf32>
    %167 = math.rsqrt %166 : vector<8x1xf32>
    %168 = vector.broadcast %167 : vector<8x1xf32> to vector<8x32xf32>
    %169 = arith.mulf %164, %168 : vector<8x32xf32>
    %170 = vector.broadcast %150 : vector<1x32xf32> to vector<8x32xf32>
    %171 = arith.mulf %169, %170 : vector<8x32xf32>
    %172 = vector.broadcast %151 : vector<1x32xf32> to vector<8x32xf32>
    %173 = arith.addf %171, %172 : vector<8x32xf32>
    %c0_66 = arith.constant 0 : index
    %c0_67 = arith.constant 0 : index
    %c0_68 = arith.constant 0 : index
    %174 = vector.load %arg14[%c0_66, %c0_67, %c0_68] : memref<1x8x32xf32, #tpu.memory_space<vmem>>, vector<1x8x32xf32>
    %175 = vector.shape_cast %174 : vector<1x8x32xf32> to vector<8x32xf32>
    %176 = vector.shape_cast %173 : vector<8x32xf32> to vector<1x8x32xf32>
    tpu.vector_store %arg14[%c0_66, %c0_67, %c0_68], %176 {strides = array<i32>} : memref<1x8x32xf32, #tpu.memory_space<vmem>>, vector<1x8x32xf32>,
    return
  }
  func.func @transform_0(%arg0: i32) -> (i32, i32, i32) {
    %c0_i32 = arith.constant 0 : i32
    %c0_i32_0 = arith.constant 0 : i32
    %c0_i32_1 = arith.constant 0 : i32
    return %arg0, %c0_i32, %c0_i32_0 : i32, i32, i32
  }
  func.func @transform_1(%arg0: i32) -> (i32, i32) {
    %c0_i32 = arith.constant 0 : i32
    %c0_i32_0 = arith.constant 0 : i32
    %c0_i32_1 = arith.constant 0 : i32
    return %c0_i32, %c0_i32_0 : i32, i32
  }
  func.func @transform_2(%arg0: i32) -> (i32, i32) {
    %c0_i32 = arith.constant 0 : i32
    %c0_i32_0 = arith.constant 0 : i32
    %c0_i32_1 = arith.constant 0 : i32
    return %c0_i32, %c0_i32_0 : i32, i32
  }
  func.func @transform_3(%arg0: i32) -> (i32, i32) {
    %c0_i32 = arith.constant 0 : i32
    %c0_i32_0 = arith.constant 0 : i32
    %c0_i32_1 = arith.constant 0 : i32
    return %c0_i32, %c0_i32_0 : i32, i32
  }
  func.func @transform_4(%arg0: i32) -> (i32, i32) {
    %c0_i32 = arith.constant 0 : i32
    %c0_i32_0 = arith.constant 0 : i32
    %c0_i32_1 = arith.constant 0 : i32
    return %c0_i32, %c0_i32_0 : i32, i32
  }
  func.func @transform_5(%arg0: i32) -> (i32, i32) {
    %c0_i32 = arith.constant 0 : i32
    %c0_i32_0 = arith.constant 0 : i32
    %c0_i32_1 = arith.constant 0 : i32
    return %c0_i32, %c0_i32_0 : i32, i32
  }
  func.func @transform_6(%arg0: i32) -> (i32, i32) {
    %c0_i32 = arith.constant 0 : i32
    %c0_i32_0 = arith.constant 0 : i32
    %c0_i32_1 = arith.constant 0 : i32
    return %c0_i32, %c0_i32_0 : i32, i32
  }
  func.func @transform_7(%arg0: i32) -> (i32, i32) {
    %c0_i32 = arith.constant 0 : i32
    %c0_i32_0 = arith.constant 0 : i32
    %c0_i32_1 = arith.constant 0 : i32
    return %c0_i32, %c0_i32_0 : i32, i32
  }
  func.func @transform_8(%arg0: i32) -> (i32, i32) {
    %c0_i32 = arith.constant 0 : i32
    %c0_i32_0 = arith.constant 0 : i32
    %c0_i32_1 = arith.constant 0 : i32
    return %c0_i32, %c0_i32_0 : i32, i32
  }
  func.func @transform_9(%arg0: i32) -> (i32, i32) {
    %c0_i32 = arith.constant 0 : i32
    %c0_i32_0 = arith.constant 0 : i32
    %c0_i32_1 = arith.constant 0 : i32
    return %c0_i32, %c0_i32_0 : i32, i32
  }
  func.func @transform_10(%arg0: i32) -> (i32, i32) {
    %c0_i32 = arith.constant 0 : i32
    %c0_i32_0 = arith.constant 0 : i32
    %c0_i32_1 = arith.constant 0 : i32
    return %c0_i32, %c0_i32_0 : i32, i32
  }
  func.func @transform_11(%arg0: i32) -> (i32, i32) {
    %c0_i32 = arith.constant 0 : i32
    %c0_i32_0 = arith.constant 0 : i32
    %c0_i32_1 = arith.constant 0 : i32
    return %c0_i32, %c0_i32_0 : i32, i32
  }
  func.func @transform_12(%arg0: i32) -> (i32, i32) {
    %c0_i32 = arith.constant 0 : i32
    %c0_i32_0 = arith.constant 0 : i32
    %c0_i32_1 = arith.constant 0 : i32
    return %c0_i32, %c0_i32_0 : i32, i32
  }
  func.func @transform_13(%arg0: i32) -> (i32, i32, i32) {
    %c0_i32 = arith.constant 0 : i32
    %c0_i32_0 = arith.constant 0 : i32
    %c0_i32_1 = arith.constant 0 : i32
    return %arg0, %c0_i32, %c0_i32_0 : i32, i32, i32
  }
}

</mosaic_0001>

<llo_original>
// kernel: tpu_custom_call.1
$region0: #{tpu_custom_call.1}
  #allocation0 [shape = 'u32[]', space=smem, size = 0x4, offset = 0x4, fixed_abs, tag = 'smem constant byte address 0x4 - core index']
  #allocation1 [shape = 'u32[144,128]{1,0:T(1,128)}', space=vmem, size = 0x12000, scoped, tag = 'internal scratch']
  %s0 = inlined_call_operand.vmem [shape: f32[2,8,32], index: 0, kind: input, shape index: {}]
  %s1 = inlined_call_operand.vmem [shape: bf16[32,96], index: 1, kind: input, shape index: {}]
  %s2 = inlined_call_operand.vmem [shape: f32[1,96], index: 2, kind: input, shape index: {}]
  %s3 = inlined_call_operand.vmem [shape: bf16[32,32], index: 3, kind: input, shape index: {}]
  %s4 = inlined_call_operand.vmem [shape: f32[1,32], index: 4, kind: input, shape index: {}]
  %s5 = inlined_call_operand.vmem [shape: bf16[32,2048], index: 5, kind: input, shape index: {}]
  %s6 = inlined_call_operand.vmem [shape: f32[1,2048], index: 6, kind: input, shape index: {}]
  %s7 = inlined_call_operand.vmem [shape: bf16[2048,32], index: 7, kind: input, shape index: {}]
  %s8 = inlined_call_operand.vmem [shape: f32[1,32], index: 8, kind: input, shape index: {}]
  %s9 = inlined_call_operand.vmem [shape: f32[1,32], index: 9, kind: input, shape index: {}]
  %s10 = inlined_call_operand.vmem [shape: f32[1,32], index: 10, kind: input, shape index: {}]
  %s11 = inlined_call_operand.vmem [shape: f32[1,32], index: 11, kind: input, shape index: {}]
  %s12 = inlined_call_operand.vmem [shape: f32[1,32], index: 12, kind: input, shape index: {}]
  %s13 = inlined_call_operand.hbm [shape: f32[2,8,32], index: 13, kind: output, shape index: {}]
  %s14 = sld [smem:[#allocation0]]
  $region85: #{tpu_custom_call.1} parent=0
    _
  %s16 = ssub.s32 1, %s14
  %s17 = scalar_select 0, %s16, %s14
  $region1: #{tpu_custom_call.1} parent=0
    #allocation2 [shape = 'u8[8192]{0}', space=vmem, size = 0x2000, scoped, tag = 'output window, operand 0']
    #allocation3 [shape = 's32[2]{0}', space=sflag, size = 0x8, scoped, tag = 'scoped memory for tpu_custom_call.1']
    %18 = vsyncpa [#allocation3], 0
    %s19 = scalar_lea.sflag [#allocation3], 1
    %20 = vsyncpa %s19, 0
    loop: start=0, step=1, limit=4
    $region2: #{tpu_custom_call.1} parent=1 // loop_pre_header
      _
    $region3: #{tpu_custom_call.1} parent=1 // loop_header
      %s22 = sphi 0, %s26
      %p23 = scmp.ge.s32.totalorder %s22, 4
      %s32 = sphi 0, %s34
      %s35 = sphi 0, %s32
      %s36 = sphi 0, %s35
      %s52 = sphi 0, %s36
      %s56 = sphi 0, %s56
      %s58 = sphi 0, %s56
      %s59 = sphi 0, %s58
      %s73 = sphi 0, %s59
      %s77 = sphi 0, %s77
      %s79 = sphi 0, %s77
      %s80 = sphi 0, %s79
      %s94 = sphi 0, %s80
      %s98 = sphi 0, %s98
      %s100 = sphi 0, %s98
      %s101 = sphi 0, %s100
      %s115 = sphi 0, %s101
      %s119 = sphi 0, %s119
      %s121 = sphi 0, %s119
      %s122 = sphi 0, %s121
      %s136 = sphi 0, %s122
      %s140 = sphi 0, %s140
      %s142 = sphi 0, %s140
      %s143 = sphi 0, %s142
      %s157 = sphi 0, %s143
      %s161 = sphi 0, %s161
      %s163 = sphi 0, %s161
      %s164 = sphi 0, %s163
      %s178 = sphi 0, %s164
      %s182 = sphi 0, %s182
      %s184 = sphi 0, %s182
      %s185 = sphi 0, %s184
      %s199 = sphi 0, %s185
      %s203 = sphi 0, %s203
      %s205 = sphi 0, %s203
      %s206 = sphi 0, %s205
      %s220 = sphi 0, %s206
      %s224 = sphi 0, %s224
      %s226 = sphi 0, %s224
      %s227 = sphi 0, %s226
      %s241 = sphi 0, %s227
      %s245 = sphi 0, %s245
      %s247 = sphi 0, %s245
      %s248 = sphi 0, %s247
      %s262 = sphi 0, %s248
      %s266 = sphi 0, %s266
      %s268 = sphi 0, %s266
      %s269 = sphi 0, %s268
      %s283 = sphi 0, %s269
      %s287 = sphi 0, %s287
      %s289 = sphi 0, %s287
      %s290 = sphi 0, %s289
      %s304 = sphi 0, %s290
      %s310 = sphi 0, %s312
      %s313 = sphi 0, %s310
      %s314 = sphi 0, %s313
      %s330 = sphi 0, %s314
    $region4: #{tpu_custom_call.1} parent=1 // loop_header_branch
      %25 = sbr.rel (%p23) target = $region8
    $region5: #{tpu_custom_call.1} parent=1 // loop_body
      %s27 = ssub.s32 %s22, 1
      %s28 = ssub.s32 %s22, 2
      %s29 = sadd.s32 %s22, 1
      %s30 = ssub.s32 %s22, %s29
      %p31 = scmp.eq.s32.totalorder %s30, 0
      %s33 = sadd.s32 %s32, 1
      %s34 = scalar_select %p31, %s32, %s33
      %p37 = pneg %p31
      %p38 = scmp.eq.s32.totalorder %s22, 1
      %p39 = por %p37, %p38
      %p40 = scmp.ne.s32.totalorder %s32, %s35
      %p41 = scmp.eq.s32.totalorder %s22, 0
      %p42 = por %p40, %p41
      %p43 = scmp.ne.s32.totalorder %s32, %s35
      %p44 = scmp.eq.s32.totalorder %s27, 1
      %p45 = por %p43, %p44
      %p46 = scmp.ne.s32.totalorder %s35, %s36
      %p47 = scmp.eq.s32.totalorder %s27, 0
      %p48 = por %p46, %p47
      %p49 = scmp.ne.s32.totalorder %s35, %s36
      %p50 = scmp.eq.s32.totalorder %s28, 1
      %p51 = por %p49, %p50
      %p53 = scmp.ne.s32.totalorder %s36, %s52
      %p54 = scmp.eq.s32.totalorder %s28, 0
      %p55 = por %p53, %p54
      %s57 = sadd.s32 %s56, 1
      %p60 = scmp.eq.s32.totalorder %s22, 1
      %p61 = scmp.ne.s32.totalorder %s56, %s58
      %p62 = scmp.eq.s32.totalorder %s22, 0
      %p63 = por %p61, %p62
      %p64 = scmp.ne.s32.totalorder %s56, %s58
      %p65 = scmp.eq.s32.totalorder %s27, 1
      %p66 = por %p64, %p65
      %p67 = scmp.ne.s32.totalorder %s58, %s59
      %p68 = scmp.eq.s32.totalorder %s27, 0
      %p69 = por %p67, %p68
      %p70 = scmp.ne.s32.totalorder %s58, %s59
      %p71 = scmp.eq.s32.totalorder %s28, 1
      %p72 = por %p70, %p71
      %p74 = scmp.ne.s32.totalorder %s59, %s73
      %p75 = scmp.eq.s32.totalorder %s28, 0
      %p76 = por %p74, %p75
      %s78 = sadd.s32 %s77, 1
      %p81 = scmp.eq.s32.totalorder %s22, 1
      %p82 = scmp.ne.s32.totalorder %s77, %s79
      %p83 = scmp.eq.s32.totalorder %s22, 0
      %p84 = por %p82, %p83
      %p85 = scmp.ne.s32.totalorder %s77, %s79
      %p86 = scmp.eq.s32.totalorder %s27, 1
      %p87 = por %p85, %p86
      %p88 = scmp.ne.s32.totalorder %s79, %s80
      %p89 = scmp.eq.s32.totalorder %s27, 0
      %p90 = por %p88, %p89
      %p91 = scmp.ne.s32.totalorder %s79, %s80
      %p92 = scmp.eq.s32.totalorder %s28, 1
      %p93 = por %p91, %p92
      %p95 = scmp.ne.s32.totalorder %s80, %s94
      %p96 = scmp.eq.s32.totalorder %s28, 0
      %p97 = por %p95, %p96
      %s99 = sadd.s32 %s98, 1
      %p102 = scmp.eq.s32.totalorder %s22, 1
      %p103 = scmp.ne.s32.totalorder %s98, %s100
      %p104 = scmp.eq.s32.totalorder %s22, 0
      %p105 = por %p103, %p104
      %p106 = scmp.ne.s32.totalorder %s98, %s100
      %p107 = scmp.eq.s32.totalorder %s27, 1
      %p108 = por %p106, %p107
      %p109 = scmp.ne.s32.totalorder %s100, %s101
      %p110 = scmp.eq.s32.totalorder %s27, 0
      %p111 = por %p109, %p110
      %p112 = scmp.ne.s32.totalorder %s100, %s101
      %p113 = scmp.eq.s32.totalorder %s28, 1
      %p114 = por %p112, %p113
      %p116 = scmp.ne.s32.totalorder %s101, %s115
      %p117 = scmp.eq.s32.totalorder %s28, 0
      %p118 = por %p116, %p117
      %s120 = sadd.s32 %s119, 1
      %p123 = scmp.eq.s32.totalorder %s22, 1
      %p124 = scmp.ne.s32.totalorder %s119, %s121
      %p125 = scmp.eq.s32.totalorder %s22, 0
      %p126 = por %p124, %p125
      %p127 = scmp.ne.s32.totalorder %s119, %s121
      %p128 = scmp.eq.s32.totalorder %s27, 1
      %p129 = por %p127, %p128
      %p130 = scmp.ne.s32.totalorder %s121, %s122
      %p131 = scmp.eq.s32.totalorder %s27, 0
      %p132 = por %p130, %p131
      %p133 = scmp.ne.s32.totalorder %s121, %s122
      %p134 = scmp.eq.s32.totalorder %s28, 1
      %p135 = por %p133, %p134
      %p137 = scmp.ne.s32.totalorder %s122, %s136
      %p138 = scmp.eq.s32.totalorder %s28, 0
      %p139 = por %p137, %p138
      %s141 = sadd.s32 %s140, 1
      %p144 = scmp.eq.s32.totalorder %s22, 1
      %p145 = scmp.ne.s32.totalorder %s140, %s142
      %p146 = scmp.eq.s32.totalorder %s22, 0
      %p147 = por %p145, %p146
      %p148 = scmp.ne.s32.totalorder %s140, %s142
      %p149 = scmp.eq.s32.totalorder %s27, 1
      %p150 = por %p148, %p149
      %p151 = scmp.ne.s32.totalorder %s142, %s143
      %p152 = scmp.eq.s32.totalorder %s27, 0
      %p153 = por %p151, %p152
      %p154 = scmp.ne.s32.totalorder %s142, %s143
      %p155 = scmp.eq.s32.totalorder %s28, 1
      %p156 = por %p154, %p155
      %p158 = scmp.ne.s32.totalorder %s143, %s157
      %p159 = scmp.eq.s32.totalorder %s28, 0
      %p160 = por %p158, %p159
      %s162 = sadd.s32 %s161, 1
      %p165 = scmp.eq.s32.totalorder %s22, 1
      %p166 = scmp.ne.s32.totalorder %s161, %s163
      %p167 = scmp.eq.s32.totalorder %s22, 0
      %p168 = por %p166, %p167
      %p169 = scmp.ne.s32.totalorder %s161, %s163
      %p170 = scmp.eq.s32.totalorder %s27, 1
      %p171 = por %p169, %p170
      %p172 = scmp.ne.s32.totalorder %s163, %s164
      %p173 = scmp.eq.s32.totalorder %s27, 0
      %p174 = por %p172, %p173
      %p175 = scmp.ne.s32.totalorder %s163, %s164
      %p176 = scmp.eq.s32.totalorder %s28, 1
      %p177 = por %p175, %p176
      %p179 = scmp.ne.s32.totalorder %s164, %s178
      %p180 = scmp.eq.s32.totalorder %s28, 0
      %p181 = por %p179, %p180
      %s183 = sadd.s32 %s182, 1
      %p186 = scmp.eq.s32.totalorder %s22, 1
      %p187 = scmp.ne.s32.totalorder %s182, %s184
      %p188 = scmp.eq.s32.totalorder %s22, 0
      %p189 = por %p187, %p188
      %p190 = scmp.ne.s32.totalorder %s182, %s184
      %p191 = scmp.eq.s32.totalorder %s27, 1
      %p192 = por %p190, %p191
      %p193 = scmp.ne.s32.totalorder %s184, %s185
      %p194 = scmp.eq.s32.totalorder %s27, 0
      %p195 = por %p193, %p194
      %p196 = scmp.ne.s32.totalorder %s184, %s185
      %p197 = scmp.eq.s32.totalorder %s28, 1
      %p198 = por %p196, %p197
      %p200 = scmp.ne.s32.totalorder %s185, %s199
      %p201 = scmp.eq.s32.totalorder %s28, 0
      %p202 = por %p200, %p201
      %s204 = sadd.s32 %s203, 1
      %p207 = scmp.eq.s32.totalorder %s22, 1
      %p208 = scmp.ne.s32.totalorder %s203, %s205
      %p209 = scmp.eq.s32.totalorder %s22, 0
      %p210 = por %p208, %p209
      %p211 = scmp.ne.s32.totalorder %s203, %s205
      %p212 = scmp.eq.s32.totalorder %s27, 1
      %p213 = por %p211, %p212
      %p214 = scmp.ne.s32.totalorder %s205, %s206
      %p215 = scmp.eq.s32.totalorder %s27, 0
      %p216 = por %p214, %p215
      %p217 = scmp.ne.s32.totalorder %s205, %s206
      %p218 = scmp.eq.s32.totalorder %s28, 1
      %p219 = por %p217, %p218
      %p221 = scmp.ne.s32.totalorder %s206, %s220
      %p222 = scmp.eq.s32.totalorder %s28, 0
      %p223 = por %p221, %p222
      %s225 = sadd.s32 %s224, 1
      %p228 = scmp.eq.s32.totalorder %s22, 1
      %p229 = scmp.ne.s32.totalorder %s224, %s226
      %p230 = scmp.eq.s32.totalorder %s22, 0
      %p231 = por %p229, %p230
      %p232 = scmp.ne.s32.totalorder %s224, %s226
      %p233 = scmp.eq.s32.totalorder %s27, 1
      %p234 = por %p232, %p233
      %p235 = scmp.ne.s32.totalorder %s226, %s227
      %p236 = scmp.eq.s32.totalorder %s27, 0
      %p237 = por %p235, %p236
      %p238 = scmp.ne.s32.totalorder %s226, %s227
      %p239 = scmp.eq.s32.totalorder %s28, 1
      %p240 = por %p238, %p239
      %p242 = scmp.ne.s32.totalorder %s227, %s241
      %p243 = scmp.eq.s32.totalorder %s28, 0
      %p244 = por %p242, %p243
      %s246 = sadd.s32 %s245, 1
      %p249 = scmp.eq.s32.totalorder %s22, 1
      %p250 = scmp.ne.s32.totalorder %s245, %s247
      %p251 = scmp.eq.s32.totalorder %s22, 0
      %p252 = por %p250, %p251
      %p253 = scmp.ne.s32.totalorder %s245, %s247
      %p254 = scmp.eq.s32.totalorder %s27, 1
      %p255 = por %p253, %p254
      %p256 = scmp.ne.s32.totalorder %s247, %s248
      %p257 = scmp.eq.s32.totalorder %s27, 0
      %p258 = por %p256, %p257
      %p259 = scmp.ne.s32.totalorder %s247, %s248
      %p260 = scmp.eq.s32.totalorder %s28, 1
      %p261 = por %p259, %p260
      %p263 = scmp.ne.s32.totalorder %s248, %s262
      %p264 = scmp.eq.s32.totalorder %s28, 0
      %p265 = por %p263, %p264
      %s267 = sadd.s32 %s266, 1
      %p270 = scmp.eq.s32.totalorder %s22, 1
      %p271 = scmp.ne.s32.totalorder %s266, %s268
      %p272 = scmp.eq.s32.totalorder %s22, 0
      %p273 = por %p271, %p272
      %p274 = scmp.ne.s32.totalorder %s266, %s268
      %p275 = scmp.eq.s32.totalorder %s27, 1
      %p276 = por %p274, %p275
      %p277 = scmp.ne.s32.totalorder %s268, %s269
      %p278 = scmp.eq.s32.totalorder %s27, 0
      %p279 = por %p277, %p278
      %p280 = scmp.ne.s32.totalorder %s268, %s269
      %p281 = scmp.eq.s32.totalorder %s28, 1
      %p282 = por %p280, %p281
      %p284 = scmp.ne.s32.totalorder %s269, %s283
      %p285 = scmp.eq.s32.totalorder %s28, 0
      %p286 = por %p284, %p285
      %s288 = sadd.s32 %s287, 1
      %p291 = scmp.eq.s32.totalorder %s22, 1
      %p292 = scmp.ne.s32.totalorder %s287, %s289
      %p293 = scmp.eq.s32.totalorder %s22, 0
      %p294 = por %p292, %p293
      %p295 = scmp.ne.s32.totalorder %s287, %s289
      %p296 = scmp.eq.s32.totalorder %s27, 1
      %p297 = por %p295, %p296
      %p298 = scmp.ne.s32.totalorder %s289, %s290
      %p299 = scmp.eq.s32.totalorder %s27, 0
      %p300 = por %p298, %p299
      %p301 = scmp.ne.s32.totalorder %s289, %s290
      %p302 = scmp.eq.s32.totalorder %s28, 1
      %p303 = por %p301, %p302
      %p305 = scmp.ne.s32.totalorder %s290, %s304
      %p306 = scmp.eq.s32.totalorder %s28, 0
      %p307 = por %p305, %p306
      %s308 = ssub.s32 %s22, %s29
      %p309 = scmp.eq.s32.totalorder %s308, 0
      %s311 = sadd.s32 %s310, 1
      %s312 = scalar_select %p309, %s310, %s311
      %p315 = pneg %p309
      %p316 = scmp.eq.s32.totalorder %s22, 1
      %p317 = por %p315, %p316
      %p318 = scmp.ne.s32.totalorder %s310, %s313
      %p319 = scmp.eq.s32.totalorder %s22, 0
      %p320 = por %p318, %p319
      %p321 = scmp.ne.s32.totalorder %s310, %s313
      %p322 = scmp.eq.s32.totalorder %s27, 1
      %p323 = por %p321, %p322
      %p324 = scmp.ne.s32.totalorder %s313, %s314
      %p325 = scmp.eq.s32.totalorder %s27, 0
      %p326 = por %p324, %p325
      %p327 = scmp.ne.s32.totalorder %s313, %s314
      %p328 = scmp.eq.s32.totalorder %s28, 1
      %p329 = por %p327, %p328
      %p331 = scmp.ne.s32.totalorder %s314, %s330
      %p332 = scmp.eq.s32.totalorder %s28, 0
      %p333 = por %p331, %p332
      %p334 = scmp.le.s32.totalorder 1, %s22
      %p335 = scmp.lt.s32.totalorder %s22, 3
      %p336 = pnand %p334, %p335
      %p337 = pneg %p336
      // Predicated region
      $region9: #{tpu_custom_call.1} parent=5 // pred_check
        _
      $region10: #{tpu_custom_call.1} parent=5 // pred_check_branch
        %339 = sbr.rel (%p336) target = $region12
      $region11: #{tpu_custom_call.1} parent=5 // pred_region
        %s340 = ssub.s32 %s22, 1
        // Predicated region
        $region13: #{tpu_custom_call.1} parent=11 // pred_check
          %p341 = pneg %p69
        $region14: #{tpu_custom_call.1} parent=11 // pred_check_branch
          %343 = sbr.rel (%p341) target = $region16
        $region15: #{tpu_custom_call.1} parent=11 // pred_region
          _
        $region16: #{tpu_custom_call.1} parent=11 // pred_fallthru
          _
        // Predicated region
        $region17: #{tpu_custom_call.1} parent=11 // pred_check
          %p344 = pneg %p90
        $region18: #{tpu_custom_call.1} parent=11 // pred_check_branch
          %346 = sbr.rel (%p344) target = $region20
        $region19: #{tpu_custom_call.1} parent=11 // pred_region
          _
        $region20: #{tpu_custom_call.1} parent=11 // pred_fallthru
          _
        // Predicated region
        $region21: #{tpu_custom_call.1} parent=11 // pred_check
          %p347 = pneg %p111
        $region22: #{tpu_custom_call.1} parent=11 // pred_check_branch
          %349 = sbr.rel (%p347) target = $region24
        $region23: #{tpu_custom_call.1} parent=11 // pred_region
          _
        $region24: #{tpu_custom_call.1} parent=11 // pred_fallthru
          _
        // Predicated region
        $region25: #{tpu_custom_call.1} parent=11 // pred_check
          %p350 = pneg %p132
        $region26: #{tpu_custom_call.1} parent=11 // pred_check_branch
          %352 = sbr.rel (%p350) target = $region28
        $region27: #{tpu_custom_call.1} parent=11 // pred_region
          _
        $region28: #{tpu_custom_call.1} parent=11 // pred_fallthru
          _
        // Predicated region
        $region29: #{tpu_custom_call.1} parent=11 // pred_check
          %p353 = pneg %p153
        $region30: #{tpu_custom_call.1} parent=11 // pred_check_branch
          %355 = sbr.rel (%p353) target = $region32
        $region31: #{tpu_custom_call.1} parent=11 // pred_region
          _
        $region32: #{tpu_custom_call.1} parent=11 // pred_fallthru
          _
        // Predicated region
        $region33: #{tpu_custom_call.1} parent=11 // pred_check
          %p356 = pneg %p174
        $region34: #{tpu_custom_call.1} parent=11 // pred_check_branch
          %358 = sbr.rel (%p356) target = $region36
        $region35: #{tpu_custom_call.1} parent=11 // pred_region
          _
        $region36: #{tpu_custom_call.1} parent=11 // pred_fallthru
          _
        // Predicated region
        $region37: #{tpu_custom_call.1} parent=11 // pred_check
          %p359 = pneg %p195
        $region38: #{tpu_custom_call.1} parent=11 // pred_check_branch
          %361 = sbr.rel (%p359) target = $region40
        $region39: #{tpu_custom_call.1} parent=11 // pred_region
          _
        $region40: #{tpu_custom_call.1} parent=11 // pred_fallthru
          _
        // Predicated region
        $region41: #{tpu_custom_call.1} parent=11 // pred_check
          %p362 = pneg %p216
        $region42: #{tpu_custom_call.1} parent=11 // pred_check_branch
          %364 = sbr.rel (%p362) target = $region44
        $region43: #{tpu_custom_call.1} parent=11 // pred_region
          _
        $region44: #{tpu_custom_call.1} parent=11 // pred_fallthru
          _
        // Predicated region
        $region45: #{tpu_custom_call.1} parent=11 // pred_check
          %p365 = pneg %p237
        $region46: #{tpu_custom_call.1} parent=11 // pred_check_branch
          %367 = sbr.rel (%p365) target = $region48
        $region47: #{tpu_custom_call.1} parent=11 // pred_region
          _
        $region48: #{tpu_custom_call.1} parent=11 // pred_fallthru
          _
        // Predicated region
        $region49: #{tpu_custom_call.1} parent=11 // pred_check
          %p368 = pneg %p258
        $region50: #{tpu_custom_call.1} parent=11 // pred_check_branch
          %370 = sbr.rel (%p368) target = $region52
        $region51: #{tpu_custom_call.1} parent=11 // pred_region
          _
        $region52: #{tpu_custom_call.1} parent=11 // pred_fallthru
          _
        // Predicated region
        $region53: #{tpu_custom_call.1} parent=11 // pred_check
          %p371 = pneg %p279
        $region54: #{tpu_custom_call.1} parent=11 // pred_check_branch
          %373 = sbr.rel (%p371) target = $region56
        $region55: #{tpu_custom_call.1} parent=11 // pred_region
          _
        $region56: #{tpu_custom_call.1} parent=11 // pred_fallthru
          _
        // Predicated region
        $region57: #{tpu_custom_call.1} parent=11 // pred_check
          %p374 = pneg %p300
        $region58: #{tpu_custom_call.1} parent=11 // pred_check_branch
          %376 = sbr.rel (%p374) target = $region60
        $region59: #{tpu_custom_call.1} parent=11 // pred_region
          _
        $region60: #{tpu_custom_call.1} parent=11 // pred_fallthru
          _
      $region12: #{tpu_custom_call.1} parent=5 // pred_fallthru
        _
      %p377 = scmp.lt.s32.totalorder %s22, 2
      // Predicated region
      $region61: #{tpu_custom_call.1} parent=5 // pred_check
        %p378 = pneg %p377
      $region62: #{tpu_custom_call.1} parent=5 // pred_check_branch
        %380 = sbr.rel (%p378) target = $region64
      $region63: #{tpu_custom_call.1} parent=5 // pred_region
        // Predicated region
        $region65: #{tpu_custom_call.1} parent=63 // pred_check
          %p381 = pneg %p42
        $region66: #{tpu_custom_call.1} parent=63 // pred_check_branch
          %383 = sbr.rel (%p381) target = $region68
        $region67: #{tpu_custom_call.1} parent=63 // pred_region
          %p384 = scmp.lt.s32.totalorder %s22, 1
          %s385 = scalar_select %p384, %s22, 1
          %s386 = smul.addr %s385, 8
          %s387 = scalar_lea.vmem %s0, %s386
        $region68: #{tpu_custom_call.1} parent=63 // pred_fallthru
          _
      $region64: #{tpu_custom_call.1} parent=5 // pred_fallthru
        _
      %p388 = scmp.le.s32.totalorder 1, %s22
      %p389 = scmp.lt.s32.totalorder %s22, 3
      %p390 = pnand %p388, %p389
      %p391 = pneg %p390
      // Predicated region
      $region69: #{tpu_custom_call.1} parent=5 // pred_check
        _
      $region70: #{tpu_custom_call.1} parent=5 // pred_check_branch
        %393 = sbr.rel (%p390) target = $region72
      $region71: #{tpu_custom_call.1} parent=5 // pred_region
        %s394 = ssub.s32 %s22, 1
        %p395 = scmp.lt.s32.totalorder %s27, 1
        %s396 = scalar_select %p395, %s27, 1
        %s397 = smul.addr %s396, 8
        %s398 = scalar_lea.vmem %s0, %s397
        %p399 = pneg %p48
        %p400 = pneg %p45
        %p401 = pneg %p69
        %p402 = pneg %p66
        %p403 = pneg %p90
        %p404 = pneg %p87
        %p405 = pneg %p111
        %p406 = pneg %p108
        %p407 = pneg %p132
        %p408 = pneg %p129
        %p409 = pneg %p153
        %p410 = pneg %p150
        %p411 = pneg %p174
        %p412 = pneg %p171
        %p413 = pneg %p195
        %p414 = pneg %p192
        %p415 = pneg %p216
        %p416 = pneg %p213
        %p417 = pneg %p237
        %p418 = pneg %p234
        %p419 = pneg %p258
        %p420 = pneg %p255
        %p421 = pneg %p279
        %p422 = pneg %p276
        %p423 = pneg %p300
        %p424 = pneg %p297
        %p425 = pneg %p326
        %p426 = pneg %p323
        %s427 = sand.u32 %s313, 1
        %s428 = scalar_lea.sflag [#allocation3], %s427
        %s429 = sand.u32 %s313, 1
        %s430 = smul.addr %s429, 8
        %s431 = scalar_lea.vmem [#allocation2], %s430
        %p432 = scmp.lt.s32.totalorder %s27, 1
        %s433 = scalar_select %p432, %s27, 1
        %s434 = smul.addr %s433, 8
        %s435 = scalar_lea.vmem %s0, %s434
        %v437 = vld [vmem:[%s435] sm:$0xff]
        %v438 = vpack.c.bf16 %v437, %v437
        %v439 = vld [vmem:[%s1] sm:$0xf]
        %v440 = vld [vmem:[%s1 + $0x4] sm:$0xf]
        %v441 = vld [vmem:[%s1 + $0x8] sm:$0xf]
        %v442 = vld [vmem:[%s1 + $0xc] sm:$0xf]
        %v443 = vld [vmem:[%s2] sm:$0x1]
        %v445 = vlaneseq
        %v446 = vshrl.u32 %v445, 7
        %v447 = vsub.s32 0, %v446
        %v448 = vrot.slane %v443, %v447
        %v454 = vunpack.c.l.b16 %v439
        %v455 = vunpack.c.l.b16 %v440
        %v456 = vunpack.c.l.b16 %v441
        %v457 = vunpack.c.l.b16 %v442
        %v458 = vpack.c.b16 %v455, %v454
        %v459 = vpack.c.b16 %v457, %v456
        %vm462 = vcmask 261120
        %v464 = vsel %vm462, %v438, 0
        %466 = vmatprep.subr.bf16.mxu0 0
        %467 = vmatpush1.bf16.msra.mxu0 %v458
        %468 = vmatprep.subr.bf16.mxu0 0
        %469 = vmatpush1.bf16.msra.mxu0 %v459
        %470 = vmatprep.subr.bf16.mxu0 0
        %471 = vmatpush1.bf16.msra.mxu0 0
        %472 = vmatprep.subr.bf16.mxu0 0
        %473 = vmatpush1.bf16.msra.mxu0 0
        %474 = vmatprep.subr.bf16.mxu0 0
        %475 = vmatpush1.bf16.msra.mxu0 0
        %476 = vmatprep.subr.bf16.mxu0 0
        %477 = vmatpush1.bf16.msra.mxu0 0
        %478 = vmatprep.subr.bf16.mxu0 0
        %479 = vmatpush1.bf16.msra.mxu0 0
        %480 = vmatprep.subr.bf16.mxu0 0
        %481 = vmatpush1.bf16.msra.mxu0 0
        %482 = vmatprep.subr.bf16.mxu0 0
        %483 = vmatpush1.bf16.msra.mxu0 0
        %484 = vmatprep.subr.bf16.mxu0 0
        %485 = vmatpush1.bf16.msra.mxu0 0
        %486 = vmatprep.subr.bf16.mxu0 0
        %487 = vmatpush1.bf16.msra.mxu0 0
        %488 = vmatprep.subr.bf16.mxu0 0
        %489 = vmatpush1.bf16.msra.mxu0 0
        %490 = vmatprep.subr.bf16.mxu0 0
        %491 = vmatpush1.bf16.msra.mxu0 0
        %492 = vmatprep.subr.bf16.mxu0 0
        %493 = vmatpush1.bf16.msra.mxu0 0
        %494 = vmatprep.subr.bf16.mxu0 0
        %495 = vmatpush1.bf16.msra.mxu0 0
        %496 = vmatprep.subr.bf16.mxu0 0
        %497 = vmatpush1.bf16.msra.mxu0 0
        %498 = vmatprep.mubr.bf16.mxu0 0
        %499 = vmatmul.mubr.bf16.gmra.mrb[0].mxu0 %v464
        %v500 = vpop.f32.mrb[0].mxu0
        %v501 = vadd.f32 %v448, %v500
        %v502 = vpop.f32.mrb[0].mxu0
        %v503 = vpop.f32.mrb[0].mxu0
        %v504 = vpop.f32.mrb[0].mxu0
        %505 = vdwg.mxu0
        %v506 = vmul.f32 %v501, 0.35355338
        %v507 = vpack.c.bf16 %v506, %v506
        %v508 = vpack.c.bf16 %v501, %v501
        %v509 = vlaneseq
        %v510 = vshrl.u32 %v509, 7
        %v511 = vlaneseq
        %v512 = vand.u32 %v511, 127
        %vm513 = vcmp.gt.s32.totalorder %v512, %v510
        %v514 = vsel %vm513, -1e+30, 0.0
        %516 = vrot.lane.b32.xlu0 %v508, 96
        %v517 = vpop.permute.xlu0 %516
        %vm518 = vcmask 64512
        %v520 = vsel %vm518, %v507, 0
        %v523 = vsel %vm518, %v517, 0
        %525 = vmatprep.subr.bf16.mxu0 0
        %526 = vmatpush1.bf16.xpose.msra.mxu0 %v523
        %527 = vmatprep.subr.bf16.mxu0 0
        %528 = vmatpush1.bf16.xpose.msra.mxu0 0
        %529 = vmatprep.subr.bf16.mxu0 0
        %530 = vmatpush1.bf16.xpose.msra.mxu0 0
        %531 = vmatprep.subr.bf16.mxu0 0
        %532 = vmatpush1.bf16.xpose.msra.mxu0 0
        %533 = vmatprep.subr.bf16.mxu0 0
        %534 = vmatpush1.bf16.xpose.msra.mxu0 0
        %535 = vmatprep.subr.bf16.mxu0 0
        %536 = vmatpush1.bf16.xpose.msra.mxu0 0
        %537 = vmatprep.subr.bf16.mxu0 0
        %538 = vmatpush1.bf16.xpose.msra.mxu0 0
        %539 = vmatprep.subr.bf16.mxu0 0
        %540 = vmatpush1.bf16.xpose.msra.mxu0 0
        %541 = vmatprep.subr.bf16.mxu0 0
        %542 = vmatpush1.bf16.xpose.msra.mxu0 0
        %543 = vmatprep.subr.bf16.mxu0 0
        %544 = vmatpush1.bf16.xpose.msra.mxu0 0
        %545 = vmatprep.subr.bf16.mxu0 0
        %546 = vmatpush1.bf16.xpose.msra.mxu0 0
        %547 = vmatprep.subr.bf16.mxu0 0
        %548 = vmatpush1.bf16.xpose.msra.mxu0 0
        %549 = vmatprep.subr.bf16.mxu0 0
        %550 = vmatpush1.bf16.xpose.msra.mxu0 0
        %551 = vmatprep.subr.bf16.mxu0 0
        %552 = vmatpush1.bf16.xpose.msra.mxu0 0
        %553 = vmatprep.subr.bf16.mxu0 0
        %554 = vmatpush1.bf16.xpose.msra.mxu0 0
        %555 = vmatprep.subr.bf16.mxu0 0
        %556 = vmatpush1.bf16.xpose.msra.mxu0 0
        %557 = vmatprep.mubr.bf16.mxu0 0
        %558 = vmatmul.mubr.bf16.gmra.mrb[0].mxu0 %v520
        %v559 = vpop.f32.mrb[0].mxu0
        %v560 = vadd.f32 %v514, %v559
        %v561 = vpop.f32.mrb[0].mxu0
        %v562 = vpop.f32.mrb[0].mxu0
        %v563 = vpop.f32.mrb[0].mxu0
        %564 = vdwg.mxu0
        %v565 = vsel %vm518, %v560, -inf
        %566 = vmax.xlane.f32.xlu0 %v565
        %v567 = vpop.xlane.xlu0 %566
        %v568 = vsub.f32 %v560, %v567
        %v569 = vmul.f32 %v568, 1.442695
        %v570 = vpow.pop %v569
        %v571 = vsel %vm518, %v570, 0.0
        %572 = vadd.xlane.f32.xlu0 %v571
        %v573 = vpop.xlane.xlu0 %572
        %v574 = vrcp.pop %v573
        %v575 = vmul.f32 %v570, %v574
        %v576 = vpack.c.bf16 %v575, %v575
        %577 = vrot.lane.b32.xlu0 %v508, 64
        %v578 = vpop.permute.xlu0 %577
        %v580 = vsel %vm518, %v576, 0
        %vm582 = vcmask 1043456
        %v584 = vsel %vm582, %v578, 0
        %586 = vmatprep.subr.bf16.mxu0 0
        %587 = vmatpush1.bf16.msra.mxu0 %v584
        %588 = vmatprep.subr.bf16.mxu0 0
        %589 = vmatpush1.bf16.msra.mxu0 0
        %590 = vmatprep.subr.bf16.mxu0 0
        %591 = vmatpush1.bf16.msra.mxu0 0
        %592 = vmatprep.subr.bf16.mxu0 0
        %593 = vmatpush1.bf16.msra.mxu0 0
        %594 = vmatprep.subr.bf16.mxu0 0
        %595 = vmatpush1.bf16.msra.mxu0 0
        %596 = vmatprep.subr.bf16.mxu0 0
        %597 = vmatpush1.bf16.msra.mxu0 0
        %598 = vmatprep.subr.bf16.mxu0 0
        %599 = vmatpush1.bf16.msra.mxu0 0
        %600 = vmatprep.subr.bf16.mxu0 0
        %601 = vmatpush1.bf16.msra.mxu0 0
        %602 = vmatprep.subr.bf16.mxu0 0
        %603 = vmatpush1.bf16.msra.mxu0 0
        %604 = vmatprep.subr.bf16.mxu0 0
        %605 = vmatpush1.bf16.msra.mxu0 0
        %606 = vmatprep.subr.bf16.mxu0 0
        %607 = vmatpush1.bf16.msra.mxu0 0
        %608 = vmatprep.subr.bf16.mxu0 0
        %609 = vmatpush1.bf16.msra.mxu0 0
        %610 = vmatprep.subr.bf16.mxu0 0
        %611 = vmatpush1.bf16.msra.mxu0 0
        %612 = vmatprep.subr.bf16.mxu0 0
        %613 = vmatpush1.bf16.msra.mxu0 0
        %614 = vmatprep.subr.bf16.mxu0 0
        %615 = vmatpush1.bf16.msra.mxu0 0
        %616 = vmatprep.subr.bf16.mxu0 0
        %617 = vmatpush1.bf16.msra.mxu0 0
        %618 = vmatprep.mubr.bf16.mxu0 0
        %619 = vmatmul.mubr.bf16.gmra.mrb[0].mxu0 %v580
        %v620 = vpop.f32.mrb[0].mxu0
        %v621 = vadd.f32 0.0, %v620
        %v622 = vpop.f32.mrb[0].mxu0
        %v623 = vpop.f32.mrb[0].mxu0
        %v624 = vpop.f32.mrb[0].mxu0
        %625 = vdwg.mxu0
        %v626 = vpack.c.bf16 %v621, %v621
        %v627 = vld [vmem:[%s3] sm:$0xf]
        %629 = vrot.lane.b32.xlu0 %v507, 120
        %v630 = vpop.permute.xlu0 %629
        %631 = vrot.lane.b32.xlu0 %v508, 88
        %v632 = vpop.permute.xlu0 %631
        %v634 = vsel %vm518, %v630, 0
        %v637 = vsel %vm518, %v632, 0
        %639 = vmatprep.subr.bf16.mxu0 0
        %640 = vmatpush1.bf16.xpose.msra.mxu0 %v637
        %641 = vmatprep.subr.bf16.mxu0 0
        %642 = vmatpush1.bf16.xpose.msra.mxu0 0
        %643 = vmatprep.subr.bf16.mxu0 0
        %644 = vmatpush1.bf16.xpose.msra.mxu0 0
        %645 = vmatprep.subr.bf16.mxu0 0
        %646 = vmatpush1.bf16.xpose.msra.mxu0 0
        %647 = vmatprep.subr.bf16.mxu0 0
        %648 = vmatpush1.bf16.xpose.msra.mxu0 0
        %649 = vmatprep.subr.bf16.mxu0 0
        %650 = vmatpush1.bf16.xpose.msra.mxu0 0
        %651 = vmatprep.subr.bf16.mxu0 0
        %652 = vmatpush1.bf16.xpose.msra.mxu0 0
        %653 = vmatprep.subr.bf16.mxu0 0
        %654 = vmatpush1.bf16.xpose.msra.mxu0 0
        %655 = vmatprep.subr.bf16.mxu0 0
        %656 = vmatpush1.bf16.xpose.msra.mxu0 0
        %657 = vmatprep.subr.bf16.mxu0 0
        %658 = vmatpush1.bf16.xpose.msra.mxu0 0
        %659 = vmatprep.subr.bf16.mxu0 0
        %660 = vmatpush1.bf16.xpose.msra.mxu0 0
        %661 = vmatprep.subr.bf16.mxu0 0
        %662 = vmatpush1.bf16.xpose.msra.mxu0 0
        %663 = vmatprep.subr.bf16.mxu0 0
        %664 = vmatpush1.bf16.xpose.msra.mxu0 0
        %665 = vmatprep.subr.bf16.mxu0 0
        %666 = vmatpush1.bf16.xpose.msra.mxu0 0
        %667 = vmatprep.subr.bf16.mxu0 0
        %668 = vmatpush1.bf16.xpose.msra.mxu0 0
        %669 = vmatprep.subr.bf16.mxu0 0
        %670 = vmatpush1.bf16.xpose.msra.mxu0 0
        %671 = vmatprep.mubr.bf16.mxu0 0
        %672 = vmatmul.mubr.bf16.gmra.mrb[0].mxu0 %v634
        %v673 = vpop.f32.mrb[0].mxu0
        %v674 = vadd.f32 %v514, %v673
        %v675 = vpop.f32.mrb[0].mxu0
        %v676 = vpop.f32.mrb[0].mxu0
        %v677 = vpop.f32.mrb[0].mxu0
        %678 = vdwg.mxu0
        %v679 = vsel %vm518, %v674, -inf
        %680 = vmax.xlane.f32.xlu0 %v679
        %v681 = vpop.xlane.xlu0 %680
        %v682 = vsub.f32 %v674, %v681
        %v683 = vmul.f32 %v682, 1.442695
        %v684 = vpow.pop %v683
        %v685 = vsel %vm518, %v684, 0.0
        %686 = vadd.xlane.f32.xlu0 %v685
        %v687 = vpop.xlane.xlu0 %686
        %v688 = vrcp.pop %v687
        %v689 = vmul.f32 %v684, %v688
        %v690 = vpack.c.bf16 %v689, %v689
        %691 = vrot.lane.b32.xlu0 %v508, 56
        %v692 = vpop.permute.xlu0 %691
        %v694 = vsel %vm518, %v690, 0
        %v697 = vsel %vm582, %v692, 0
        %699 = vmatprep.subr.bf16.mxu0 0
        %700 = vmatpush1.bf16.msra.mxu0 %v697
        %701 = vmatprep.subr.bf16.mxu0 0
        %702 = vmatpush1.bf16.msra.mxu0 0
        %703 = vmatprep.subr.bf16.mxu0 0
        %704 = vmatpush1.bf16.msra.mxu0 0
        %705 = vmatprep.subr.bf16.mxu0 0
        %706 = vmatpush1.bf16.msra.mxu0 0
        %707 = vmatprep.subr.bf16.mxu0 0
        %708 = vmatpush1.bf16.msra.mxu0 0
        %709 = vmatprep.subr.bf16.mxu0 0
        %710 = vmatpush1.bf16.msra.mxu0 0
        %711 = vmatprep.subr.bf16.mxu0 0
        %712 = vmatpush1.bf16.msra.mxu0 0
        %713 = vmatprep.subr.bf16.mxu0 0
        %714 = vmatpush1.bf16.msra.mxu0 0
        %715 = vmatprep.subr.bf16.mxu0 0
        %716 = vmatpush1.bf16.msra.mxu0 0
        %717 = vmatprep.subr.bf16.mxu0 0
        %718 = vmatpush1.bf16.msra.mxu0 0
        %719 = vmatprep.subr.bf16.mxu0 0
        %720 = vmatpush1.bf16.msra.mxu0 0
        %721 = vmatprep.subr.bf16.mxu0 0
        %722 = vmatpush1.bf16.msra.mxu0 0
        %723 = vmatprep.subr.bf16.mxu0 0
        %724 = vmatpush1.bf16.msra.mxu0 0
        %725 = vmatprep.subr.bf16.mxu0 0
        %726 = vmatpush1.bf16.msra.mxu0 0
        %727 = vmatprep.subr.bf16.mxu0 0
        %728 = vmatpush1.bf16.msra.mxu0 0
        %729 = vmatprep.subr.bf16.mxu0 0
        %730 = vmatpush1.bf16.msra.mxu0 0
        %731 = vmatprep.mubr.bf16.mxu0 0
        %732 = vmatmul.mubr.bf16.gmra.mrb[0].mxu0 %v694
        %v733 = vpop.f32.mrb[0].mxu0
        %v734 = vadd.f32 0.0, %v733
        %v735 = vpop.f32.mrb[0].mxu0
        %v736 = vpop.f32.mrb[0].mxu0
        %v737 = vpop.f32.mrb[0].mxu0
        %738 = vdwg.mxu0
        %v739 = vpack.c.bf16 %v734, %v734
        %v740 = vld [vmem:[%s3 + $0x4] sm:$0xf]
        %v742 = vsel %vm518, %v739, 0
        %v745 = vsel %vm582, %v740, 0
        %747 = vmatprep.subr.bf16.mxu0 0
        %748 = vmatpush1.bf16.msra.mxu0 %v745
        %749 = vmatprep.subr.bf16.mxu0 0
        %750 = vmatpush1.bf16.msra.mxu0 0
        %751 = vmatprep.subr.bf16.mxu0 0
        %752 = vmatpush1.bf16.msra.mxu0 0
        %753 = vmatprep.subr.bf16.mxu0 0
        %754 = vmatpush1.bf16.msra.mxu0 0
        %755 = vmatprep.subr.bf16.mxu0 0
        %756 = vmatpush1.bf16.msra.mxu0 0
        %757 = vmatprep.subr.bf16.mxu0 0
        %758 = vmatpush1.bf16.msra.mxu0 0
        %759 = vmatprep.subr.bf16.mxu0 0
        %760 = vmatpush1.bf16.msra.mxu0 0
        %761 = vmatprep.subr.bf16.mxu0 0
        %762 = vmatpush1.bf16.msra.mxu0 0
        %763 = vmatprep.subr.bf16.mxu0 0
        %764 = vmatpush1.bf16.msra.mxu0 0
        %765 = vmatprep.subr.bf16.mxu0 0
        %766 = vmatpush1.bf16.msra.mxu0 0
        %767 = vmatprep.subr.bf16.mxu0 0
        %768 = vmatpush1.bf16.msra.mxu0 0
        %769 = vmatprep.subr.bf16.mxu0 0
        %770 = vmatpush1.bf16.msra.mxu0 0
        %771 = vmatprep.subr.bf16.mxu0 0
        %772 = vmatpush1.bf16.msra.mxu0 0
        %773 = vmatprep.subr.bf16.mxu0 0
        %774 = vmatpush1.bf16.msra.mxu0 0
        %775 = vmatprep.subr.bf16.mxu0 0
        %776 = vmatpush1.bf16.msra.mxu0 0
        %777 = vmatprep.subr.bf16.mxu0 0
        %778 = vmatpush1.bf16.msra.mxu0 0
        %779 = vmatprep.mubr.bf16.mxu0 0
        %780 = vmatmul.mubr.bf16.gmra.mrb[0].mxu0 %v742
        %v781 = vpop.f32.mrb[0].mxu0
        %v782 = vadd.f32 0.0, %v781
        %v783 = vpop.f32.mrb[0].mxu0
        %v784 = vpop.f32.mrb[0].mxu0
        %v785 = vpop.f32.mrb[0].mxu0
        %786 = vdwg.mxu0
        %v788 = vsel %vm518, %v626, 0
        %v791 = vsel %vm582, %v627, 0
        %793 = vmatprep.subr.bf16.mxu0 0
        %794 = vmatpush1.bf16.msra.mxu0 %v791
        %795 = vmatprep.subr.bf16.mxu0 0
        %796 = vmatpush1.bf16.msra.mxu0 0
        %797 = vmatprep.subr.bf16.mxu0 0
        %798 = vmatpush1.bf16.msra.mxu0 0
        %799 = vmatprep.subr.bf16.mxu0 0
        %800 = vmatpush1.bf16.msra.mxu0 0
        %801 = vmatprep.subr.bf16.mxu0 0
        %802 = vmatpush1.bf16.msra.mxu0 0
        %803 = vmatprep.subr.bf16.mxu0 0
        %804 = vmatpush1.bf16.msra.mxu0 0
        %805 = vmatprep.subr.bf16.mxu0 0
        %806 = vmatpush1.bf16.msra.mxu0 0
        %807 = vmatprep.subr.bf16.mxu0 0
        %808 = vmatpush1.bf16.msra.mxu0 0
        %809 = vmatprep.subr.bf16.mxu0 0
        %810 = vmatpush1.bf16.msra.mxu0 0
        %811 = vmatprep.subr.bf16.mxu0 0
        %812 = vmatpush1.bf16.msra.mxu0 0
        %813 = vmatprep.subr.bf16.mxu0 0
        %814 = vmatpush1.bf16.msra.mxu0 0
        %815 = vmatprep.subr.bf16.mxu0 0
        %816 = vmatpush1.bf16.msra.mxu0 0
        %817 = vmatprep.subr.bf16.mxu0 0
        %818 = vmatpush1.bf16.msra.mxu0 0
        %819 = vmatprep.subr.bf16.mxu0 0
        %820 = vmatpush1.bf16.msra.mxu0 0
        %821 = vmatprep.subr.bf16.mxu0 0
        %822 = vmatpush1.bf16.msra.mxu0 0
        %823 = vmatprep.subr.bf16.mxu0 0
        %824 = vmatpush1.bf16.msra.mxu0 0
        %825 = vmatprep.mubr.bf16.mxu0 0
        %826 = vmatmul.mubr.bf16.gmra.mrb[0].mxu0 %v788
        %v827 = vpop.f32.mrb[0].mxu0
        %v828 = vadd.f32 %v782, %v827
        %v829 = vpop.f32.mrb[0].mxu0
        %v830 = vpop.f32.mrb[0].mxu0
        %v831 = vpop.f32.mrb[0].mxu0
        %832 = vdwg.mxu0
        %833 = vrot.lane.b32.xlu0 %v507, 112
        %v834 = vpop.permute.xlu0 %833
        %835 = vrot.lane.b32.xlu0 %v508, 80
        %v836 = vpop.permute.xlu0 %835
        %v838 = vsel %vm518, %v834, 0
        %v841 = vsel %vm518, %v836, 0
        %843 = vmatprep.subr.bf16.mxu0 0
        %844 = vmatpush1.bf16.xpose.msra.mxu0 %v841
        %845 = vmatprep.subr.bf16.mxu0 0
        %846 = vmatpush1.bf16.xpose.msra.mxu0 0
        %847 = vmatprep.subr.bf16.mxu0 0
        %848 = vmatpush1.bf16.xpose.msra.mxu0 0
        %849 = vmatprep.subr.bf16.mxu0 0
        %850 = vmatpush1.bf16.xpose.msra.mxu0 0
        %851 = vmatprep.subr.bf16.mxu0 0
        %852 = vmatpush1.bf16.xpose.msra.mxu0 0
        %853 = vmatprep.subr.bf16.mxu0 0
        %854 = vmatpush1.bf16.xpose.msra.mxu0 0
        %855 = vmatprep.subr.bf16.mxu0 0
        %856 = vmatpush1.bf16.xpose.msra.mxu0 0
        %857 = vmatprep.subr.bf16.mxu0 0
        %858 = vmatpush1.bf16.xpose.msra.mxu0 0
        %859 = vmatprep.subr.bf16.mxu0 0
        %860 = vmatpush1.bf16.xpose.msra.mxu0 0
        %861 = vmatprep.subr.bf16.mxu0 0
        %862 = vmatpush1.bf16.xpose.msra.mxu0 0
        %863 = vmatprep.subr.bf16.mxu0 0
        %864 = vmatpush1.bf16.xpose.msra.mxu0 0
        %865 = vmatprep.subr.bf16.mxu0 0
        %866 = vmatpush1.bf16.xpose.msra.mxu0 0
        %867 = vmatprep.subr.bf16.mxu0 0
        %868 = vmatpush1.bf16.xpose.msra.mxu0 0
        %869 = vmatprep.subr.bf16.mxu0 0
        %870 = vmatpush1.bf16.xpose.msra.mxu0 0
        %871 = vmatprep.subr.bf16.mxu0 0
        %872 = vmatpush1.bf16.xpose.msra.mxu0 0
        %873 = vmatprep.subr.bf16.mxu0 0
        %874 = vmatpush1.bf16.xpose.msra.mxu0 0
        %875 = vmatprep.mubr.bf16.mxu0 0
        %876 = vmatmul.mubr.bf16.gmra.mrb[0].mxu0 %v838
        %v877 = vpop.f32.mrb[0].mxu0
        %v878 = vadd.f32 %v514, %v877
        %v879 = vpop.f32.mrb[0].mxu0
        %v880 = vpop.f32.mrb[0].mxu0
        %v881 = vpop.f32.mrb[0].mxu0
        %882 = vdwg.mxu0
        %v883 = vsel %vm518, %v878, -inf
        %884 = vmax.xlane.f32.xlu0 %v883
        %v885 = vpop.xlane.xlu0 %884
        %v886 = vsub.f32 %v878, %v885
        %v887 = vmul.f32 %v886, 1.442695
        %v888 = vpow.pop %v887
        %v889 = vsel %vm518, %v888, 0.0
        %890 = vadd.xlane.f32.xlu0 %v889
        %v891 = vpop.xlane.xlu0 %890
        %v892 = vrcp.pop %v891
        %v893 = vmul.f32 %v888, %v892
        %v894 = vpack.c.bf16 %v893, %v893
        %895 = vrot.lane.b32.xlu0 %v508, 48
        %v896 = vpop.permute.xlu0 %895
        %v898 = vsel %vm518, %v894, 0
        %v901 = vsel %vm582, %v896, 0
        %903 = vmatprep.subr.bf16.mxu0 0
        %904 = vmatpush1.bf16.msra.mxu0 %v901
        %905 = vmatprep.subr.bf16.mxu0 0
        %906 = vmatpush1.bf16.msra.mxu0 0
        %907 = vmatprep.subr.bf16.mxu0 0
        %908 = vmatpush1.bf16.msra.mxu0 0
        %909 = vmatprep.subr.bf16.mxu0 0
        %910 = vmatpush1.bf16.msra.mxu0 0
        %911 = vmatprep.subr.bf16.mxu0 0
        %912 = vmatpush1.bf16.msra.mxu0 0
        %913 = vmatprep.subr.bf16.mxu0 0
        %914 = vmatpush1.bf16.msra.mxu0 0
        %915 = vmatprep.subr.bf16.mxu0 0
        %916 = vmatpush1.bf16.msra.mxu0 0
        %917 = vmatprep.subr.bf16.mxu0 0
        %918 = vmatpush1.bf16.msra.mxu0 0
        %919 = vmatprep.subr.bf16.mxu0 0
        %920 = vmatpush1.bf16.msra.mxu0 0
        %921 = vmatprep.subr.bf16.mxu0 0
        %922 = vmatpush1.bf16.msra.mxu0 0
        %923 = vmatprep.subr.bf16.mxu0 0
        %924 = vmatpush1.bf16.msra.mxu0 0
        %925 = vmatprep.subr.bf16.mxu0 0
        %926 = vmatpush1.bf16.msra.mxu0 0
        %927 = vmatprep.subr.bf16.mxu0 0
        %928 = vmatpush1.bf16.msra.mxu0 0
        %929 = vmatprep.subr.bf16.mxu0 0
        %930 = vmatpush1.bf16.msra.mxu0 0
        %931 = vmatprep.subr.bf16.mxu0 0
        %932 = vmatpush1.bf16.msra.mxu0 0
        %933 = vmatprep.subr.bf16.mxu0 0
        %934 = vmatpush1.bf16.msra.mxu0 0
        %935 = vmatprep.mubr.bf16.mxu0 0
        %936 = vmatmul.mubr.bf16.gmra.mrb[0].mxu0 %v898
        %v937 = vpop.f32.mrb[0].mxu0
        %v938 = vadd.f32 0.0, %v937
        %v939 = vpop.f32.mrb[0].mxu0
        %v940 = vpop.f32.mrb[0].mxu0
        %v941 = vpop.f32.mrb[0].mxu0
        %942 = vdwg.mxu0
        %v943 = vpack.c.bf16 %v938, %v938
        %v944 = vld [vmem:[%s3 + $0x8] sm:$0xf]
        %v946 = vsel %vm518, %v943, 0
        %v949 = vsel %vm582, %v944, 0
        %951 = vmatprep.subr.bf16.mxu0 0
        %952 = vmatpush1.bf16.msra.mxu0 %v949
        %953 = vmatprep.subr.bf16.mxu0 0
        %954 = vmatpush1.bf16.msra.mxu0 0
        %955 = vmatprep.subr.bf16.mxu0 0
        %956 = vmatpush1.bf16.msra.mxu0 0
        %957 = vmatprep.subr.bf16.mxu0 0
        %958 = vmatpush1.bf16.msra.mxu0 0
        %959 = vmatprep.subr.bf16.mxu0 0
        %960 = vmatpush1.bf16.msra.mxu0 0
        %961 = vmatprep.subr.bf16.mxu0 0
        %962 = vmatpush1.bf16.msra.mxu0 0
        %963 = vmatprep.subr.bf16.mxu0 0
        %964 = vmatpush1.bf16.msra.mxu0 0
        %965 = vmatprep.subr.bf16.mxu0 0
        %966 = vmatpush1.bf16.msra.mxu0 0
        %967 = vmatprep.subr.bf16.mxu0 0
        %968 = vmatpush1.bf16.msra.mxu0 0
        %969 = vmatprep.subr.bf16.mxu0 0
        %970 = vmatpush1.bf16.msra.mxu0 0
        %971 = vmatprep.subr.bf16.mxu0 0
        %972 = vmatpush1.bf16.msra.mxu0 0
        %973 = vmatprep.subr.bf16.mxu0 0
        %974 = vmatpush1.bf16.msra.mxu0 0
        %975 = vmatprep.subr.bf16.mxu0 0
        %976 = vmatpush1.bf16.msra.mxu0 0
        %977 = vmatprep.subr.bf16.mxu0 0
        %978 = vmatpush1.bf16.msra.mxu0 0
        %979 = vmatprep.subr.bf16.mxu0 0
        %980 = vmatpush1.bf16.msra.mxu0 0
        %981 = vmatprep.subr.bf16.mxu0 0
        %982 = vmatpush1.bf16.msra.mxu0 0
        %983 = vmatprep.mubr.bf16.mxu0 0
        %984 = vmatmul.mubr.bf16.gmra.mrb[0].mxu0 %v946
        %v985 = vpop.f32.mrb[0].mxu0
        %v986 = vadd.f32 0.0, %v985
        %v987 = vpop.f32.mrb[0].mxu0
        %v988 = vpop.f32.mrb[0].mxu0
        %v989 = vpop.f32.mrb[0].mxu0
        %990 = vdwg.mxu0
        %v991 = vadd.f32 %v828, %v986
        %992 = vrot.lane.b32.xlu0 %v507, 104
        %v993 = vpop.permute.xlu0 %992
        %994 = vrot.lane.b32.xlu0 %v508, 72
        %v995 = vpop.permute.xlu0 %994
        %v997 = vsel %vm518, %v993, 0
        %v1000 = vsel %vm518, %v995, 0
        %1002 = vmatprep.subr.bf16.mxu0 0
        %1003 = vmatpush1.bf16.xpose.msra.mxu0 %v1000
        %1004 = vmatprep.subr.bf16.mxu0 0
        %1005 = vmatpush1.bf16.xpose.msra.mxu0 0
        %1006 = vmatprep.subr.bf16.mxu0 0
        %1007 = vmatpush1.bf16.xpose.msra.mxu0 0
        %1008 = vmatprep.subr.bf16.mxu0 0
        %1009 = vmatpush1.bf16.xpose.msra.mxu0 0
        %1010 = vmatprep.subr.bf16.mxu0 0
        %1011 = vmatpush1.bf16.xpose.msra.mxu0 0
        %1012 = vmatprep.subr.bf16.mxu0 0
        %1013 = vmatpush1.bf16.xpose.msra.mxu0 0
        %1014 = vmatprep.subr.bf16.mxu0 0
        %1015 = vmatpush1.bf16.xpose.msra.mxu0 0
        %1016 = vmatprep.subr.bf16.mxu0 0
        %1017 = vmatpush1.bf16.xpose.msra.mxu0 0
        %1018 = vmatprep.subr.bf16.mxu0 0
        %1019 = vmatpush1.bf16.xpose.msra.mxu0 0
        %1020 = vmatprep.subr.bf16.mxu0 0
        %1021 = vmatpush1.bf16.xpose.msra.mxu0 0
        %1022 = vmatprep.subr.bf16.mxu0 0
        %1023 = vmatpush1.bf16.xpose.msra.mxu0 0
        %1024 = vmatprep.subr.bf16.mxu0 0
        %1025 = vmatpush1.bf16.xpose.msra.mxu0 0
        %1026 = vmatprep.subr.bf16.mxu0 0
        %1027 = vmatpush1.bf16.xpose.msra.mxu0 0
        %1028 = vmatprep.subr.bf16.mxu0 0
        %1029 = vmatpush1.bf16.xpose.msra.mxu0 0
        %1030 = vmatprep.subr.bf16.mxu0 0
        %1031 = vmatpush1.bf16.xpose.msra.mxu0 0
        %1032 = vmatprep.subr.bf16.mxu0 0
        %1033 = vmatpush1.bf16.xpose.msra.mxu0 0
        %1034 = vmatprep.mubr.bf16.mxu0 0
        %1035 = vmatmul.mubr.bf16.gmra.mrb[0].mxu0 %v997
        %v1036 = vpop.f32.mrb[0].mxu0
        %v1037 = vadd.f32 %v514, %v1036
        %v1038 = vpop.f32.mrb[0].mxu0
        %v1039 = vpop.f32.mrb[0].mxu0
        %v1040 = vpop.f32.mrb[0].mxu0
        %1041 = vdwg.mxu0
        %v1042 = vsel %vm518, %v1037, -inf
        %1043 = vmax.xlane.f32.xlu0 %v1042
        %v1044 = vpop.xlane.xlu0 %1043
        %v1045 = vsub.f32 %v1037, %v1044
        %v1046 = vmul.f32 %v1045, 1.442695
        %v1047 = vpow.pop %v1046
        %v1048 = vsel %vm518, %v1047, 0.0
        %1049 = vadd.xlane.f32.xlu0 %v1048
        %v1050 = vpop.xlane.xlu0 %1049
        %v1051 = vrcp.pop %v1050
        %v1052 = vmul.f32 %v1047, %v1051
        %v1053 = vpack.c.bf16 %v1052, %v1052
        %1054 = vrot.lane.b32.xlu0 %v508, 40
        %v1055 = vpop.permute.xlu0 %1054
        %v1057 = vsel %vm518, %v1053, 0
        %v1060 = vsel %vm582, %v1055, 0
        %1062 = vmatprep.subr.bf16.mxu0 0
        %1063 = vmatpush1.bf16.msra.mxu0 %v1060
        %1064 = vmatprep.subr.bf16.mxu0 0
        %1065 = vmatpush1.bf16.msra.mxu0 0
        %1066 = vmatprep.subr.bf16.mxu0 0
        %1067 = vmatpush1.bf16.msra.mxu0 0
        %1068 = vmatprep.subr.bf16.mxu0 0
        %1069 = vmatpush1.bf16.msra.mxu0 0
        %1070 = vmatprep.subr.bf16.mxu0 0
        %1071 = vmatpush1.bf16.msra.mxu0 0
        %1072 = vmatprep.subr.bf16.mxu0 0
        %1073 = vmatpush1.bf16.msra.mxu0 0
        %1074 = vmatprep.subr.bf16.mxu0 0
        %1075 = vmatpush1.bf16.msra.mxu0 0
        %1076 = vmatprep.subr.bf16.mxu0 0
        %1077 = vmatpush1.bf16.msra.mxu0 0
        %1078 = vmatprep.subr.bf16.mxu0 0
        %1079 = vmatpush1.bf16.msra.mxu0 0
        %1080 = vmatprep.subr.bf16.mxu0 0
        %1081 = vmatpush1.bf16.msra.mxu0 0
        %1082 = vmatprep.subr.bf16.mxu0 0
        %1083 = vmatpush1.bf16.msra.mxu0 0
        %1084 = vmatprep.subr.bf16.mxu0 0
        %1085 = vmatpush1.bf16.msra.mxu0 0
        %1086 = vmatprep.subr.bf16.mxu0 0
        %1087 = vmatpush1.bf16.msra.mxu0 0
        %1088 = vmatprep.subr.bf16.mxu0 0
        %1089 = vmatpush1.bf16.msra.mxu0 0
        %1090 = vmatprep.subr.bf16.mxu0 0
        %1091 = vmatpush1.bf16.msra.mxu0 0
        %1092 = vmatprep.subr.bf16.mxu0 0
        %1093 = vmatpush1.bf16.msra.mxu0 0
        %1094 = vmatprep.mubr.bf16.mxu0 0
        %1095 = vmatmul.mubr.bf16.gmra.mrb[0].mxu0 %v1057
        %v1096 = vpop.f32.mrb[0].mxu0
        %v1097 = vadd.f32 0.0, %v1096
        %v1098 = vpop.f32.mrb[0].mxu0
        %v1099 = vpop.f32.mrb[0].mxu0
        %v1100 = vpop.f32.mrb[0].mxu0
        %1101 = vdwg.mxu0
        %v1102 = vpack.c.bf16 %v1097, %v1097
        %v1103 = vld [vmem:[%s3 + $0xc] sm:$0xf]
        %v1105 = vsel %vm518, %v1102, 0
        %v1108 = vsel %vm582, %v1103, 0
        %1110 = vmatprep.subr.bf16.mxu0 0
        %1111 = vmatpush1.bf16.msra.mxu0 %v1108
        %1112 = vmatprep.subr.bf16.mxu0 0
        %1113 = vmatpush1.bf16.msra.mxu0 0
        %1114 = vmatprep.subr.bf16.mxu0 0
        %1115 = vmatpush1.bf16.msra.mxu0 0
        %1116 = vmatprep.subr.bf16.mxu0 0
        %1117 = vmatpush1.bf16.msra.mxu0 0
        %1118 = vmatprep.subr.bf16.mxu0 0
        %1119 = vmatpush1.bf16.msra.mxu0 0
        %1120 = vmatprep.subr.bf16.mxu0 0
        %1121 = vmatpush1.bf16.msra.mxu0 0
        %1122 = vmatprep.subr.bf16.mxu0 0
        %1123 = vmatpush1.bf16.msra.mxu0 0
        %1124 = vmatprep.subr.bf16.mxu0 0
        %1125 = vmatpush1.bf16.msra.mxu0 0
        %1126 = vmatprep.subr.bf16.mxu0 0
        %1127 = vmatpush1.bf16.msra.mxu0 0
        %1128 = vmatprep.subr.bf16.mxu0 0
        %1129 = vmatpush1.bf16.msra.mxu0 0
        %1130 = vmatprep.subr.bf16.mxu0 0
        %1131 = vmatpush1.bf16.msra.mxu0 0
        %1132 = vmatprep.subr.bf16.mxu0 0
        %1133 = vmatpush1.bf16.msra.mxu0 0
        %1134 = vmatprep.subr.bf16.mxu0 0
        %1135 = vmatpush1.bf16.msra.mxu0 0
        %1136 = vmatprep.subr.bf16.mxu0 0
        %1137 = vmatpush1.bf16.msra.mxu0 0
        %1138 = vmatprep.subr.bf16.mxu0 0
        %1139 = vmatpush1.bf16.msra.mxu0 0
        %1140 = vmatprep.subr.bf16.mxu0 0
        %1141 = vmatpush1.bf16.msra.mxu0 0
        %1142 = vmatprep.mubr.bf16.mxu0 0
        %1143 = vmatmul.mubr.bf16.gmra.mrb[0].mxu0 %v1105
        %v1144 = vpop.f32.mrb[0].mxu0
        %v1145 = vadd.f32 0.0, %v1144
        %v1146 = vpop.f32.mrb[0].mxu0
        %v1147 = vpop.f32.mrb[0].mxu0
        %v1148 = vpop.f32.mrb[0].mxu0
        %1149 = vdwg.mxu0
        %v1150 = vadd.f32 %v991, %v1145
        %v1151 = vld [vmem:[%s4] sm:$0x1]
        %v1153 = vlaneseq
        %v1154 = vshrl.u32 %v1153, 7
        %v1155 = vsub.s32 0, %v1154
        %v1156 = vrot.slane %v1151, %v1155
        %v1158 = vadd.f32 %v1150, %v1156
        %v1159 = vadd.f32 %v437, %v1158
        %v1160 = vld [vmem:[%s9] sm:$0x1]
        %v1161 = vld [vmem:[%s10] sm:$0x1]
        %v1162 = vsel %vm462, %v1159, 0.0
        %1163 = vadd.xlane.f32.xlu0 %v1162
        %v1164 = vpop.xlane.xlu0 %1163
        %v1165 = vrcp.pop 32.0
        %v1166 = vmul.f32 %v1164, %v1165
        %v1167 = vmul.f32 %v1159, %v1159
        %v1168 = vsel %vm462, %v1167, 0.0
        %1169 = vadd.xlane.f32.xlu0 %v1168
        %v1170 = vpop.xlane.xlu0 %1169
        %v1171 = vmul.f32 %v1170, %v1165
        %v1172 = vmul.f32 %v1166, %v1166
        %v1173 = vsub.f32 %v1171, %v1172
        %v1174 = vsub.f32 %v1159, %v1166
        %v1175 = vadd.f32 %v1173, 1e-05
        %v1176 = vrsqrt.pop %v1175
        %v1177 = vmul.f32 %v1174, %v1176
        %v1179 = vlaneseq
        %v1180 = vshrl.u32 %v1179, 7
        %v1181 = vsub.s32 0, %v1180
        %v1182 = vrot.slane %v1160, %v1181
        %v1184 = vmul.f32 %v1177, %v1182
        %v1186 = vlaneseq
        %v1187 = vshrl.u32 %v1186, 7
        %v1188 = vsub.s32 0, %v1187
        %v1189 = vrot.slane %v1161, %v1188
        %v1191 = vadd.f32 %v1184, %v1189
        %v1192 = vpack.c.bf16 %v1191, %v1191
        %v1193 = vld [vmem:[%s5] sm:$0xff]
        %v1194 = vld [vmem:[%s5 + $0x8] sm:$0xff]
        %v1195 = vld [vmem:[%s5 + $0x10] sm:$0xff]
        %v1196 = vld [vmem:[%s5 + $0x18] sm:$0xff]
        %v1197 = vld [vmem:[%s5 + $0x20] sm:$0xff]
        %v1198 = vld [vmem:[%s5 + $0x28] sm:$0xff]
        %v1199 = vld [vmem:[%s5 + $0x30] sm:$0xff]
        %v1200 = vld [vmem:[%s5 + $0x38] sm:$0xff]
        %v1201 = vld [vmem:[%s5 + $0x40] sm:$0xff]
        %v1202 = vld [vmem:[%s5 + $0x48] sm:$0xff]
        %v1203 = vld [vmem:[%s5 + $0x50] sm:$0xff]
        %v1204 = vld [vmem:[%s5 + $0x58] sm:$0xff]
        %v1205 = vld [vmem:[%s5 + $0x60] sm:$0xff]
        %v1206 = vld [vmem:[%s5 + $0x68] sm:$0xff]
        %v1207 = vld [vmem:[%s5 + $0x70] sm:$0xff]
        %v1208 = vld [vmem:[%s5 + $0x78] sm:$0xff]
        %v1209 = vld [vmem:[%s5 + $0x80] sm:$0xff]
        %v1210 = vld [vmem:[%s5 + $0x88] sm:$0xff]
        %v1211 = vld [vmem:[%s5 + $0x90] sm:$0xff]
        %v1212 = vld [vmem:[%s5 + $0x98] sm:$0xff]
        %v1213 = vld [vmem:[%s5 + $0xa0] sm:$0xff]
        %v1214 = vld [vmem:[%s5 + $0xa8] sm:$0xff]
        %v1215 = vld [vmem:[%s5 + $0xb0] sm:$0xff]
        %v1216 = vld [vmem:[%s5 + $0xb8] sm:$0xff]
        %v1217 = vld [vmem:[%s5 + $0xc0] sm:$0xff]
        %v1218 = vld [vmem:[%s5 + $0xc8] sm:$0xff]
        %v1219 = vld [vmem:[%s5 + $0xd0] sm:$0xff]
        %v1220 = vld [vmem:[%s5 + $0xd8] sm:$0xff]
        %v1221 = vld [vmem:[%s5 + $0xe0] sm:$0xff]
        %v1222 = vld [vmem:[%s5 + $0xe8] sm:$0xff]
        %v1223 = vld [vmem:[%s5 + $0xf0] sm:$0xff]
        %v1224 = vld [vmem:[%s5 + $0xf8] sm:$0xff]
        %v1225 = vld [vmem:[%s6] sm:$0xff]
        %v1226 = vld [vmem:[%s6 + $0x8] sm:$0xff]
        %v1229 = vlaneseq
        %v1230 = vshrl.u32 %v1229, 7
        %v1231 = vsub.s32 0, %v1230
        %v1232 = vrot.slane %v1225, %v1231
        %v1233 = vlaneseq
        %v1234 = vshrl.u32 %v1233, 7
        %v1235 = vsub.s32 1, %v1234
        %v1236 = vrot.slane %v1225, %v1235
        %v1237 = vlaneseq
        %v1238 = vshrl.u32 %v1237, 7
        %v1239 = vsub.s32 2, %v1238
        %v1240 = vrot.slane %v1225, %v1239
        %v1241 = vlaneseq
        %v1242 = vshrl.u32 %v1241, 7
        %v1243 = vsub.s32 3, %v1242
        %v1244 = vrot.slane %v1225, %v1243
        %v1245 = vlaneseq
        %v1246 = vshrl.u32 %v1245, 7
        %v1247 = vsub.s32 4, %v1246
        %v1248 = vrot.slane %v1225, %v1247
        %v1249 = vlaneseq
        %v1250 = vshrl.u32 %v1249, 7
        %v1251 = vsub.s32 5, %v1250
        %v1252 = vrot.slane %v1225, %v1251
        %v1253 = vlaneseq
        %v1254 = vshrl.u32 %v1253, 7
        %v1255 = vsub.s32 6, %v1254
        %v1256 = vrot.slane %v1225, %v1255
        %v1257 = vlaneseq
        %v1258 = vshrl.u32 %v1257, 7
        %v1259 = vsub.s32 7, %v1258
        %v1260 = vrot.slane %v1225, %v1259
        %v1261 = vlaneseq
        %v1262 = vshrl.u32 %v1261, 7
        %v1263 = vsub.s32 0, %v1262
        %v1264 = vrot.slane %v1226, %v1263
        %v1265 = vlaneseq
        %v1266 = vshrl.u32 %v1265, 7
        %v1267 = vsub.s32 1, %v1266
        %v1268 = vrot.slane %v1226, %v1267
        %v1269 = vlaneseq
        %v1270 = vshrl.u32 %v1269, 7
        %v1271 = vsub.s32 2, %v1270
        %v1272 = vrot.slane %v1226, %v1271
        %v1273 = vlaneseq
        %v1274 = vshrl.u32 %v1273, 7
        %v1275 = vsub.s32 3, %v1274
        %v1276 = vrot.slane %v1226, %v1275
        %v1277 = vlaneseq
        %v1278 = vshrl.u32 %v1277, 7
        %v1279 = vsub.s32 4, %v1278
        %v1280 = vrot.slane %v1226, %v1279
        %v1281 = vlaneseq
        %v1282 = vshrl.u32 %v1281, 7
        %v1283 = vsub.s32 5, %v1282
        %v1284 = vrot.slane %v1226, %v1283
        %v1285 = vlaneseq
        %v1286 = vshrl.u32 %v1285, 7
        %v1287 = vsub.s32 6, %v1286
        %v1288 = vrot.slane %v1226, %v1287
        %v1289 = vlaneseq
        %v1290 = vshrl.u32 %v1289, 7
        %v1291 = vsub.s32 7, %v1290
        %v1292 = vrot.slane %v1226, %v1291
        %v1341 = vunpack.c.l.b16 %v1193
        %v1342 = vunpack.c.h.b16 %v1193
        %v1343 = vunpack.c.l.b16 %v1194
        %v1344 = vunpack.c.h.b16 %v1194
        %v1345 = vunpack.c.l.b16 %v1195
        %v1346 = vunpack.c.h.b16 %v1195
        %v1347 = vunpack.c.l.b16 %v1196
        %v1348 = vunpack.c.h.b16 %v1196
        %v1349 = vunpack.c.l.b16 %v1197
        %v1350 = vunpack.c.h.b16 %v1197
        %v1351 = vunpack.c.l.b16 %v1198
        %v1352 = vunpack.c.h.b16 %v1198
        %v1353 = vunpack.c.l.b16 %v1199
        %v1354 = vunpack.c.h.b16 %v1199
        %v1355 = vunpack.c.l.b16 %v1200
        %v1356 = vunpack.c.h.b16 %v1200
        %v1357 = vunpack.c.l.b16 %v1201
        %v1358 = vunpack.c.h.b16 %v1201
        %v1359 = vunpack.c.l.b16 %v1202
        %v1360 = vunpack.c.h.b16 %v1202
        %v1361 = vunpack.c.l.b16 %v1203
        %v1362 = vunpack.c.h.b16 %v1203
        %v1363 = vunpack.c.l.b16 %v1204
        %v1364 = vunpack.c.h.b16 %v1204
        %v1365 = vunpack.c.l.b16 %v1205
        %v1366 = vunpack.c.h.b16 %v1205
        %v1367 = vunpack.c.l.b16 %v1206
        %v1368 = vunpack.c.h.b16 %v1206
        %v1369 = vunpack.c.l.b16 %v1207
        %v1370 = vunpack.c.h.b16 %v1207
        %v1371 = vunpack.c.l.b16 %v1208
        %v1372 = vunpack.c.h.b16 %v1208
        %v1373 = vunpack.c.l.b16 %v1209
        %v1374 = vunpack.c.h.b16 %v1209
        %v1375 = vunpack.c.l.b16 %v1210
        %v1376 = vunpack.c.h.b16 %v1210
        %v1377 = vunpack.c.l.b16 %v1211
        %v1378 = vunpack.c.h.b16 %v1211
        %v1379 = vunpack.c.l.b16 %v1212
        %v1380 = vunpack.c.h.b16 %v1212
        %v1381 = vunpack.c.l.b16 %v1213
        %v1382 = vunpack.c.h.b16 %v1213
        %v1383 = vunpack.c.l.b16 %v1214
        %v1384 = vunpack.c.h.b16 %v1214
        %v1385 = vunpack.c.l.b16 %v1215
        %v1386 = vunpack.c.h.b16 %v1215
        %v1387 = vunpack.c.l.b16 %v1216
        %v1388 = vunpack.c.h.b16 %v1216
        %v1389 = vunpack.c.l.b16 %v1217
        %v1390 = vunpack.c.h.b16 %v1217
        %v1391 = vunpack.c.l.b16 %v1218
        %v1392 = vunpack.c.h.b16 %v1218
        %v1393 = vunpack.c.l.b16 %v1219
        %v1394 = vunpack.c.h.b16 %v1219
        %v1395 = vunpack.c.l.b16 %v1220
        %v1396 = vunpack.c.h.b16 %v1220
        %v1397 = vunpack.c.l.b16 %v1221
        %v1398 = vunpack.c.h.b16 %v1221
        %v1399 = vunpack.c.l.b16 %v1222
        %v1400 = vunpack.c.h.b16 %v1222
        %v1401 = vunpack.c.l.b16 %v1223
        %v1402 = vunpack.c.h.b16 %v1223
        %v1403 = vunpack.c.l.b16 %v1224
        %v1404 = vunpack.c.h.b16 %v1224
        %v1405 = vpack.c.b16 %v1357, %v1341
        %v1406 = vpack.c.b16 %v1358, %v1342
        %v1407 = vpack.c.b16 %v1359, %v1343
        %v1408 = vpack.c.b16 %v1360, %v1344
        %v1409 = vpack.c.b16 %v1361, %v1345
        %v1410 = vpack.c.b16 %v1362, %v1346
        %v1411 = vpack.c.b16 %v1363, %v1347
        %v1412 = vpack.c.b16 %v1364, %v1348
        %v1413 = vpack.c.b16 %v1365, %v1349
        %v1414 = vpack.c.b16 %v1366, %v1350
        %v1415 = vpack.c.b16 %v1367, %v1351
        %v1416 = vpack.c.b16 %v1368, %v1352
        %v1417 = vpack.c.b16 %v1369, %v1353
        %v1418 = vpack.c.b16 %v1370, %v1354
        %v1419 = vpack.c.b16 %v1371, %v1355
        %v1420 = vpack.c.b16 %v1372, %v1356
        %v1421 = vpack.c.b16 %v1389, %v1373
        %v1422 = vpack.c.b16 %v1390, %v1374
        %v1423 = vpack.c.b16 %v1391, %v1375
        %v1424 = vpack.c.b16 %v1392, %v1376
        %v1425 = vpack.c.b16 %v1393, %v1377
        %v1426 = vpack.c.b16 %v1394, %v1378
        %v1427 = vpack.c.b16 %v1395, %v1379
        %v1428 = vpack.c.b16 %v1396, %v1380
        %v1429 = vpack.c.b16 %v1397, %v1381
        %v1430 = vpack.c.b16 %v1398, %v1382
        %v1431 = vpack.c.b16 %v1399, %v1383
        %v1432 = vpack.c.b16 %v1400, %v1384
        %v1433 = vpack.c.b16 %v1401, %v1385
        %v1434 = vpack.c.b16 %v1402, %v1386
        %v1435 = vpack.c.b16 %v1403, %v1387
        %v1436 = vpack.c.b16 %v1404, %v1388
        %v1470 = vsel %vm462, %v1192, 0
        %1472 = vmatprep.subr.bf16.mxu0 %v1406
        %1473 = vmatpush1.bf16.msra.mxu0 %v1405
        %1474 = vmatprep.subr.bf16.mxu0 %v1422
        %1475 = vmatpush1.bf16.msra.mxu0 %v1421
        %1476 = vmatprep.subr.bf16.mxu0 0
        %1477 = vmatpush1.bf16.msra.mxu0 0
        %1478 = vmatprep.subr.bf16.mxu0 0
        %1479 = vmatpush1.bf16.msra.mxu0 0
        %1480 = vmatprep.subr.bf16.mxu0 0
        %1481 = vmatpush1.bf16.msra.mxu0 0
        %1482 = vmatprep.subr.bf16.mxu0 0
        %1483 = vmatpush1.bf16.msra.mxu0 0
        %1484 = vmatprep.subr.bf16.mxu0 0
        %1485 = vmatpush1.bf16.msra.mxu0 0
        %1486 = vmatprep.subr.bf16.mxu0 0
        %1487 = vmatpush1.bf16.msra.mxu0 0
        %1488 = vmatprep.subr.bf16.mxu0 0
        %1489 = vmatpush1.bf16.msra.mxu0 0
        %1490 = vmatprep.subr.bf16.mxu0 0
        %1491 = vmatpush1.bf16.msra.mxu0 0
        %1492 = vmatprep.subr.bf16.mxu0 0
        %1493 = vmatpush1.bf16.msra.mxu0 0
        %1494 = vmatprep.subr.bf16.mxu0 0
        %1495 = vmatpush1.bf16.msra.mxu0 0
        %1496 = vmatprep.subr.bf16.mxu0 0
        %1497 = vmatpush1.bf16.msra.mxu0 0
        %1498 = vmatprep.subr.bf16.mxu0 0
        %1499 = vmatpush1.bf16.msra.mxu0 0
        %1500 = vmatprep.subr.bf16.mxu0 0
        %1501 = vmatpush1.bf16.msra.mxu0 0
        %1502 = vmatprep.subr.bf16.mxu0 0
        %1503 = vmatpush1.bf16.msra.mxu0 0
        %1504 = vmatprep.mubr.bf16.mxu0 0
        %1505 = vmatmul.mubr.bf16.gmra.mrb[0].mxu0 %v1470
        %v1506 = vpop.f32.mrb[0].mxu0
        %v1507 = vadd.f32 %v1232, %v1506
        %v1508 = vpop.f32.mrb[0].mxu0
        %v1509 = vadd.f32 %v1236, %v1508
        %v1510 = vpop.f32.mrb[0].mxu0
        %v1511 = vpop.f32.mrb[0].mxu0
        %1512 = vdwg.mxu0
        %1513 = vmatprep.subr.bf16.mxu0 %v1408
        %1514 = vmatpush1.bf16.msra.mxu0 %v1407
        %1515 = vmatprep.subr.bf16.mxu0 %v1424
        %1516 = vmatpush1.bf16.msra.mxu0 %v1423
        %1517 = vmatprep.subr.bf16.mxu0 0
        %1518 = vmatpush1.bf16.msra.mxu0 0
        %1519 = vmatprep.subr.bf16.mxu0 0
        %1520 = vmatpush1.bf16.msra.mxu0 0
        %1521 = vmatprep.subr.bf16.mxu0 0
        %1522 = vmatpush1.bf16.msra.mxu0 0
        %1523 = vmatprep.subr.bf16.mxu0 0
        %1524 = vmatpush1.bf16.msra.mxu0 0
        %1525 = vmatprep.subr.bf16.mxu0 0
        %1526 = vmatpush1.bf16.msra.mxu0 0
        %1527 = vmatprep.subr.bf16.mxu0 0
        %1528 = vmatpush1.bf16.msra.mxu0 0
        %1529 = vmatprep.subr.bf16.mxu0 0
        %1530 = vmatpush1.bf16.msra.mxu0 0
        %1531 = vmatprep.subr.bf16.mxu0 0
        %1532 = vmatpush1.bf16.msra.mxu0 0
        %1533 = vmatprep.subr.bf16.mxu0 0
        %1534 = vmatpush1.bf16.msra.mxu0 0
        %1535 = vmatprep.subr.bf16.mxu0 0
        %1536 = vmatpush1.bf16.msra.mxu0 0
        %1537 = vmatprep.subr.bf16.mxu0 0
        %1538 = vmatpush1.bf16.msra.mxu0 0
        %1539 = vmatprep.subr.bf16.mxu0 0
        %1540 = vmatpush1.bf16.msra.mxu0 0
        %1541 = vmatprep.subr.bf16.mxu0 0
        %1542 = vmatpush1.bf16.msra.mxu0 0
        %1543 = vmatprep.subr.bf16.mxu0 0
        %1544 = vmatpush1.bf16.msra.mxu0 0
        %1545 = vmatprep.mubr.bf16.mxu0 0
        %1546 = vmatmul.mubr.bf16.gmra.mrb[0].mxu0 %v1470
        %v1547 = vpop.f32.mrb[0].mxu0
        %v1548 = vadd.f32 %v1240, %v1547
        %v1549 = vpop.f32.mrb[0].mxu0
        %v1550 = vadd.f32 %v1244, %v1549
        %v1551 = vpop.f32.mrb[0].mxu0
        %v1552 = vpop.f32.mrb[0].mxu0
        %1553 = vdwg.mxu0
        %1554 = vmatprep.subr.bf16.mxu0 %v1410
        %1555 = vmatpush1.bf16.msra.mxu0 %v1409
        %1556 = vmatprep.subr.bf16.mxu0 %v1426
        %1557 = vmatpush1.bf16.msra.mxu0 %v1425
        %1558 = vmatprep.subr.bf16.mxu0 0
        %1559 = vmatpush1.bf16.msra.mxu0 0
        %1560 = vmatprep.subr.bf16.mxu0 0
        %1561 = vmatpush1.bf16.msra.mxu0 0
        %1562 = vmatprep.subr.bf16.mxu0 0
        %1563 = vmatpush1.bf16.msra.mxu0 0
        %1564 = vmatprep.subr.bf16.mxu0 0
        %1565 = vmatpush1.bf16.msra.mxu0 0
        %1566 = vmatprep.subr.bf16.mxu0 0
        %1567 = vmatpush1.bf16.msra.mxu0 0
        %1568 = vmatprep.subr.bf16.mxu0 0
        %1569 = vmatpush1.bf16.msra.mxu0 0
        %1570 = vmatprep.subr.bf16.mxu0 0
        %1571 = vmatpush1.bf16.msra.mxu0 0
        %1572 = vmatprep.subr.bf16.mxu0 0
        %1573 = vmatpush1.bf16.msra.mxu0 0
        %1574 = vmatprep.subr.bf16.mxu0 0
        %1575 = vmatpush1.bf16.msra.mxu0 0
        %1576 = vmatprep.subr.bf16.mxu0 0
        %1577 = vmatpush1.bf16.msra.mxu0 0
        %1578 = vmatprep.subr.bf16.mxu0 0
        %1579 = vmatpush1.bf16.msra.mxu0 0
        %1580 = vmatprep.subr.bf16.mxu0 0
        %1581 = vmatpush1.bf16.msra.mxu0 0
        %1582 = vmatprep.subr.bf16.mxu0 0
        %1583 = vmatpush1.bf16.msra.mxu0 0
        %1584 = vmatprep.subr.bf16.mxu0 0
        %1585 = vmatpush1.bf16.msra.mxu0 0
        %1586 = vmatprep.mubr.bf16.mxu0 0
        %1587 = vmatmul.mubr.bf16.gmra.mrb[0].mxu0 %v1470
        %v1588 = vpop.f32.mrb[0].mxu0
        %v1589 = vadd.f32 %v1248, %v1588
        %v1590 = vpop.f32.mrb[0].mxu0
        %v1591 = vadd.f32 %v1252, %v1590
        %v1592 = vpop.f32.mrb[0].mxu0
        %v1593 = vpop.f32.mrb[0].mxu0
        %1594 = vdwg.mxu0
        %1595 = vmatprep.subr.bf16.mxu0 %v1412
        %1596 = vmatpush1.bf16.msra.mxu0 %v1411
        %1597 = vmatprep.subr.bf16.mxu0 %v1428
        %1598 = vmatpush1.bf16.msra.mxu0 %v1427
        %1599 = vmatprep.subr.bf16.mxu0 0
        %1600 = vmatpush1.bf16.msra.mxu0 0
        %1601 = vmatprep.subr.bf16.mxu0 0
        %1602 = vmatpush1.bf16.msra.mxu0 0
        %1603 = vmatprep.subr.bf16.mxu0 0
        %1604 = vmatpush1.bf16.msra.mxu0 0
        %1605 = vmatprep.subr.bf16.mxu0 0
        %1606 = vmatpush1.bf16.msra.mxu0 0
        %1607 = vmatprep.subr.bf16.mxu0 0
        %1608 = vmatpush1.bf16.msra.mxu0 0
        %1609 = vmatprep.subr.bf16.mxu0 0
        %1610 = vmatpush1.bf16.msra.mxu0 0
        %1611 = vmatprep.subr.bf16.mxu0 0
        %1612 = vmatpush1.bf16.msra.mxu0 0
        %1613 = vmatprep.subr.bf16.mxu0 0
        %1614 = vmatpush1.bf16.msra.mxu0 0
        %1615 = vmatprep.subr.bf16.mxu0 0
        %1616 = vmatpush1.bf16.msra.mxu0 0
        %1617 = vmatprep.subr.bf16.mxu0 0
        %1618 = vmatpush1.bf16.msra.mxu0 0
        %1619 = vmatprep.subr.bf16.mxu0 0
        %1620 = vmatpush1.bf16.msra.mxu0 0
        %1621 = vmatprep.subr.bf16.mxu0 0
        %1622 = vmatpush1.bf16.msra.mxu0 0
        %1623 = vmatprep.subr.bf16.mxu0 0
        %1624 = vmatpush1.bf16.msra.mxu0 0
        %1625 = vmatprep.subr.bf16.mxu0 0
        %1626 = vmatpush1.bf16.msra.mxu0 0
        %1627 = vmatprep.mubr.bf16.mxu0 0
        %1628 = vmatmul.mubr.bf16.gmra.mrb[0].mxu0 %v1470
        %v1629 = vpop.f32.mrb[0].mxu0
        %v1630 = vadd.f32 %v1256, %v1629
        %v1631 = vpop.f32.mrb[0].mxu0
        %v1632 = vadd.f32 %v1260, %v1631
        %v1633 = vpop.f32.mrb[0].mxu0
        %v1634 = vpop.f32.mrb[0].mxu0
        %1635 = vdwg.mxu0
        %1636 = vmatprep.subr.bf16.mxu0 %v1414
        %1637 = vmatpush1.bf16.msra.mxu0 %v1413
        %1638 = vmatprep.subr.bf16.mxu0 %v1430
        %1639 = vmatpush1.bf16.msra.mxu0 %v1429
        %1640 = vmatprep.subr.bf16.mxu0 0
        %1641 = vmatpush1.bf16.msra.mxu0 0
        %1642 = vmatprep.subr.bf16.mxu0 0
        %1643 = vmatpush1.bf16.msra.mxu0 0
        %1644 = vmatprep.subr.bf16.mxu0 0
        %1645 = vmatpush1.bf16.msra.mxu0 0
        %1646 = vmatprep.subr.bf16.mxu0 0
        %1647 = vmatpush1.bf16.msra.mxu0 0
        %1648 = vmatprep.subr.bf16.mxu0 0
        %1649 = vmatpush1.bf16.msra.mxu0 0
        %1650 = vmatprep.subr.bf16.mxu0 0
        %1651 = vmatpush1.bf16.msra.mxu0 0
        %1652 = vmatprep.subr.bf16.mxu0 0
        %1653 = vmatpush1.bf16.msra.mxu0 0
        %1654 = vmatprep.subr.bf16.mxu0 0
        %1655 = vmatpush1.bf16.msra.mxu0 0
        %1656 = vmatprep.subr.bf16.mxu0 0
        %1657 = vmatpush1.bf16.msra.mxu0 0
        %1658 = vmatprep.subr.bf16.mxu0 0
        %1659 = vmatpush1.bf16.msra.mxu0 0
        %1660 = vmatprep.subr.bf16.mxu0 0
        %1661 = vmatpush1.bf16.msra.mxu0 0
        %1662 = vmatprep.subr.bf16.mxu0 0
        %1663 = vmatpush1.bf16.msra.mxu0 0
        %1664 = vmatprep.subr.bf16.mxu0 0
        %1665 = vmatpush1.bf16.msra.mxu0 0
        %1666 = vmatprep.subr.bf16.mxu0 0
        %1667 = vmatpush1.bf16.msra.mxu0 0
        %1668 = vmatprep.mubr.bf16.mxu0 0
        %1669 = vmatmul.mubr.bf16.gmra.mrb[0].mxu0 %v1470
        %v1670 = vpop.f32.mrb[0].mxu0
        %v1671 = vadd.f32 %v1264, %v1670
        %v1672 = vpop.f32.mrb[0].mxu0
        %v1673 = vadd.f32 %v1268, %v1672
        %v1674 = vpop.f32.mrb[0].mxu0
        %v1675 = vpop.f32.mrb[0].mxu0
        %1676 = vdwg.mxu0
        %1677 = vmatprep.subr.bf16.mxu0 %v1416
        %1678 = vmatpush1.bf16.msra.mxu0 %v1415
        %1679 = vmatprep.subr.bf16.mxu0 %v1432
        %1680 = vmatpush1.bf16.msra.mxu0 %v1431
        %1681 = vmatprep.subr.bf16.mxu0 0
        %1682 = vmatpush1.bf16.msra.mxu0 0
        %1683 = vmatprep.subr.bf16.mxu0 0
        %1684 = vmatpush1.bf16.msra.mxu0 0
        %1685 = vmatprep.subr.bf16.mxu0 0
        %1686 = vmatpush1.bf16.msra.mxu0 0
        %1687 = vmatprep.subr.bf16.mxu0 0
        %1688 = vmatpush1.bf16.msra.mxu0 0
        %1689 = vmatprep.subr.bf16.mxu0 0
        %1690 = vmatpush1.bf16.msra.mxu0 0
        %1691 = vmatprep.subr.bf16.mxu0 0
        %1692 = vmatpush1.bf16.msra.mxu0 0
        %1693 = vmatprep.subr.bf16.mxu0 0
        %1694 = vmatpush1.bf16.msra.mxu0 0
        %1695 = vmatprep.subr.bf16.mxu0 0
        %1696 = vmatpush1.bf16.msra.mxu0 0
        %1697 = vmatprep.subr.bf16.mxu0 0
        %1698 = vmatpush1.bf16.msra.mxu0 0
        %1699 = vmatprep.subr.bf16.mxu0 0
        %1700 = vmatpush1.bf16.msra.mxu0 0
        %1701 = vmatprep.subr.bf16.mxu0 0
        %1702 = vmatpush1.bf16.msra.mxu0 0
        %1703 = vmatprep.subr.bf16.mxu0 0
        %1704 = vmatpush1.bf16.msra.mxu0 0
        %1705 = vmatprep.subr.bf16.mxu0 0
        %1706 = vmatpush1.bf16.msra.mxu0 0
        %1707 = vmatprep.subr.bf16.mxu0 0
        %1708 = vmatpush1.bf16.msra.mxu0 0
        %1709 = vmatprep.mubr.bf16.mxu0 0
        %1710 = vmatmul.mubr.bf16.gmra.mrb[0].mxu0 %v1470
        %v1711 = vpop.f32.mrb[0].mxu0
        %v1712 = vadd.f32 %v1272, %v1711
        %v1713 = vpop.f32.mrb[0].mxu0
        %v1714 = vadd.f32 %v1276, %v1713
        %v1715 = vpop.f32.mrb[0].mxu0
        %v1716 = vpop.f32.mrb[0].mxu0
        %1717 = vdwg.mxu0
        %1718 = vmatprep.subr.bf16.mxu0 %v1418
        %1719 = vmatpush1.bf16.msra.mxu0 %v1417
        %1720 = vmatprep.subr.bf16.mxu0 %v1434
        %1721 = vmatpush1.bf16.msra.mxu0 %v1433
        %1722 = vmatprep.subr.bf16.mxu0 0
        %1723 = vmatpush1.bf16.msra.mxu0 0
        %1724 = vmatprep.subr.bf16.mxu0 0
        %1725 = vmatpush1.bf16.msra.mxu0 0
        %1726 = vmatprep.subr.bf16.mxu0 0
        %1727 = vmatpush1.bf16.msra.mxu0 0
        %1728 = vmatprep.subr.bf16.mxu0 0
        %1729 = vmatpush1.bf16.msra.mxu0 0
        %1730 = vmatprep.subr.bf16.mxu0 0
        %1731 = vmatpush1.bf16.msra.mxu0 0
        %1732 = vmatprep.subr.bf16.mxu0 0
        %1733 = vmatpush1.bf16.msra.mxu0 0
        %1734 = vmatprep.subr.bf16.mxu0 0
        %1735 = vmatpush1.bf16.msra.mxu0 0
        %1736 = vmatprep.subr.bf16.mxu0 0
        %1737 = vmatpush1.bf16.msra.mxu0 0
        %1738 = vmatprep.subr.bf16.mxu0 0
        %1739 = vmatpush1.bf16.msra.mxu0 0
        %1740 = vmatprep.subr.bf16.mxu0 0
        %1741 = vmatpush1.bf16.msra.mxu0 0
        %1742 = vmatprep.subr.bf16.mxu0 0
        %1743 = vmatpush1.bf16.msra.mxu0 0
        %1744 = vmatprep.subr.bf16.mxu0 0
        %1745 = vmatpush1.bf16.msra.mxu0 0
        %1746 = vmatprep.subr.bf16.mxu0 0
        %1747 = vmatpush1.bf16.msra.mxu0 0
        %1748 = vmatprep.subr.bf16.mxu0 0
        %1749 = vmatpush1.bf16.msra.mxu0 0
        %1750 = vmatprep.mubr.bf16.mxu0 0
        %1751 = vmatmul.mubr.bf16.gmra.mrb[0].mxu0 %v1470
        %v1752 = vpop.f32.mrb[0].mxu0
        %v1753 = vadd.f32 %v1280, %v1752
        %v1754 = vpop.f32.mrb[0].mxu0
        %v1755 = vadd.f32 %v1284, %v1754
        %v1756 = vpop.f32.mrb[0].mxu0
        %v1757 = vpop.f32.mrb[0].mxu0
        %1758 = vdwg.mxu0
        %1759 = vmatprep.subr.bf16.mxu0 %v1420
        %1760 = vmatpush1.bf16.msra.mxu0 %v1419
        %1761 = vmatprep.subr.bf16.mxu0 %v1436
        %1762 = vmatpush1.bf16.msra.mxu0 %v1435
        %1763 = vmatprep.subr.bf16.mxu0 0
        %1764 = vmatpush1.bf16.msra.mxu0 0
        %1765 = vmatprep.subr.bf16.mxu0 0
        %1766 = vmatpush1.bf16.msra.mxu0 0
        %1767 = vmatprep.subr.bf16.mxu0 0
        %1768 = vmatpush1.bf16.msra.mxu0 0
        %1769 = vmatprep.subr.bf16.mxu0 0
        %1770 = vmatpush1.bf16.msra.mxu0 0
        %1771 = vmatprep.subr.bf16.mxu0 0
        %1772 = vmatpush1.bf16.msra.mxu0 0
        %1773 = vmatprep.subr.bf16.mxu0 0
        %1774 = vmatpush1.bf16.msra.mxu0 0
        %1775 = vmatprep.subr.bf16.mxu0 0
        %1776 = vmatpush1.bf16.msra.mxu0 0
        %1777 = vmatprep.subr.bf16.mxu0 0
        %1778 = vmatpush1.bf16.msra.mxu0 0
        %1779 = vmatprep.subr.bf16.mxu0 0
        %1780 = vmatpush1.bf16.msra.mxu0 0
        %1781 = vmatprep.subr.bf16.mxu0 0
        %1782 = vmatpush1.bf16.msra.mxu0 0
        %1783 = vmatprep.subr.bf16.mxu0 0
        %1784 = vmatpush1.bf16.msra.mxu0 0
        %1785 = vmatprep.subr.bf16.mxu0 0
        %1786 = vmatpush1.bf16.msra.mxu0 0
        %1787 = vmatprep.subr.bf16.mxu0 0
        %1788 = vmatpush1.bf16.msra.mxu0 0
        %1789 = vmatprep.subr.bf16.mxu0 0
        %1790 = vmatpush1.bf16.msra.mxu0 0
        %1791 = vmatprep.mubr.bf16.mxu0 0
        %1792 = vmatmul.mubr.bf16.gmra.mrb[0].mxu0 %v1470
        %v1793 = vpop.f32.mrb[0].mxu0
        %v1794 = vadd.f32 %v1288, %v1793
        %v1795 = vpop.f32.mrb[0].mxu0
        %v1796 = vadd.f32 %v1292, %v1795
        %v1797 = vpop.f32.mrb[0].mxu0
        %v1798 = vpop.f32.mrb[0].mxu0
        %1799 = vdwg.mxu0
        %v1800 = vmax.f32 %v1507, 0.0
        %v1801 = vmax.f32 %v1509, 0.0
        %v1802 = vmax.f32 %v1548, 0.0
        %v1803 = vmax.f32 %v1550, 0.0
        %v1804 = vmax.f32 %v1589, 0.0
        %v1805 = vmax.f32 %v1591, 0.0
        %v1806 = vmax.f32 %v1630, 0.0
        %v1807 = vmax.f32 %v1632, 0.0
        %v1808 = vmax.f32 %v1671, 0.0
        %v1809 = vmax.f32 %v1673, 0.0
        %v1810 = vmax.f32 %v1712, 0.0
        %v1811 = vmax.f32 %v1714, 0.0
        %v1812 = vmax.f32 %v1753, 0.0
        %v1813 = vmax.f32 %v1755, 0.0
        %v1814 = vmax.f32 %v1794, 0.0
        %v1815 = vmax.f32 %v1796, 0.0
        %v1816 = vpack.c.bf16 %v1800, %v1800
        %v1817 = vpack.c.bf16 %v1801, %v1801
        %v1818 = vpack.c.bf16 %v1802, %v1802
        %v1819 = vpack.c.bf16 %v1803, %v1803
        %v1820 = vpack.c.bf16 %v1804, %v1804
        %v1821 = vpack.c.bf16 %v1805, %v1805
        %v1822 = vpack.c.bf16 %v1806, %v1806
        %v1823 = vpack.c.bf16 %v1807, %v1807
        %v1824 = vpack.c.bf16 %v1808, %v1808
        %v1825 = vpack.c.bf16 %v1809, %v1809
        %v1826 = vpack.c.bf16 %v1810, %v1810
        %v1827 = vpack.c.bf16 %v1811, %v1811
        %v1828 = vpack.c.bf16 %v1812, %v1812
        %v1829 = vpack.c.bf16 %v1813, %v1813
        %v1830 = vpack.c.bf16 %v1814, %v1814
        %v1831 = vpack.c.bf16 %v1815, %v1815
        %v1832 = vld [vmem:[%s7] sm:$0xf]
        %v1833 = vld [vmem:[%s7 + $0x4] sm:$0xf]
        %v1834 = vld [vmem:[%s7 + $0x8] sm:$0xf]
        %v1835 = vld [vmem:[%s7 + $0xc] sm:$0xf]
        %v1836 = vld [vmem:[%s7 + $0x10] sm:$0xf]
        %v1837 = vld [vmem:[%s7 + $0x14] sm:$0xf]
        %v1838 = vld [vmem:[%s7 + $0x18] sm:$0xf]
        %v1839 = vld [vmem:[%s7 + $0x1c] sm:$0xf]
        %v1840 = vld [vmem:[%s7 + $0x20] sm:$0xf]
        %v1841 = vld [vmem:[%s7 + $0x24] sm:$0xf]
        %v1842 = vld [vmem:[%s7 + $0x28] sm:$0xf]
        %v1843 = vld [vmem:[%s7 + $0x2c] sm:$0xf]
        %v1844 = vld [vmem:[%s7 + $0x30] sm:$0xf]
        %v1845 = vld [vmem:[%s7 + $0x34] sm:$0xf]
        %v1846 = vld [vmem:[%s7 + $0x38] sm:$0xf]
        %v1847 = vld [vmem:[%s7 + $0x3c] sm:$0xf]
        %v1848 = vld [vmem:[%s7 + $0x40] sm:$0xf]
        %v1849 = vld [vmem:[%s7 + $0x44] sm:$0xf]
        %v1850 = vld [vmem:[%s7 + $0x48] sm:$0xf]
        %v1851 = vld [vmem:[%s7 + $0x4c] sm:$0xf]
        %v1852 = vld [vmem:[%s7 + $0x50] sm:$0xf]
        %v1853 = vld [vmem:[%s7 + $0x54] sm:$0xf]
        %v1854 = vld [vmem:[%s7 + $0x58] sm:$0xf]
        %v1855 = vld [vmem:[%s7 + $0x5c] sm:$0xf]
        %v1856 = vld [vmem:[%s7 + $0x60] sm:$0xf]
        %v1857 = vld [vmem:[%s7 + $0x64] sm:$0xf]
        %v1858 = vld [vmem:[%s7 + $0x68] sm:$0xf]
        %v1859 = vld [vmem:[%s7 + $0x6c] sm:$0xf]
        %v1860 = vld [vmem:[%s7 + $0x70] sm:$0xf]
        %v1861 = vld [vmem:[%s7 + $0x74] sm:$0xf]
        %v1862 = vld [vmem:[%s7 + $0x78] sm:$0xf]
        %v1863 = vld [vmem:[%s7 + $0x7c] sm:$0xf]
        %v1864 = vld [vmem:[%s7 + $0x80] sm:$0xf]
        %v1865 = vld [vmem:[%s7 + $0x84] sm:$0xf]
        %v1866 = vld [vmem:[%s7 + $0x88] sm:$0xf]
        %v1867 = vld [vmem:[%s7 + $0x8c] sm:$0xf]
        %v1868 = vld [vmem:[%s7 + $0x90] sm:$0xf]
        %v1869 = vld [vmem:[%s7 + $0x94] sm:$0xf]
        %v1870 = vld [vmem:[%s7 + $0x98] sm:$0xf]
        %v1871 = vld [vmem:[%s7 + $0x9c] sm:$0xf]
        %v1872 = vld [vmem:[%s7 + $0xa0] sm:$0xf]
        %v1873 = vld [vmem:[%s7 + $0xa4] sm:$0xf]
        %v1874 = vld [vmem:[%s7 + $0xa8] sm:$0xf]
        %v1875 = vld [vmem:[%s7 + $0xac] sm:$0xf]
        %v1876 = vld [vmem:[%s7 + $0xb0] sm:$0xf]
        %v1877 = vld [vmem:[%s7 + $0xb4] sm:$0xf]
        %v1878 = vld [vmem:[%s7 + $0xb8] sm:$0xf]
        %v1879 = vld [vmem:[%s7 + $0xbc] sm:$0xf]
        %v1880 = vld [vmem:[%s7 + $0xc0] sm:$0xf]
        %v1881 = vld [vmem:[%s7 + $0xc4] sm:$0xf]
        %v1882 = vld [vmem:[%s7 + $0xc8] sm:$0xf]
        %v1883 = vld [vmem:[%s7 + $0xcc] sm:$0xf]
        %v1884 = vld [vmem:[%s7 + $0xd0] sm:$0xf]
        %v1885 = vld [vmem:[%s7 + $0xd4] sm:$0xf]
        %v1886 = vld [vmem:[%s7 + $0xd8] sm:$0xf]
        %v1887 = vld [vmem:[%s7 + $0xdc] sm:$0xf]
        %v1888 = vld [vmem:[%s7 + $0xe0] sm:$0xf]
        %v1889 = vld [vmem:[%s7 + $0xe4] sm:$0xf]
        %v1890 = vld [vmem:[%s7 + $0xe8] sm:$0xf]
        %v1891 = vld [vmem:[%s7 + $0xec] sm:$0xf]
        %v1892 = vld [vmem:[%s7 + $0xf0] sm:$0xf]
        %v1893 = vld [vmem:[%s7 + $0xf4] sm:$0xf]
        %v1894 = vld [vmem:[%s7 + $0xf8] sm:$0xf]
        %v1895 = vld [vmem:[%s7 + $0xfc] sm:$0xf]
        %v1896 = vld [vmem:[%s7 + $0x100] sm:$0xf]
        %v1897 = vld [vmem:[%s7 + $0x104] sm:$0xf]
        %v1898 = vld [vmem:[%s7 + $0x108] sm:$0xf]
        %v1899 = vld [vmem:[%s7 + $0x10c] sm:$0xf]
        %v1900 = vld [vmem:[%s7 + $0x110] sm:$0xf]
        %v1901 = vld [vmem:[%s7 + $0x114] sm:$0xf]
        %v1902 = vld [vmem:[%s7 + $0x118] sm:$0xf]
        %v1903 = vld [vmem:[%s7 + $0x11c] sm:$0xf]
        %v1904 = vld [vmem:[%s7 + $0x120] sm:$0xf]
        %v1905 = vld [vmem:[%s7 + $0x124] sm:$0xf]
        %v1906 = vld [vmem:[%s7 + $0x128] sm:$0xf]
        %v1907 = vld [vmem:[%s7 + $0x12c] sm:$0xf]
        %v1908 = vld [vmem:[%s7 + $0x130] sm:$0xf]
        %v1909 = vld [vmem:[%s7 + $0x134] sm:$0xf]
        %v1910 = vld [vmem:[%s7 + $0x138] sm:$0xf]
        %v1911 = vld [vmem:[%s7 + $0x13c] sm:$0xf]
        %v1912 = vld [vmem:[%s7 + $0x140] sm:$0xf]
        %v1913 = vld [vmem:[%s7 + $0x144] sm:$0xf]
        %v1914 = vld [vmem:[%s7 + $0x148] sm:$0xf]
        %v1915 = vld [vmem:[%s7 + $0x14c] sm:$0xf]
        %v1916 = vld [vmem:[%s7 + $0x150] sm:$0xf]
        %v1917 = vld [vmem:[%s7 + $0x154] sm:$0xf]
        %v1918 = vld [vmem:[%s7 + $0x158] sm:$0xf]
        %v1919 = vld [vmem:[%s7 + $0x15c] sm:$0xf]
        %v1920 = vld [vmem:[%s7 + $0x160] sm:$0xf]
        %v1921 = vld [vmem:[%s7 + $0x164] sm:$0xf]
        %v1922 = vld [vmem:[%s7 + $0x168] sm:$0xf]
        %v1923 = vld [vmem:[%s7 + $0x16c] sm:$0xf]
        %v1924 = vld [vmem:[%s7 + $0x170] sm:$0xf]
        %v1925 = vld [vmem:[%s7 + $0x174] sm:$0xf]
        %v1926 = vld [vmem:[%s7 + $0x178] sm:$0xf]
        %v1927 = vld [vmem:[%s7 + $0x17c] sm:$0xf]
        %v1928 = vld [vmem:[%s7 + $0x180] sm:$0xf]
        %v1929 = vld [vmem:[%s7 + $0x184] sm:$0xf]
        %v1930 = vld [vmem:[%s7 + $0x188] sm:$0xf]
        %v1931 = vld [vmem:[%s7 + $0x18c] sm:$0xf]
        %v1932 = vld [vmem:[%s7 + $0x190] sm:$0xf]
        %v1933 = vld [vmem:[%s7 + $0x194] sm:$0xf]
        %v1934 = vld [vmem:[%s7 + $0x198] sm:$0xf]
        %v1935 = vld [vmem:[%s7 + $0x19c] sm:$0xf]
        %v1936 = vld [vmem:[%s7 + $0x1a0] sm:$0xf]
        %v1937 = vld [vmem:[%s7 + $0x1a4] sm:$0xf]
        %v1938 = vld [vmem:[%s7 + $0x1a8] sm:$0xf]
        %v1939 = vld [vmem:[%s7 + $0x1ac] sm:$0xf]
        %v1940 = vld [vmem:[%s7 + $0x1b0] sm:$0xf]
        %v1941 = vld [vmem:[%s7 + $0x1b4] sm:$0xf]
        %v1942 = vld [vmem:[%s7 + $0x1b8] sm:$0xf]
        %v1943 = vld [vmem:[%s7 + $0x1bc] sm:$0xf]
        %v1944 = vld [vmem:[%s7 + $0x1c0] sm:$0xf]
        %v1945 = vld [vmem:[%s7 + $0x1c4] sm:$0xf]
        %v1946 = vld [vmem:[%s7 + $0x1c8] sm:$0xf]
        %v1947 = vld [vmem:[%s7 + $0x1cc] sm:$0xf]
        %v1948 = vld [vmem:[%s7 + $0x1d0] sm:$0xf]
        %v1949 = vld [vmem:[%s7 + $0x1d4] sm:$0xf]
        %v1950 = vld [vmem:[%s7 + $0x1d8] sm:$0xf]
        %v1951 = vld [vmem:[%s7 + $0x1dc] sm:$0xf]
        %v1952 = vld [vmem:[%s7 + $0x1e0] sm:$0xf]
        %v1953 = vld [vmem:[%s7 + $0x1e4] sm:$0xf]
        %v1954 = vld [vmem:[%s7 + $0x1e8] sm:$0xf]
        %v1955 = vld [vmem:[%s7 + $0x1ec] sm:$0xf]
        %v1956 = vld [vmem:[%s7 + $0x1f0] sm:$0xf]
        %v1957 = vld [vmem:[%s7 + $0x1f4] sm:$0xf]
        %v1958 = vld [vmem:[%s7 + $0x1f8] sm:$0xf]
        %v1959 = vld [vmem:[%s7 + $0x1fc] sm:$0xf]
        %v1960 = vld [vmem:[%s7 + $0x200] sm:$0xf]
        %v1961 = vld [vmem:[%s7 + $0x204] sm:$0xf]
        %v1962 = vld [vmem:[%s7 + $0x208] sm:$0xf]
        %v1963 = vld [vmem:[%s7 + $0x20c] sm:$0xf]
        %v1964 = vld [vmem:[%s7 + $0x210] sm:$0xf]
        %v1965 = vld [vmem:[%s7 + $0x214] sm:$0xf]
        %v1966 = vld [vmem:[%s7 + $0x218] sm:$0xf]
        %v1967 = vld [vmem:[%s7 + $0x21c] sm:$0xf]
        %v1968 = vld [vmem:[%s7 + $0x220] sm:$0xf]
        %v1969 = vld [vmem:[%s7 + $0x224] sm:$0xf]
        %v1970 = vld [vmem:[%s7 + $0x228] sm:$0xf]
        %v1971 = vld [vmem:[%s7 + $0x22c] sm:$0xf]
        %v1972 = vld [vmem:[%s7 + $0x230] sm:$0xf]
        %v1973 = vld [vmem:[%s7 + $0x234] sm:$0xf]
        %v1974 = vld [vmem:[%s7 + $0x238] sm:$0xf]
        %v1975 = vld [vmem:[%s7 + $0x23c] sm:$0xf]
        %v1976 = vld [vmem:[%s7 + $0x240] sm:$0xf]
        %v1977 = vld [vmem:[%s7 + $0x244] sm:$0xf]
        %v1978 = vld [vmem:[%s7 + $0x248] sm:$0xf]
        %v1979 = vld [vmem:[%s7 + $0x24c] sm:$0xf]
        %v1980 = vld [vmem:[%s7 + $0x250] sm:$0xf]
        %v1981 = vld [vmem:[%s7 + $0x254] sm:$0xf]
        %v1982 = vld [vmem:[%s7 + $0x258] sm:$0xf]
        %v1983 = vld [vmem:[%s7 + $0x25c] sm:$0xf]
        %v1984 = vld [vmem:[%s7 + $0x260] sm:$0xf]
        %v1985 = vld [vmem:[%s7 + $0x264] sm:$0xf]
        %v1986 = vld [vmem:[%s7 + $0x268] sm:$0xf]
        %v1987 = vld [vmem:[%s7 + $0x26c] sm:$0xf]
        %v1988 = vld [vmem:[%s7 + $0x270] sm:$0xf]
        %v1989 = vld [vmem:[%s7 + $0x274] sm:$0xf]
        %v1990 = vld [vmem:[%s7 + $0x278] sm:$0xf]
        %v1991 = vld [vmem:[%s7 + $0x27c] sm:$0xf]
        %v1992 = vld [vmem:[%s7 + $0x280] sm:$0xf]
        %v1993 = vld [vmem:[%s7 + $0x284] sm:$0xf]
        %v1994 = vld [vmem:[%s7 + $0x288] sm:$0xf]
        %v1995 = vld [vmem:[%s7 + $0x28c] sm:$0xf]
        %v1996 = vld [vmem:[%s7 + $0x290] sm:$0xf]
        %v1997 = vld [vmem:[%s7 + $0x294] sm:$0xf]
        %v1998 = vld [vmem:[%s7 + $0x298] sm:$0xf]
        %v1999 = vld [vmem:[%s7 + $0x29c] sm:$0xf]
        %v2000 = vld [vmem:[%s7 + $0x2a0] sm:$0xf]
        %v2001 = vld [vmem:[%s7 + $0x2a4] sm:$0xf]
        %v2002 = vld [vmem:[%s7 + $0x2a8] sm:$0xf]
        %v2003 = vld [vmem:[%s7 + $0x2ac] sm:$0xf]
        %v2004 = vld [vmem:[%s7 + $0x2b0] sm:$0xf]
        %v2005 = vld [vmem:[%s7 + $0x2b4] sm:$0xf]
        %v2006 = vld [vmem:[%s7 + $0x2b8] sm:$0xf]
        %v2007 = vld [vmem:[%s7 + $0x2bc] sm:$0xf]
        %v2008 = vld [vmem:[%s7 + $0x2c0] sm:$0xf]
        %v2009 = vld [vmem:[%s7 + $0x2c4] sm:$0xf]
        %v2010 = vld [vmem:[%s7 + $0x2c8] sm:$0xf]
        %v2011 = vld [vmem:[%s7 + $0x2cc] sm:$0xf]
        %v2012 = vld [vmem:[%s7 + $0x2d0] sm:$0xf]
        %v2013 = vld [vmem:[%s7 + $0x2d4] sm:$0xf]
        %v2014 = vld [vmem:[%s7 + $0x2d8] sm:$0xf]
        %v2015 = vld [vmem:[%s7 + $0x2dc] sm:$0xf]
        %v2016 = vld [vmem:[%s7 + $0x2e0] sm:$0xf]
        %v2017 = vld [vmem:[%s7 + $0x2e4] sm:$0xf]
        %v2018 = vld [vmem:[%s7 + $0x2e8] sm:$0xf]
        %v2019 = vld [vmem:[%s7 + $0x2ec] sm:$0xf]
        %v2020 = vld [vmem:[%s7 + $0x2f0] sm:$0xf]
        %v2021 = vld [vmem:[%s7 + $0x2f4] sm:$0xf]
        %v2022 = vld [vmem:[%s7 + $0x2f8] sm:$0xf]
        %v2023 = vld [vmem:[%s7 + $0x2fc] sm:$0xf]
        %v2024 = vld [vmem:[%s7 + $0x300] sm:$0xf]
        %v2025 = vld [vmem:[%s7 + $0x304] sm:$0xf]
        %v2026 = vld [vmem:[%s7 + $0x308] sm:$0xf]
        %v2027 = vld [vmem:[%s7 + $0x30c] sm:$0xf]
        %v2028 = vld [vmem:[%s7 + $0x310] sm:$0xf]
        %v2029 = vld [vmem:[%s7 + $0x314] sm:$0xf]
        %v2030 = vld [vmem:[%s7 + $0x318] sm:$0xf]
        %v2031 = vld [vmem:[%s7 + $0x31c] sm:$0xf]
        %v2032 = vld [vmem:[%s7 + $0x320] sm:$0xf]
        %v2033 = vld [vmem:[%s7 + $0x324] sm:$0xf]
        %v2034 = vld [vmem:[%s7 + $0x328] sm:$0xf]
        %v2035 = vld [vmem:[%s7 + $0x32c] sm:$0xf]
        %v2036 = vld [vmem:[%s7 + $0x330] sm:$0xf]
        %v2037 = vld [vmem:[%s7 + $0x334] sm:$0xf]
        %v2038 = vld [vmem:[%s7 + $0x338] sm:$0xf]
        %v2039 = vld [vmem:[%s7 + $0x33c] sm:$0xf]
        %v2040 = vld [vmem:[%s7 + $0x340] sm:$0xf]
        %v2041 = vld [vmem:[%s7 + $0x344] sm:$0xf]
        %v2042 = vld [vmem:[%s7 + $0x348] sm:$0xf]
        %v2043 = vld [vmem:[%s7 + $0x34c] sm:$0xf]
        %v2044 = vld [vmem:[%s7 + $0x350] sm:$0xf]
        %v2045 = vld [vmem:[%s7 + $0x354] sm:$0xf]
        %v2046 = vld [vmem:[%s7 + $0x358] sm:$0xf]
        %v2047 = vld [vmem:[%s7 + $0x35c] sm:$0xf]
        %v2048 = vld [vmem:[%s7 + $0x360] sm:$0xf]
        %v2049 = vld [vmem:[%s7 + $0x364] sm:$0xf]
        %v2050 = vld [vmem:[%s7 + $0x368] sm:$0xf]
        %v2051 = vld [vmem:[%s7 + $0x36c] sm:$0xf]
        %v2052 = vld [vmem:[%s7 + $0x370] sm:$0xf]
        %v2053 = vld [vmem:[%s7 + $0x374] sm:$0xf]
        %v2054 = vld [vmem:[%s7 + $0x378] sm:$0xf]
        %v2055 = vld [vmem:[%s7 + $0x37c] sm:$0xf]
        %v2056 = vld [vmem:[%s7 + $0x380] sm:$0xf]
        %v2057 = vld [vmem:[%s7 + $0x384] sm:$0xf]
        %v2058 = vld [vmem:[%s7 + $0x388] sm:$0xf]
        %v2059 = vld [vmem:[%s7 + $0x38c] sm:$0xf]
        %v2060 = vld [vmem:[%s7 + $0x390] sm:$0xf]
        %v2061 = vld [vmem:[%s7 + $0x394] sm:$0xf]
        %v2062 = vld [vmem:[%s7 + $0x398] sm:$0xf]
        %v2063 = vld [vmem:[%s7 + $0x39c] sm:$0xf]
        %v2064 = vld [vmem:[%s7 + $0x3a0] sm:$0xf]
        %v2065 = vld [vmem:[%s7 + $0x3a4] sm:$0xf]
        %v2066 = vld [vmem:[%s7 + $0x3a8] sm:$0xf]
        %v2067 = vld [vmem:[%s7 + $0x3ac] sm:$0xf]
        %v2068 = vld [vmem:[%s7 + $0x3b0] sm:$0xf]
        %v2069 = vld [vmem:[%s7 + $0x3b4] sm:$0xf]
        %v2070 = vld [vmem:[%s7 + $0x3b8] sm:$0xf]
        %v2071 = vld [vmem:[%s7 + $0x3bc] sm:$0xf]
        %v2072 = vld [vmem:[%s7 + $0x3c0] sm:$0xf]
        %v2073 = vld [vmem:[%s7 + $0x3c4] sm:$0xf]
        %v2074 = vld [vmem:[%s7 + $0x3c8] sm:$0xf]
        %v2075 = vld [vmem:[%s7 + $0x3cc] sm:$0xf]
        %v2076 = vld [vmem:[%s7 + $0x3d0] sm:$0xf]
        %v2077 = vld [vmem:[%s7 + $0x3d4] sm:$0xf]
        %v2078 = vld [vmem:[%s7 + $0x3d8] sm:$0xf]
        %v2079 = vld [vmem:[%s7 + $0x3dc] sm:$0xf]
        %v2080 = vld [vmem:[%s7 + $0x3e0] sm:$0xf]
        %v2081 = vld [vmem:[%s7 + $0x3e4] sm:$0xf]
        %v2082 = vld [vmem:[%s7 + $0x3e8] sm:$0xf]
        %v2083 = vld [vmem:[%s7 + $0x3ec] sm:$0xf]
        %v2084 = vld [vmem:[%s7 + $0x3f0] sm:$0xf]
        %v2085 = vld [vmem:[%s7 + $0x3f4] sm:$0xf]
        %v2086 = vld [vmem:[%s7 + $0x3f8] sm:$0xf]
        %v2087 = vld [vmem:[%s7 + $0x3fc] sm:$0xf]
        %v2088 = vld [vmem:[%s8] sm:$0x1]
        %v2090 = vlaneseq
        %v2091 = vshrl.u32 %v2090, 7
        %v2092 = vsub.s32 0, %v2091
        %v2093 = vrot.slane %v2088, %v2092
        %v2351 = vunpack.c.l.b16 %v1832
        %v2352 = vunpack.c.l.b16 %v1833
        %v2353 = vunpack.c.l.b16 %v1834
        %v2354 = vunpack.c.l.b16 %v1835
        %v2355 = vunpack.c.l.b16 %v1836
        %v2356 = vunpack.c.l.b16 %v1837
        %v2357 = vunpack.c.l.b16 %v1838
        %v2358 = vunpack.c.l.b16 %v1839
        %v2359 = vunpack.c.l.b16 %v1840
        %v2360 = vunpack.c.l.b16 %v1841
        %v2361 = vunpack.c.l.b16 %v1842
        %v2362 = vunpack.c.l.b16 %v1843
        %v2363 = vunpack.c.l.b16 %v1844
        %v2364 = vunpack.c.l.b16 %v1845
        %v2365 = vunpack.c.l.b16 %v1846
        %v2366 = vunpack.c.l.b16 %v1847
        %v2367 = vunpack.c.l.b16 %v1848
        %v2368 = vunpack.c.l.b16 %v1849
        %v2369 = vunpack.c.l.b16 %v1850
        %v2370 = vunpack.c.l.b16 %v1851
        %v2371 = vunpack.c.l.b16 %v1852
        %v2372 = vunpack.c.l.b16 %v1853
        %v2373 = vunpack.c.l.b16 %v1854
        %v2374 = vunpack.c.l.b16 %v1855
        %v2375 = vunpack.c.l.b16 %v1856
        %v2376 = vunpack.c.l.b16 %v1857
        %v2377 = vunpack.c.l.b16 %v1858
        %v2378 = vunpack.c.l.b16 %v1859
        %v2379 = vunpack.c.l.b16 %v1860
        %v2380 = vunpack.c.l.b16 %v1861
        %v2381 = vunpack.c.l.b16 %v1862
        %v2382 = vunpack.c.l.b16 %v1863
        %v2383 = vunpack.c.l.b16 %v1864
        %v2384 = vunpack.c.l.b16 %v1865
        %v2385 = vunpack.c.l.b16 %v1866
        %v2386 = vunpack.c.l.b16 %v1867
        %v2387 = vunpack.c.l.b16 %v1868
        %v2388 = vunpack.c.l.b16 %v1869
        %v2389 = vunpack.c.l.b16 %v1870
        %v2390 = vunpack.c.l.b16 %v1871
        %v2391 = vunpack.c.l.b16 %v1872
        %v2392 = vunpack.c.l.b16 %v1873
        %v2393 = vunpack.c.l.b16 %v1874
        %v2394 = vunpack.c.l.b16 %v1875
        %v2395 = vunpack.c.l.b16 %v1876
        %v2396 = vunpack.c.l.b16 %v1877
        %v2397 = vunpack.c.l.b16 %v1878
        %v2398 = vunpack.c.l.b16 %v1879
        %v2399 = vunpack.c.l.b16 %v1880
        %v2400 = vunpack.c.l.b16 %v1881
        %v2401 = vunpack.c.l.b16 %v1882
        %v2402 = vunpack.c.l.b16 %v1883
        %v2403 = vunpack.c.l.b16 %v1884
        %v2404 = vunpack.c.l.b16 %v1885
        %v2405 = vunpack.c.l.b16 %v1886
        %v2406 = vunpack.c.l.b16 %v1887
        %v2407 = vunpack.c.l.b16 %v1888
        %v2408 = vunpack.c.l.b16 %v1889
        %v2409 = vunpack.c.l.b16 %v1890
        %v2410 = vunpack.c.l.b16 %v1891
        %v2411 = vunpack.c.l.b16 %v1892
        %v2412 = vunpack.c.l.b16 %v1893
        %v2413 = vunpack.c.l.b16 %v1894
        %v2414 = vunpack.c.l.b16 %v1895
        %v2415 = vunpack.c.l.b16 %v1896
        %v2416 = vunpack.c.l.b16 %v1897
        %v2417 = vunpack.c.l.b16 %v1898
        %v2418 = vunpack.c.l.b16 %v1899
        %v2419 = vunpack.c.l.b16 %v1900
        %v2420 = vunpack.c.l.b16 %v1901
        %v2421 = vunpack.c.l.b16 %v1902
        %v2422 = vunpack.c.l.b16 %v1903
        %v2423 = vunpack.c.l.b16 %v1904
        %v2424 = vunpack.c.l.b16 %v1905
        %v2425 = vunpack.c.l.b16 %v1906
        %v2426 = vunpack.c.l.b16 %v1907
        %v2427 = vunpack.c.l.b16 %v1908
        %v2428 = vunpack.c.l.b16 %v1909
        %v2429 = vunpack.c.l.b16 %v1910
        %v2430 = vunpack.c.l.b16 %v1911
        %v2431 = vunpack.c.l.b16 %v1912
        %v2432 = vunpack.c.l.b16 %v1913
        %v2433 = vunpack.c.l.b16 %v1914
        %v2434 = vunpack.c.l.b16 %v1915
        %v2435 = vunpack.c.l.b16 %v1916
        %v2436 = vunpack.c.l.b16 %v1917
        %v2437 = vunpack.c.l.b16 %v1918
        %v2438 = vunpack.c.l.b16 %v1919
        %v2439 = vunpack.c.l.b16 %v1920
        %v2440 = vunpack.c.l.b16 %v1921
        %v2441 = vunpack.c.l.b16 %v1922
        %v2442 = vunpack.c.l.b16 %v1923
        %v2443 = vunpack.c.l.b16 %v1924
        %v2444 = vunpack.c.l.b16 %v1925
        %v2445 = vunpack.c.l.b16 %v1926
        %v2446 = vunpack.c.l.b16 %v1927
        %v2447 = vunpack.c.l.b16 %v1928
        %v2448 = vunpack.c.l.b16 %v1929
        %v2449 = vunpack.c.l.b16 %v1930
        %v2450 = vunpack.c.l.b16 %v1931
        %v2451 = vunpack.c.l.b16 %v1932
        %v2452 = vunpack.c.l.b16 %v1933
        %v2453 = vunpack.c.l.b16 %v1934
        %v2454 = vunpack.c.l.b16 %v1935
        %v2455 = vunpack.c.l.b16 %v1936
        %v2456 = vunpack.c.l.b16 %v1937
        %v2457 = vunpack.c.l.b16 %v1938
        %v2458 = vunpack.c.l.b16 %v1939
        %v2459 = vunpack.c.l.b16 %v1940
        %v2460 = vunpack.c.l.b16 %v1941
        %v2461 = vunpack.c.l.b16 %v1942
        %v2462 = vunpack.c.l.b16 %v1943
        %v2463 = vunpack.c.l.b16 %v1944
        %v2464 = vunpack.c.l.b16 %v1945
        %v2465 = vunpack.c.l.b16 %v1946
        %v2466 = vunpack.c.l.b16 %v1947
        %v2467 = vunpack.c.l.b16 %v1948
        %v2468 = vunpack.c.l.b16 %v1949
        %v2469 = vunpack.c.l.b16 %v1950
        %v2470 = vunpack.c.l.b16 %v1951
        %v2471 = vunpack.c.l.b16 %v1952
        %v2472 = vunpack.c.l.b16 %v1953
        %v2473 = vunpack.c.l.b16 %v1954
        %v2474 = vunpack.c.l.b16 %v1955
        %v2475 = vunpack.c.l.b16 %v1956
        %v2476 = vunpack.c.l.b16 %v1957
        %v2477 = vunpack.c.l.b16 %v1958
        %v2478 = vunpack.c.l.b16 %v1959
        %v2479 = vunpack.c.l.b16 %v1960
        %v2480 = vunpack.c.l.b16 %v1961
        %v2481 = vunpack.c.l.b16 %v1962
        %v2482 = vunpack.c.l.b16 %v1963
        %v2483 = vunpack.c.l.b16 %v1964
        %v2484 = vunpack.c.l.b16 %v1965
        %v2485 = vunpack.c.l.b16 %v1966
        %v2486 = vunpack.c.l.b16 %v1967
        %v2487 = vunpack.c.l.b16 %v1968
        %v2488 = vunpack.c.l.b16 %v1969
        %v2489 = vunpack.c.l.b16 %v1970
        %v2490 = vunpack.c.l.b16 %v1971
        %v2491 = vunpack.c.l.b16 %v1972
        %v2492 = vunpack.c.l.b16 %v1973
        %v2493 = vunpack.c.l.b16 %v1974
        %v2494 = vunpack.c.l.b16 %v1975
        %v2495 = vunpack.c.l.b16 %v1976
        %v2496 = vunpack.c.l.b16 %v1977
        %v2497 = vunpack.c.l.b16 %v1978
        %v2498 = vunpack.c.l.b16 %v1979
        %v2499 = vunpack.c.l.b16 %v1980
        %v2500 = vunpack.c.l.b16 %v1981
        %v2501 = vunpack.c.l.b16 %v1982
        %v2502 = vunpack.c.l.b16 %v1983
        %v2503 = vunpack.c.l.b16 %v1984
        %v2504 = vunpack.c.l.b16 %v1985
        %v2505 = vunpack.c.l.b16 %v1986
        %v2506 = vunpack.c.l.b16 %v1987
        %v2507 = vunpack.c.l.b16 %v1988
        %v2508 = vunpack.c.l.b16 %v1989
        %v2509 = vunpack.c.l.b16 %v1990
        %v2510 = vunpack.c.l.b16 %v1991
        %v2511 = vunpack.c.l.b16 %v1992
        %v2512 = vunpack.c.l.b16 %v1993
        %v2513 = vunpack.c.l.b16 %v1994
        %v2514 = vunpack.c.l.b16 %v1995
        %v2515 = vunpack.c.l.b16 %v1996
        %v2516 = vunpack.c.l.b16 %v1997
        %v2517 = vunpack.c.l.b16 %v1998
        %v2518 = vunpack.c.l.b16 %v1999
        %v2519 = vunpack.c.l.b16 %v2000
        %v2520 = vunpack.c.l.b16 %v2001
        %v2521 = vunpack.c.l.b16 %v2002
        %v2522 = vunpack.c.l.b16 %v2003
        %v2523 = vunpack.c.l.b16 %v2004
        %v2524 = vunpack.c.l.b16 %v2005
        %v2525 = vunpack.c.l.b16 %v2006
        %v2526 = vunpack.c.l.b16 %v2007
        %v2527 = vunpack.c.l.b16 %v2008
        %v2528 = vunpack.c.l.b16 %v2009
        %v2529 = vunpack.c.l.b16 %v2010
        %v2530 = vunpack.c.l.b16 %v2011
        %v2531 = vunpack.c.l.b16 %v2012
        %v2532 = vunpack.c.l.b16 %v2013
        %v2533 = vunpack.c.l.b16 %v2014
        %v2534 = vunpack.c.l.b16 %v2015
        %v2535 = vunpack.c.l.b16 %v2016
        %v2536 = vunpack.c.l.b16 %v2017
        %v2537 = vunpack.c.l.b16 %v2018
        %v2538 = vunpack.c.l.b16 %v2019
        %v2539 = vunpack.c.l.b16 %v2020
        %v2540 = vunpack.c.l.b16 %v2021
        %v2541 = vunpack.c.l.b16 %v2022
        %v2542 = vunpack.c.l.b16 %v2023
        %v2543 = vunpack.c.l.b16 %v2024
        %v2544 = vunpack.c.l.b16 %v2025
        %v2545 = vunpack.c.l.b16 %v2026
        %v2546 = vunpack.c.l.b16 %v2027
        %v2547 = vunpack.c.l.b16 %v2028
        %v2548 = vunpack.c.l.b16 %v2029
        %v2549 = vunpack.c.l.b16 %v2030
        %v2550 = vunpack.c.l.b16 %v2031
        %v2551 = vunpack.c.l.b16 %v2032
        %v2552 = vunpack.c.l.b16 %v2033
        %v2553 = vunpack.c.l.b16 %v2034
        %v2554 = vunpack.c.l.b16 %v2035
        %v2555 = vunpack.c.l.b16 %v2036
        %v2556 = vunpack.c.l.b16 %v2037
        %v2557 = vunpack.c.l.b16 %v2038
        %v2558 = vunpack.c.l.b16 %v2039
        %v2559 = vunpack.c.l.b16 %v2040
        %v2560 = vunpack.c.l.b16 %v2041
        %v2561 = vunpack.c.l.b16 %v2042
        %v2562 = vunpack.c.l.b16 %v2043
        %v2563 = vunpack.c.l.b16 %v2044
        %v2564 = vunpack.c.l.b16 %v2045
        %v2565 = vunpack.c.l.b16 %v2046
        %v2566 = vunpack.c.l.b16 %v2047
        %v2567 = vunpack.c.l.b16 %v2048
        %v2568 = vunpack.c.l.b16 %v2049
        %v2569 = vunpack.c.l.b16 %v2050
        %v2570 = vunpack.c.l.b16 %v2051
        %v2571 = vunpack.c.l.b16 %v2052
        %v2572 = vunpack.c.l.b16 %v2053
        %v2573 = vunpack.c.l.b16 %v2054
        %v2574 = vunpack.c.l.b16 %v2055
        %v2575 = vunpack.c.l.b16 %v2056
        %v2576 = vunpack.c.l.b16 %v2057
        %v2577 = vunpack.c.l.b16 %v2058
        %v2578 = vunpack.c.l.b16 %v2059
        %v2579 = vunpack.c.l.b16 %v2060
        %v2580 = vunpack.c.l.b16 %v2061
        %v2581 = vunpack.c.l.b16 %v2062
        %v2582 = vunpack.c.l.b16 %v2063
        %v2583 = vunpack.c.l.b16 %v2064
        %v2584 = vunpack.c.l.b16 %v2065
        %v2585 = vunpack.c.l.b16 %v2066
        %v2586 = vunpack.c.l.b16 %v2067
        %v2587 = vunpack.c.l.b16 %v2068
        %v2588 = vunpack.c.l.b16 %v2069
        %v2589 = vunpack.c.l.b16 %v2070
        %v2590 = vunpack.c.l.b16 %v2071
        %v2591 = vunpack.c.l.b16 %v2072
        %v2592 = vunpack.c.l.b16 %v2073
        %v2593 = vunpack.c.l.b16 %v2074
        %v2594 = vunpack.c.l.b16 %v2075
        %v2595 = vunpack.c.l.b16 %v2076
        %v2596 = vunpack.c.l.b16 %v2077
        %v2597 = vunpack.c.l.b16 %v2078
        %v2598 = vunpack.c.l.b16 %v2079
        %v2599 = vunpack.c.l.b16 %v2080
        %v2600 = vunpack.c.l.b16 %v2081
        %v2601 = vunpack.c.l.b16 %v2082
        %v2602 = vunpack.c.l.b16 %v2083
        %v2603 = vunpack.c.l.b16 %v2084
        %v2604 = vunpack.c.l.b16 %v2085
        %v2605 = vunpack.c.l.b16 %v2086
        %v2606 = vunpack.c.l.b16 %v2087
        %v2607 = vpack.c.b16 %v2352, %v2351
        %v2608 = vpack.c.b16 %v2354, %v2353
        %v2609 = vpack.c.b16 %v2356, %v2355
        %v2610 = vpack.c.b16 %v2358, %v2357
        %v2611 = vpack.c.b16 %v2360, %v2359
        %v2612 = vpack.c.b16 %v2362, %v2361
        %v2613 = vpack.c.b16 %v2364, %v2363
        %v2614 = vpack.c.b16 %v2366, %v2365
        %v2615 = vpack.c.b16 %v2368, %v2367
        %v2616 = vpack.c.b16 %v2370, %v2369
        %v2617 = vpack.c.b16 %v2372, %v2371
        %v2618 = vpack.c.b16 %v2374, %v2373
        %v2619 = vpack.c.b16 %v2376, %v2375
        %v2620 = vpack.c.b16 %v2378, %v2377
        %v2621 = vpack.c.b16 %v2380, %v2379
        %v2622 = vpack.c.b16 %v2382, %v2381
        %v2623 = vpack.c.b16 %v2384, %v2383
        %v2624 = vpack.c.b16 %v2386, %v2385
        %v2625 = vpack.c.b16 %v2388, %v2387
        %v2626 = vpack.c.b16 %v2390, %v2389
        %v2627 = vpack.c.b16 %v2392, %v2391
        %v2628 = vpack.c.b16 %v2394, %v2393
        %v2629 = vpack.c.b16 %v2396, %v2395
        %v2630 = vpack.c.b16 %v2398, %v2397
        %v2631 = vpack.c.b16 %v2400, %v2399
        %v2632 = vpack.c.b16 %v2402, %v2401
        %v2633 = vpack.c.b16 %v2404, %v2403
        %v2634 = vpack.c.b16 %v2406, %v2405
        %v2635 = vpack.c.b16 %v2408, %v2407
        %v2636 = vpack.c.b16 %v2410, %v2409
        %v2637 = vpack.c.b16 %v2412, %v2411
        %v2638 = vpack.c.b16 %v2414, %v2413
        %v2639 = vpack.c.b16 %v2416, %v2415
        %v2640 = vpack.c.b16 %v2418, %v2417
        %v2641 = vpack.c.b16 %v2420, %v2419
        %v2642 = vpack.c.b16 %v2422, %v2421
        %v2643 = vpack.c.b16 %v2424, %v2423
        %v2644 = vpack.c.b16 %v2426, %v2425
        %v2645 = vpack.c.b16 %v2428, %v2427
        %v2646 = vpack.c.b16 %v2430, %v2429
        %v2647 = vpack.c.b16 %v2432, %v2431
        %v2648 = vpack.c.b16 %v2434, %v2433
        %v2649 = vpack.c.b16 %v2436, %v2435
        %v2650 = vpack.c.b16 %v2438, %v2437
        %v2651 = vpack.c.b16 %v2440, %v2439
        %v2652 = vpack.c.b16 %v2442, %v2441
        %v2653 = vpack.c.b16 %v2444, %v2443
        %v2654 = vpack.c.b16 %v2446, %v2445
        %v2655 = vpack.c.b16 %v2448, %v2447
        %v2656 = vpack.c.b16 %v2450, %v2449
        %v2657 = vpack.c.b16 %v2452, %v2451
        %v2658 = vpack.c.b16 %v2454, %v2453
        %v2659 = vpack.c.b16 %v2456, %v2455
        %v2660 = vpack.c.b16 %v2458, %v2457
        %v2661 = vpack.c.b16 %v2460, %v2459
        %v2662 = vpack.c.b16 %v2462, %v2461
        %v2663 = vpack.c.b16 %v2464, %v2463
        %v2664 = vpack.c.b16 %v2466, %v2465
        %v2665 = vpack.c.b16 %v2468, %v2467
        %v2666 = vpack.c.b16 %v2470, %v2469
        %v2667 = vpack.c.b16 %v2472, %v2471
        %v2668 = vpack.c.b16 %v2474, %v2473
        %v2669 = vpack.c.b16 %v2476, %v2475
        %v2670 = vpack.c.b16 %v2478, %v2477
        %v2671 = vpack.c.b16 %v2480, %v2479
        %v2672 = vpack.c.b16 %v2482, %v2481
        %v2673 = vpack.c.b16 %v2484, %v2483
        %v2674 = vpack.c.b16 %v2486, %v2485
        %v2675 = vpack.c.b16 %v2488, %v2487
        %v2676 = vpack.c.b16 %v2490, %v2489
        %v2677 = vpack.c.b16 %v2492, %v2491
        %v2678 = vpack.c.b16 %v2494, %v2493
        %v2679 = vpack.c.b16 %v2496, %v2495
        %v2680 = vpack.c.b16 %v2498, %v2497
        %v2681 = vpack.c.b16 %v2500, %v2499
        %v2682 = vpack.c.b16 %v2502, %v2501
        %v2683 = vpack.c.b16 %v2504, %v2503
        %v2684 = vpack.c.b16 %v2506, %v2505
        %v2685 = vpack.c.b16 %v2508, %v2507
        %v2686 = vpack.c.b16 %v2510, %v2509
        %v2687 = vpack.c.b16 %v2512, %v2511
        %v2688 = vpack.c.b16 %v2514, %v2513
        %v2689 = vpack.c.b16 %v2516, %v2515
        %v2690 = vpack.c.b16 %v2518, %v2517
        %v2691 = vpack.c.b16 %v2520, %v2519
        %v2692 = vpack.c.b16 %v2522, %v2521
        %v2693 = vpack.c.b16 %v2524, %v2523
        %v2694 = vpack.c.b16 %v2526, %v2525
        %v2695 = vpack.c.b16 %v2528, %v2527
        %v2696 = vpack.c.b16 %v2530, %v2529
        %v2697 = vpack.c.b16 %v2532, %v2531
        %v2698 = vpack.c.b16 %v2534, %v2533
        %v2699 = vpack.c.b16 %v2536, %v2535
        %v2700 = vpack.c.b16 %v2538, %v2537
        %v2701 = vpack.c.b16 %v2540, %v2539
        %v2702 = vpack.c.b16 %v2542, %v2541
        %v2703 = vpack.c.b16 %v2544, %v2543
        %v2704 = vpack.c.b16 %v2546, %v2545
        %v2705 = vpack.c.b16 %v2548, %v2547
        %v2706 = vpack.c.b16 %v2550, %v2549
        %v2707 = vpack.c.b16 %v2552, %v2551
        %v2708 = vpack.c.b16 %v2554, %v2553
        %v2709 = vpack.c.b16 %v2556, %v2555
        %v2710 = vpack.c.b16 %v2558, %v2557
        %v2711 = vpack.c.b16 %v2560, %v2559
        %v2712 = vpack.c.b16 %v2562, %v2561
        %v2713 = vpack.c.b16 %v2564, %v2563
        %v2714 = vpack.c.b16 %v2566, %v2565
        %v2715 = vpack.c.b16 %v2568, %v2567
        %v2716 = vpack.c.b16 %v2570, %v2569
        %v2717 = vpack.c.b16 %v2572, %v2571
        %v2718 = vpack.c.b16 %v2574, %v2573
        %v2719 = vpack.c.b16 %v2576, %v2575
        %v2720 = vpack.c.b16 %v2578, %v2577
        %v2721 = vpack.c.b16 %v2580, %v2579
        %v2722 = vpack.c.b16 %v2582, %v2581
        %v2723 = vpack.c.b16 %v2584, %v2583
        %v2724 = vpack.c.b16 %v2586, %v2585
        %v2725 = vpack.c.b16 %v2588, %v2587
        %v2726 = vpack.c.b16 %v2590, %v2589
        %v2727 = vpack.c.b16 %v2592, %v2591
        %v2728 = vpack.c.b16 %v2594, %v2593
        %v2729 = vpack.c.b16 %v2596, %v2595
        %v2730 = vpack.c.b16 %v2598, %v2597
        %v2731 = vpack.c.b16 %v2600, %v2599
        %v2732 = vpack.c.b16 %v2602, %v2601
        %v2733 = vpack.c.b16 %v2604, %v2603
        %v2734 = vpack.c.b16 %v2606, %v2605
        %2863 = vmatprep.subr.bf16.mxu0 0
        %2864 = vmatpush1.bf16.msra.mxu0 %v2607
        %2865 = vmatprep.subr.bf16.mxu0 0
        %2866 = vmatpush1.bf16.msra.mxu0 %v2608
        %2867 = vmatprep.subr.bf16.mxu0 0
        %2868 = vmatpush1.bf16.msra.mxu0 %v2609
        %2869 = vmatprep.subr.bf16.mxu0 0
        %2870 = vmatpush1.bf16.msra.mxu0 %v2610
        %2871 = vmatprep.subr.bf16.mxu0 0
        %2872 = vmatpush1.bf16.msra.mxu0 %v2611
        %2873 = vmatprep.subr.bf16.mxu0 0
        %2874 = vmatpush1.bf16.msra.mxu0 %v2612
        %2875 = vmatprep.subr.bf16.mxu0 0
        %2876 = vmatpush1.bf16.msra.mxu0 %v2613
        %2877 = vmatprep.subr.bf16.mxu0 0
        %2878 = vmatpush1.bf16.msra.mxu0 %v2614
        %2879 = vmatprep.subr.bf16.mxu0 0
        %2880 = vmatpush1.bf16.msra.mxu0 %v2615
        %2881 = vmatprep.subr.bf16.mxu0 0
        %2882 = vmatpush1.bf16.msra.mxu0 %v2616
        %2883 = vmatprep.subr.bf16.mxu0 0
        %2884 = vmatpush1.bf16.msra.mxu0 %v2617
        %2885 = vmatprep.subr.bf16.mxu0 0
        %2886 = vmatpush1.bf16.msra.mxu0 %v2618
        %2887 = vmatprep.subr.bf16.mxu0 0
        %2888 = vmatpush1.bf16.msra.mxu0 %v2619
        %2889 = vmatprep.subr.bf16.mxu0 0
        %2890 = vmatpush1.bf16.msra.mxu0 %v2620
        %2891 = vmatprep.subr.bf16.mxu0 0
        %2892 = vmatpush1.bf16.msra.mxu0 %v2621
        %2893 = vmatprep.subr.bf16.mxu0 0
        %2894 = vmatpush1.bf16.msra.mxu0 %v2622
        %2895 = vmatprep.mubr.bf16.mxu0 %v1817
        %2896 = vmatmul.mubr.bf16.gmra.mrb[0].mxu0 %v1816
        %v2897 = vpop.f32.mrb[0].mxu0
        %v2898 = vadd.f32 %v2093, %v2897
        %v2899 = vpop.f32.mrb[0].mxu0
        %v2900 = vpop.f32.mrb[0].mxu0
        %v2901 = vpop.f32.mrb[0].mxu0
        %2902 = vdwg.mxu0
        %2903 = vmatprep.subr.bf16.mxu0 0
        %2904 = vmatpush1.bf16.msra.mxu0 %v2623
        %2905 = vmatprep.subr.bf16.mxu0 0
        %2906 = vmatpush1.bf16.msra.mxu0 %v2624
        %2907 = vmatprep.subr.bf16.mxu0 0
        %2908 = vmatpush1.bf16.msra.mxu0 %v2625
        %2909 = vmatprep.subr.bf16.mxu0 0
        %2910 = vmatpush1.bf16.msra.mxu0 %v2626
        %2911 = vmatprep.subr.bf16.mxu0 0
        %2912 = vmatpush1.bf16.msra.mxu0 %v2627
        %2913 = vmatprep.subr.bf16.mxu0 0
        %2914 = vmatpush1.bf16.msra.mxu0 %v2628
        %2915 = vmatprep.subr.bf16.mxu0 0
        %2916 = vmatpush1.bf16.msra.mxu0 %v2629
        %2917 = vmatprep.subr.bf16.mxu0 0
        %2918 = vmatpush1.bf16.msra.mxu0 %v2630
        %2919 = vmatprep.subr.bf16.mxu0 0
        %2920 = vmatpush1.bf16.msra.mxu0 %v2631
        %2921 = vmatprep.subr.bf16.mxu0 0
        %2922 = vmatpush1.bf16.msra.mxu0 %v2632
        %2923 = vmatprep.subr.bf16.mxu0 0
        %2924 = vmatpush1.bf16.msra.mxu0 %v2633
        %2925 = vmatprep.subr.bf16.mxu0 0
        %2926 = vmatpush1.bf16.msra.mxu0 %v2634
        %2927 = vmatprep.subr.bf16.mxu0 0
        %2928 = vmatpush1.bf16.msra.mxu0 %v2635
        %2929 = vmatprep.subr.bf16.mxu0 0
        %2930 = vmatpush1.bf16.msra.mxu0 %v2636
        %2931 = vmatprep.subr.bf16.mxu0 0
        %2932 = vmatpush1.bf16.msra.mxu0 %v2637
        %2933 = vmatprep.subr.bf16.mxu0 0
        %2934 = vmatpush1.bf16.msra.mxu0 %v2638
        %2935 = vmatprep.mubr.bf16.mxu0 %v1819
        %2936 = vmatmul.mubr.bf16.gmra.mrb[0].mxu0 %v1818
        %v2937 = vpop.f32.mrb[0].mxu0
        %v2938 = vadd.f32 %v2898, %v2937
        %v2939 = vpop.f32.mrb[0].mxu0
        %v2940 = vpop.f32.mrb[0].mxu0
        %v2941 = vpop.f32.mrb[0].mxu0
        %2942 = vdwg.mxu0
        %2943 = vmatprep.subr.bf16.mxu0 0
        %2944 = vmatpush1.bf16.msra.mxu0 %v2639
        %2945 = vmatprep.subr.bf16.mxu0 0
        %2946 = vmatpush1.bf16.msra.mxu0 %v2640
        %2947 = vmatprep.subr.bf16.mxu0 0
        %2948 = vmatpush1.bf16.msra.mxu0 %v2641
        %2949 = vmatprep.subr.bf16.mxu0 0
        %2950 = vmatpush1.bf16.msra.mxu0 %v2642
        %2951 = vmatprep.subr.bf16.mxu0 0
        %2952 = vmatpush1.bf16.msra.mxu0 %v2643
        %2953 = vmatprep.subr.bf16.mxu0 0
        %2954 = vmatpush1.bf16.msra.mxu0 %v2644
        %2955 = vmatprep.subr.bf16.mxu0 0
        %2956 = vmatpush1.bf16.msra.mxu0 %v2645
        %2957 = vmatprep.subr.bf16.mxu0 0
        %2958 = vmatpush1.bf16.msra.mxu0 %v2646
        %2959 = vmatprep.subr.bf16.mxu0 0
        %2960 = vmatpush1.bf16.msra.mxu0 %v2647
        %2961 = vmatprep.subr.bf16.mxu0 0
        %2962 = vmatpush1.bf16.msra.mxu0 %v2648
        %2963 = vmatprep.subr.bf16.mxu0 0
        %2964 = vmatpush1.bf16.msra.mxu0 %v2649
        %2965 = vmatprep.subr.bf16.mxu0 0
        %2966 = vmatpush1.bf16.msra.mxu0 %v2650
        %2967 = vmatprep.subr.bf16.mxu0 0
        %2968 = vmatpush1.bf16.msra.mxu0 %v2651
        %2969 = vmatprep.subr.bf16.mxu0 0
        %2970 = vmatpush1.bf16.msra.mxu0 %v2652
        %2971 = vmatprep.subr.bf16.mxu0 0
        %2972 = vmatpush1.bf16.msra.mxu0 %v2653
        %2973 = vmatprep.subr.bf16.mxu0 0
        %2974 = vmatpush1.bf16.msra.mxu0 %v2654
        %2975 = vmatprep.mubr.bf16.mxu0 %v1821
        %2976 = vmatmul.mubr.bf16.gmra.mrb[0].mxu0 %v1820
        %v2977 = vpop.f32.mrb[0].mxu0
        %v2978 = vadd.f32 %v2938, %v2977
        %v2979 = vpop.f32.mrb[0].mxu0
        %v2980 = vpop.f32.mrb[0].mxu0
        %v2981 = vpop.f32.mrb[0].mxu0
        %2982 = vdwg.mxu0
        %2983 = vmatprep.subr.bf16.mxu0 0
        %2984 = vmatpush1.bf16.msra.mxu0 %v2655
        %2985 = vmatprep.subr.bf16.mxu0 0
        %2986 = vmatpush1.bf16.msra.mxu0 %v2656
        %2987 = vmatprep.subr.bf16.mxu0 0
        %2988 = vmatpush1.bf16.msra.mxu0 %v2657
        %2989 = vmatprep.subr.bf16.mxu0 0
        %2990 = vmatpush1.bf16.msra.mxu0 %v2658
        %2991 = vmatprep.subr.bf16.mxu0 0
        %2992 = vmatpush1.bf16.msra.mxu0 %v2659
        %2993 = vmatprep.subr.bf16.mxu0 0
        %2994 = vmatpush1.bf16.msra.mxu0 %v2660
        %2995 = vmatprep.subr.bf16.mxu0 0
        %2996 = vmatpush1.bf16.msra.mxu0 %v2661
        %2997 = vmatprep.subr.bf16.mxu0 0
        %2998 = vmatpush1.bf16.msra.mxu0 %v2662
        %2999 = vmatprep.subr.bf16.mxu0 0
        %3000 = vmatpush1.bf16.msra.mxu0 %v2663
        %3001 = vmatprep.subr.bf16.mxu0 0
        %3002 = vmatpush1.bf16.msra.mxu0 %v2664
        %3003 = vmatprep.subr.bf16.mxu0 0
        %3004 = vmatpush1.bf16.msra.mxu0 %v2665
        %3005 = vmatprep.subr.bf16.mxu0 0
        %3006 = vmatpush1.bf16.msra.mxu0 %v2666
        %3007 = vmatprep.subr.bf16.mxu0 0
        %3008 = vmatpush1.bf16.msra.mxu0 %v2667
        %3009 = vmatprep.subr.bf16.mxu0 0
        %3010 = vmatpush1.bf16.msra.mxu0 %v2668
        %3011 = vmatprep.subr.bf16.mxu0 0
        %3012 = vmatpush1.bf16.msra.mxu0 %v2669
        %3013 = vmatprep.subr.bf16.mxu0 0
        %3014 = vmatpush1.bf16.msra.mxu0 %v2670
        %3015 = vmatprep.mubr.bf16.mxu0 %v1823
        %3016 = vmatmul.mubr.bf16.gmra.mrb[0].mxu0 %v1822
        %v3017 = vpop.f32.mrb[0].mxu0
        %v3018 = vadd.f32 %v2978, %v3017
        %v3019 = vpop.f32.mrb[0].mxu0
        %v3020 = vpop.f32.mrb[0].mxu0
        %v3021 = vpop.f32.mrb[0].mxu0
        %3022 = vdwg.mxu0
        %3023 = vmatprep.subr.bf16.mxu0 0
        %3024 = vmatpush1.bf16.msra.mxu0 %v2671
        %3025 = vmatprep.subr.bf16.mxu0 0
        %3026 = vmatpush1.bf16.msra.mxu0 %v2672
        %3027 = vmatprep.subr.bf16.mxu0 0
        %3028 = vmatpush1.bf16.msra.mxu0 %v2673
        %3029 = vmatprep.subr.bf16.mxu0 0
        %3030 = vmatpush1.bf16.msra.mxu0 %v2674
        %3031 = vmatprep.subr.bf16.mxu0 0
        %3032 = vmatpush1.bf16.msra.mxu0 %v2675
        %3033 = vmatprep.subr.bf16.mxu0 0
        %3034 = vmatpush1.bf16.msra.mxu0 %v2676
        %3035 = vmatprep.subr.bf16.mxu0 0
        %3036 = vmatpush1.bf16.msra.mxu0 %v2677
        %3037 = vmatprep.subr.bf16.mxu0 0
        %3038 = vmatpush1.bf16.msra.mxu0 %v2678
        %3039 = vmatprep.subr.bf16.mxu0 0
        %3040 = vmatpush1.bf16.msra.mxu0 %v2679
        %3041 = vmatprep.subr.bf16.mxu0 0
        %3042 = vmatpush1.bf16.msra.mxu0 %v2680
        %3043 = vmatprep.subr.bf16.mxu0 0
        %3044 = vmatpush1.bf16.msra.mxu0 %v2681
        %3045 = vmatprep.subr.bf16.mxu0 0
        %3046 = vmatpush1.bf16.msra.mxu0 %v2682
        %3047 = vmatprep.subr.bf16.mxu0 0
        %3048 = vmatpush1.bf16.msra.mxu0 %v2683
        %3049 = vmatprep.subr.bf16.mxu0 0
        %3050 = vmatpush1.bf16.msra.mxu0 %v2684
        %3051 = vmatprep.subr.bf16.mxu0 0
        %3052 = vmatpush1.bf16.msra.mxu0 %v2685
        %3053 = vmatprep.subr.bf16.mxu0 0
        %3054 = vmatpush1.bf16.msra.mxu0 %v2686
        %3055 = vmatprep.mubr.bf16.mxu0 %v1825
        %3056 = vmatmul.mubr.bf16.gmra.mrb[0].mxu0 %v1824
        %v3057 = vpop.f32.mrb[0].mxu0
        %v3058 = vadd.f32 %v3018, %v3057
        %v3059 = vpop.f32.mrb[0].mxu0
        %v3060 = vpop.f32.mrb[0].mxu0
        %v3061 = vpop.f32.mrb[0].mxu0
        %3062 = vdwg.mxu0
        %3063 = vmatprep.subr.bf16.mxu0 0
        %3064 = vmatpush1.bf16.msra.mxu0 %v2687
        %3065 = vmatprep.subr.bf16.mxu0 0
        %3066 = vmatpush1.bf16.msra.mxu0 %v2688
        %3067 = vmatprep.subr.bf16.mxu0 0
        %3068 = vmatpush1.bf16.msra.mxu0 %v2689
        %3069 = vmatprep.subr.bf16.mxu0 0
        %3070 = vmatpush1.bf16.msra.mxu0 %v2690
        %3071 = vmatprep.subr.bf16.mxu0 0
        %3072 = vmatpush1.bf16.msra.mxu0 %v2691
        %3073 = vmatprep.subr.bf16.mxu0 0
        %3074 = vmatpush1.bf16.msra.mxu0 %v2692
        %3075 = vmatprep.subr.bf16.mxu0 0
        %3076 = vmatpush1.bf16.msra.mxu0 %v2693
        %3077 = vmatprep.subr.bf16.mxu0 0
        %3078 = vmatpush1.bf16.msra.mxu0 %v2694
        %3079 = vmatprep.subr.bf16.mxu0 0
        %3080 = vmatpush1.bf16.msra.mxu0 %v2695
        %3081 = vmatprep.subr.bf16.mxu0 0
        %3082 = vmatpush1.bf16.msra.mxu0 %v2696
        %3083 = vmatprep.subr.bf16.mxu0 0
        %3084 = vmatpush1.bf16.msra.mxu0 %v2697
        %3085 = vmatprep.subr.bf16.mxu0 0
        %3086 = vmatpush1.bf16.msra.mxu0 %v2698
        %3087 = vmatprep.subr.bf16.mxu0 0
        %3088 = vmatpush1.bf16.msra.mxu0 %v2699
        %3089 = vmatprep.subr.bf16.mxu0 0
        %3090 = vmatpush1.bf16.msra.mxu0 %v2700
        %3091 = vmatprep.subr.bf16.mxu0 0
        %3092 = vmatpush1.bf16.msra.mxu0 %v2701
        %3093 = vmatprep.subr.bf16.mxu0 0
        %3094 = vmatpush1.bf16.msra.mxu0 %v2702
        %3095 = vmatprep.mubr.bf16.mxu0 %v1827
        %3096 = vmatmul.mubr.bf16.gmra.mrb[0].mxu0 %v1826
        %v3097 = vpop.f32.mrb[0].mxu0
        %v3098 = vadd.f32 %v3058, %v3097
        %v3099 = vpop.f32.mrb[0].mxu0
        %v3100 = vpop.f32.mrb[0].mxu0
        %v3101 = vpop.f32.mrb[0].mxu0
        %3102 = vdwg.mxu0
        %3103 = vmatprep.subr.bf16.mxu0 0
        %3104 = vmatpush1.bf16.msra.mxu0 %v2703
        %3105 = vmatprep.subr.bf16.mxu0 0
        %3106 = vmatpush1.bf16.msra.mxu0 %v2704
        %3107 = vmatprep.subr.bf16.mxu0 0
        %3108 = vmatpush1.bf16.msra.mxu0 %v2705
        %3109 = vmatprep.subr.bf16.mxu0 0
        %3110 = vmatpush1.bf16.msra.mxu0 %v2706
        %3111 = vmatprep.subr.bf16.mxu0 0
        %3112 = vmatpush1.bf16.msra.mxu0 %v2707
        %3113 = vmatprep.subr.bf16.mxu0 0
        %3114 = vmatpush1.bf16.msra.mxu0 %v2708
        %3115 = vmatprep.subr.bf16.mxu0 0
        %3116 = vmatpush1.bf16.msra.mxu0 %v2709
        %3117 = vmatprep.subr.bf16.mxu0 0
        %3118 = vmatpush1.bf16.msra.mxu0 %v2710
        %3119 = vmatprep.subr.bf16.mxu0 0
        %3120 = vmatpush1.bf16.msra.mxu0 %v2711
        %3121 = vmatprep.subr.bf16.mxu0 0
        %3122 = vmatpush1.bf16.msra.mxu0 %v2712
        %3123 = vmatprep.subr.bf16.mxu0 0
        %3124 = vmatpush1.bf16.msra.mxu0 %v2713
        %3125 = vmatprep.subr.bf16.mxu0 0
        %3126 = vmatpush1.bf16.msra.mxu0 %v2714
        %3127 = vmatprep.subr.bf16.mxu0 0
        %3128 = vmatpush1.bf16.msra.mxu0 %v2715
        %3129 = vmatprep.subr.bf16.mxu0 0
        %3130 = vmatpush1.bf16.msra.mxu0 %v2716
        %3131 = vmatprep.subr.bf16.mxu0 0
        %3132 = vmatpush1.bf16.msra.mxu0 %v2717
        %3133 = vmatprep.subr.bf16.mxu0 0
        %3134 = vmatpush1.bf16.msra.mxu0 %v2718
        %3135 = vmatprep.mubr.bf16.mxu0 %v1829
        %3136 = vmatmul.mubr.bf16.gmra.mrb[0].mxu0 %v1828
        %v3137 = vpop.f32.mrb[0].mxu0
        %v3138 = vadd.f32 %v3098, %v3137
        %v3139 = vpop.f32.mrb[0].mxu0
        %v3140 = vpop.f32.mrb[0].mxu0
        %v3141 = vpop.f32.mrb[0].mxu0
        %3142 = vdwg.mxu0
        %3143 = vmatprep.subr.bf16.mxu0 0
        %3144 = vmatpush1.bf16.msra.mxu0 %v2719
        %3145 = vmatprep.subr.bf16.mxu0 0
        %3146 = vmatpush1.bf16.msra.mxu0 %v2720
        %3147 = vmatprep.subr.bf16.mxu0 0
        %3148 = vmatpush1.bf16.msra.mxu0 %v2721
        %3149 = vmatprep.subr.bf16.mxu0 0
        %3150 = vmatpush1.bf16.msra.mxu0 %v2722
        %3151 = vmatprep.subr.bf16.mxu0 0
        %3152 = vmatpush1.bf16.msra.mxu0 %v2723
        %3153 = vmatprep.subr.bf16.mxu0 0
        %3154 = vmatpush1.bf16.msra.mxu0 %v2724
        %3155 = vmatprep.subr.bf16.mxu0 0
        %3156 = vmatpush1.bf16.msra.mxu0 %v2725
        %3157 = vmatprep.subr.bf16.mxu0 0
        %3158 = vmatpush1.bf16.msra.mxu0 %v2726
        %3159 = vmatprep.subr.bf16.mxu0 0
        %3160 = vmatpush1.bf16.msra.mxu0 %v2727
        %3161 = vmatprep.subr.bf16.mxu0 0
        %3162 = vmatpush1.bf16.msra.mxu0 %v2728
        %3163 = vmatprep.subr.bf16.mxu0 0
        %3164 = vmatpush1.bf16.msra.mxu0 %v2729
        %3165 = vmatprep.subr.bf16.mxu0 0
        %3166 = vmatpush1.bf16.msra.mxu0 %v2730
        %3167 = vmatprep.subr.bf16.mxu0 0
        %3168 = vmatpush1.bf16.msra.mxu0 %v2731
        %3169 = vmatprep.subr.bf16.mxu0 0
        %3170 = vmatpush1.bf16.msra.mxu0 %v2732
        %3171 = vmatprep.subr.bf16.mxu0 0
        %3172 = vmatpush1.bf16.msra.mxu0 %v2733
        %3173 = vmatprep.subr.bf16.mxu0 0
        %3174 = vmatpush1.bf16.msra.mxu0 %v2734
        %3175 = vmatprep.mubr.bf16.mxu0 %v1831
        %3176 = vmatmul.mubr.bf16.gmra.mrb[0].mxu0 %v1830
        %v3177 = vpop.f32.mrb[0].mxu0
        %v3178 = vadd.f32 %v3138, %v3177
        %v3179 = vpop.f32.mrb[0].mxu0
        %v3180 = vpop.f32.mrb[0].mxu0
        %v3181 = vpop.f32.mrb[0].mxu0
        %3182 = vdwg.mxu0
        %v3183 = vadd.f32 %v1191, %v3178
        %v3184 = vld [vmem:[%s11] sm:$0x1]
        %v3185 = vld [vmem:[%s12] sm:$0x1]
        %v3186 = vsel %vm462, %v3183, 0.0
        %3187 = vadd.xlane.f32.xlu0 %v3186
        %v3188 = vpop.xlane.xlu0 %3187
        %v3189 = vmul.f32 %v3188, %v1165
        %v3190 = vmul.f32 %v3183, %v3183
        %v3191 = vsel %vm462, %v3190, 0.0
        %3192 = vadd.xlane.f32.xlu0 %v3191
        %v3193 = vpop.xlane.xlu0 %3192
        %v3194 = vmul.f32 %v3193, %v1165
        %v3195 = vmul.f32 %v3189, %v3189
        %v3196 = vsub.f32 %v3194, %v3195
        %v3197 = vsub.f32 %v3183, %v3189
        %v3198 = vadd.f32 %v3196, 1e-05
        %v3199 = vrsqrt.pop %v3198
        %v3200 = vmul.f32 %v3197, %v3199
        %v3202 = vlaneseq
        %v3203 = vshrl.u32 %v3202, 7
        %v3204 = vsub.s32 0, %v3203
        %v3205 = vrot.slane %v3184, %v3204
        %v3207 = vmul.f32 %v3200, %v3205
        %v3209 = vlaneseq
        %v3210 = vshrl.u32 %v3209, 7
        %v3211 = vsub.s32 0, %v3210
        %v3212 = vrot.slane %v3185, %v3211
        %v3214 = vadd.f32 %v3207, %v3212
        %3215 = vst.msk [vmem:[%s431] sm:$0xff] %vm462, %v3214
        %s3216 = sand.u32 %s313, 1
        %s3217 = scalar_lea.sflag [#allocation3], %s3216
        %s3218 = sand.u32 %s313, 1
        %s3219 = smul.addr %s3218, 8
        %s3220 = scalar_lea.vmem [#allocation2], %s3219
        // Predicated region
        $region73: #{tpu_custom_call.1} parent=71 // pred_check
          %p3221 = pneg %p323
        $region74: #{tpu_custom_call.1} parent=71 // pred_check_branch
          %3223 = sbr.rel (%p3221) target = $region76
        $region75: #{tpu_custom_call.1} parent=71 // pred_region
          %s3225 = ssub.s32 128, 128
          %3226 = vsyncadd %s3217, %s3225
          %s3227 = smul.addr %s27, 128
          %s3228 = scalar_lea.hbm %s13, %s3227
          %s3230 = sshll.u32 %s3220, 4
          %s3231 = int_to_ptr.vmem [resolvable:$true] %s3230
          %3233 = dma.vmem_to_hbm [thread:$0]  %s3231, 128, %s3228, %s3217
        $region76: #{tpu_custom_call.1} parent=71 // pred_fallthru
          _
      $region72: #{tpu_custom_call.1} parent=5 // pred_fallthru
        _
      %p3234 = scmp.le.s32.totalorder 2, %s22
      // Predicated region
      $region77: #{tpu_custom_call.1} parent=5 // pred_check
        %p3235 = pneg %p3234
      $region78: #{tpu_custom_call.1} parent=5 // pred_check_branch
        %3237 = sbr.rel (%p3235) target = $region80
      $region79: #{tpu_custom_call.1} parent=5 // pred_region
        %s3238 = ssub.s32 %s22, 2
        // Predicated region
        $region81: #{tpu_custom_call.1} parent=79 // pred_check
          %p3239 = pneg %p329
        $region82: #{tpu_custom_call.1} parent=79 // pred_check_branch
          %3241 = sbr.rel (%p3239) target = $region84
        $region83: #{tpu_custom_call.1} parent=79 // pred_region
          %s3242 = sand.u32 %s314, 1
          %s3243 = scalar_lea.sflag [#allocation3], %s3242
          %s3244 = sand.u32 %s314, 1
          %s3245 = smul.addr %s3244, 8
          %s3246 = scalar_lea.vmem [#allocation2], %s3245
          %3247 = dma.done %s3243, 128
        $region84: #{tpu_custom_call.1} parent=79 // pred_fallthru
          _
      $region80: #{tpu_custom_call.1} parent=5 // pred_fallthru
        _
    $region6: #{tpu_custom_call.1} parent=1 // loop_footer
      %s26 = sadd.s32 1, %s22
    $region7: #{tpu_custom_call.1} parent=1 // loop_footer_branch
      %21 = sbr.rel target = $region3
    $region8: #{tpu_custom_call.1} parent=1 // loop_exit
      _
    %3248 = vsyncpa [#allocation3], 1
    %s3249 = scalar_lea.sflag [#allocation3], 1
    %3250 = vsyncpa %s3249, 1

</llo_original>
